<compile_context>
chip_gen: v6e
topology: v6e:2x2x1
jax: 0.10.0
libtpu: 0.0.40
codegen_flags: <defaults>
</compile_context>

<pallas_src>
import functools

import jax
import jax.numpy as jnp
from jax.experimental import pallas as pl
from jax.experimental.pallas import tpu as pltpu

EPS = 1e-5
LANE = 128


def _round_up(v, m):
    return (v + m - 1) // m * m


def _vmem():
    return pl.BlockSpec(memory_space=pltpu.MemorySpace.VMEM)


def _vmem_limit_bytes():
    """Generation-aware scoped-VMEM limit (v5e/v6e: 128 MiB phys, v7x: 64 MiB)."""
    try:
        cap = int(pltpu.get_tpu_info().vmem_capacity_bytes)
        if cap <= 0:
            raise ValueError
    except Exception:  # pragma: no cover - conservative fallback
        cap = 64 << 20
    return max(32 << 20, min(cap - (16 << 20), 100 << 20))


# ----------------------------------------------------------------------------
# Fully fused kernel (adj VMEM-resident, read from HBM once, all layers in one
# pallas_call).  Used whenever the VMEM budget allows.
# ----------------------------------------------------------------------------
def glass_fused_kernel(*refs, num_layers, n_true, z_ratio, d_outs):
    (x_ref, adj_ref, rs_ref, mask_ref, egs_ref, egb_ref) = refs[:6]
    o_ref = refs[-1]
    layer_refs = refs[6:-1]                              # 9 refs per layer
    np_ = x_ref.shape[0]

    # validity mask over padded node rows; stats divide by the true node count
    valid = (jax.lax.broadcasted_iota(jnp.int32, (np_, 1), 0)
             < n_true).astype(jnp.float32)
    inv_n = jnp.float32(1.0 / n_true)

    def gnorm(v, scale, bias):
        mean = jnp.sum(v * valid, axis=0, keepdims=True) * inv_n
        vc = v - mean
        var = jnp.sum(valid * vc * vc, axis=0, keepdims=True) * inv_n
        return scale * vc * jax.lax.rsqrt(var + EPS) + bias

    zr = jnp.float32(z_ratio)
    zc = jnp.float32(2.0 * z_ratio - 1.0)
    m = mask_ref[...].astype(jnp.float32)                # [N,1]
    a0 = zr - m * zc                                     # mix coeff for branch 0
    a1 = (1.0 - zr) + m * zc                             # mix coeff for branch 1

    # fused emb GraphNorm (EmbZGConv.emb_gn); dropout(p=0/eval) -> identity
    x = gnorm(x_ref[...].astype(jnp.float32),
              egs_ref[...], egb_ref[...]).astype(jnp.bfloat16)
    # un-normalized int8 adjacency -> bf16 once (reused by every layer)
    adj = adj_ref[...].astype(jnp.float32).astype(jnp.bfloat16)
    rs = rs_ref[...]                                     # [N,1] quant_scale/deg

    y = None
    for l in range(num_layers):
        (w01, b01, wcx, wco, bc, gs1, gb1, gs2, gb2) = layer_refs[9 * l:9 * (l + 1)]
        d = d_outs[l]
        # packed trans Linears + ReLU + mask mix
        x01 = jnp.maximum(
            jnp.dot(x, w01[...], preferred_element_type=jnp.float32) + b01[...],
            0.0)
        xm = (a0 * x01[:, :d] + a1 * x01[:, d:]).astype(jnp.bfloat16)
        # aggregation: (int8 adj as bf16) @ xm, row-scaled by quant_scale/deg
        xa = jnp.dot(adj, xm, preferred_element_type=jnp.float32) * rs
        # GLASSConv-internal GraphNorm; dropout -> identity
        xn = gnorm(xa, gs1[...], gb1[...])
        # packed comb Linears on cat((xn, x)) + mask mix
        c01 = (jnp.dot(xn.astype(jnp.bfloat16), wcx[...],
                       preferred_element_type=jnp.float32)
               + jnp.dot(x, wco[...], preferred_element_type=jnp.float32)
               + bc[...])
        # outer per-layer GraphNorm (EmbZGConv.gns[l])
        y = gnorm(a0 * c01[:, :d] + a1 * c01[:, d:], gs2[...], gb2[...])
        if l < num_layers - 1:
            x = jnp.maximum(y, 0.0).astype(jnp.bfloat16)  # activation
    o_ref[...] = y


def glass_fused_forward(x, adj_q, row_scale, mask, emb_gn, convs, *,
                        n_true, z_ratio, vmem_limit):
    np_ = x.shape[0]
    d_outs = tuple(p[0].shape[1] // 2 for p in convs)
    flat = [a for p in convs for a in p]
    kernel = functools.partial(glass_fused_kernel, num_layers=len(convs),
                               n_true=n_true, z_ratio=z_ratio, d_outs=d_outs)
    return pl.pallas_call(
        kernel,
        out_shape=jax.ShapeDtypeStruct((np_, d_outs[-1]), jnp.float32),
        in_specs=[_vmem() for _ in range(6 + len(flat))],
        out_specs=_vmem(),
        compiler_params=pltpu.CompilerParams(vmem_limit_bytes=vmem_limit),
    )(x, adj_q, row_scale, mask, emb_gn[0], emb_gn[1], *flat)


def _fused_fits(np_, hid_p, convs, vmem_limit):
    """Conservative VMEM estimate for the fully fused kernel."""
    d_max = max(p[0].shape[1] // 2 for p in convs)
    adj_bytes = 7 * np_ * np_                 # int8 block + f32/bf16 upcast temps
    act_bytes = np_ * (hid_p * 6 + d_max * 40)  # x f32+bf16, x01/c01/xa/xn/y/out
    w_bytes = sum(int(a.size) * a.dtype.itemsize for p in convs for a in p)
    need = adj_bytes + act_bytes + w_bytes + (4 << 20)
    return need <= vmem_limit


# ----------------------------------------------------------------------------
# Streaming fallback: one fused pallas_call per layer, adjacency streamed as
# int8 column slabs over a 1-D reduction grid.
# ----------------------------------------------------------------------------
def glass_layer_stream_kernel(x_ref, adj_ref, rs_ref, mask_ref,
                              igs_ref, igb_ref,
                              w01_ref, b01_ref, wcx_ref, wco_ref, bc_ref,
                              gs1_ref, gb1_ref, gs2_ref, gb2_ref,
                              o_ref, xm_ref, acc_ref,
                              *, n_true, z_ratio, apply_relu, apply_input_gn,
                              block_k, d_out):
    k = pl.program_id(0)
    np_ = x_ref.shape[0]
    zr = jnp.float32(z_ratio)
    zc = jnp.float32(2.0 * z_ratio - 1.0)

    def valid_mask():
        return (jax.lax.broadcasted_iota(jnp.int32, (np_, 1), 0)
                < n_true).astype(jnp.float32)

    def gnorm(v, scale, bias, valid):
        inv_n = jnp.float32(1.0 / n_true)
        mean = jnp.sum(v * valid, axis=0, keepdims=True) * inv_n
        vc = v - mean
        var = jnp.sum(valid * vc * vc, axis=0, keepdims=True) * inv_n
        return scale * vc * jax.lax.rsqrt(var + EPS) + bias

    def load_x(valid):
        xv = x_ref[...]
        if apply_input_gn:                    # emb GraphNorm fused into layer 0
            xv = gnorm(xv.astype(jnp.float32), igs_ref[...], igb_ref[...], valid)
        return xv.astype(jnp.bfloat16)

    def mix_coeffs():
        m = mask_ref[...].astype(jnp.float32)
        return zr - m * zc, (1.0 - zr) + m * zc

    @pl.when(k == 0)
    def _init():
        valid = valid_mask()
        x = load_x(valid)
        a0, a1 = mix_coeffs()
        x01 = jnp.maximum(
            jnp.dot(x, w01_ref[...], preferred_element_type=jnp.float32)
            + b01_ref[...], 0.0)
        xm_ref[...] = (a0 * x01[:, :d_out] + a1 * x01[:, d_out:]).astype(xm_ref.dtype)
        acc_ref[...] = jnp.zeros_like(acc_ref)

    # stream one un-normalized int8 adjacency slab: acc += adj[:, kblk] @ xm[kblk]
    off = pl.multiple_of(k * block_k, block_k)
    adj_blk = adj_ref[...].astype(jnp.float32).astype(jnp.bfloat16)
    acc_ref[...] += jnp.dot(adj_blk, xm_ref[pl.ds(off, block_k), :],
                            preferred_element_type=jnp.float32)

    @pl.when(k == pl.num_programs(0) - 1)
    def _finalize():
        valid = valid_mask()
        x = load_x(valid)
        a0, a1 = mix_coeffs()
        xa = acc_ref[...] * rs_ref[...]            # fold quant_scale / deg here
        xn = gnorm(xa, gs1_ref[...], gb1_ref[...], valid)
        # TODO(synk): for very large N on v7x, chunk this packed comb matmul
        # over row tiles to cap finalize temporaries.
        c01 = (jnp.dot(xn.astype(jnp.bfloat16), wcx_ref[...],
                       preferred_element_type=jnp.float32)
               + jnp.dot(x, wco_ref[...], preferred_element_type=jnp.float32)
               + bc_ref[...])
        y = gnorm(a0 * c01[:, :d_out] + a1 * c01[:, d_out:],
                  gs2_ref[...], gb2_ref[...], valid)
        if apply_relu:
            y = jnp.maximum(y, 0.0)
        o_ref[...] = y.astype(o_ref.dtype)


def _pick_block_k(np_, d_in, d_out, x_itemsize, vmem_limit):
    """Largest adjacency slab width (multiple of 128, divides np_) that fits."""
    per_row = (2 * d_in * x_itemsize          # x block (double-buffered)
               + 2 * (2 + 4)                  # mask (bf16) + row_scale (f32)
               + 2 * d_out * 4                # output block (worst case f32)
               + d_out * (2 + 4)              # xm + acc scratch
               + d_out * 4 * 10)              # finalize/upcast temporaries
    weights = 2 * (2 * (d_in * 2 * d_out * 2)       # w01 + wco (bf16)
                   + d_out * 2 * d_out * 2          # wcx (bf16)
                   + 6 * 2 * d_out * 4)             # biases + gn params
    avail = vmem_limit - np_ * per_row - weights - (2 << 20)
    bk_budget = max(128, avail // (2 * np_))  # int8 slab, double-buffered
    blocks = np_ // LANE
    for t in range(blocks, 0, -1):
        if blocks % t == 0 and LANE * t <= bk_budget:
            return LANE * t
    return LANE


def glass_layer_stream(x, adj_q, row_scale, mask, params, input_gn, *,
                       n_true, z_ratio, apply_relu, apply_input_gn,
                       out_dtype, vmem_limit, block_k=None):
    (w01, b01, wcx, wco, bc, gs1, gb1, gs2, gb2) = params
    igs, igb = input_gn
    np_, d_in = x.shape
    d_out = w01.shape[1] // 2
    assert adj_q.shape == (np_, np_)
    if block_k is None:
        block_k = _pick_block_k(np_, d_in, d_out, x.dtype.itemsize, vmem_limit)
    assert np_ % block_k == 0 and block_k % LANE == 0
    grid = (np_ // block_k,)
    const = lambda k: (0, 0)

    kernel = functools.partial(
        glass_layer_stream_kernel, n_true=n_true, z_ratio=z_ratio,
        apply_relu=apply_relu, apply_input_gn=apply_input_gn,
        block_k=block_k, d_out=d_out)

    return pl.pallas_call(
        kernel,
        out_shape=jax.ShapeDtypeStruct((np_, d_out), out_dtype),
        grid_spec=pltpu.PrefetchScalarGridSpec(
            num_scalar_prefetch=0,
            grid=grid,
            in_specs=[
                pl.BlockSpec((np_, d_in), const),                 # x
                pl.BlockSpec((np_, block_k), lambda k: (0, k)),   # adj int8 slab
                pl.BlockSpec((np_, 1), const),                    # row scale f32
                pl.BlockSpec((np_, 1), const),                    # mask bf16
                pl.BlockSpec(igs.shape, const),                   # input gn scale
                pl.BlockSpec(igb.shape, const),                   # input gn bias
                pl.BlockSpec(w01.shape, const),
                pl.BlockSpec(b01.shape, const),
                pl.BlockSpec(wcx.shape, const),
                pl.BlockSpec(wco.shape, const),
                pl.BlockSpec(bc.shape, const),
                pl.BlockSpec(gs1.shape, const),
                pl.BlockSpec(gb1.shape, const),
                pl.BlockSpec(gs2.shape, const),
                pl.BlockSpec(gb2.shape, const),
            ],
            out_specs=pl.BlockSpec((np_, d_out), const),
            scratch_shapes=[
                pltpu.VMEM((np_, d_out), jnp.bfloat16),           # xm
                pltpu.VMEM((np_, d_out), jnp.float32),            # accumulator
            ]),
        compiler_params=pltpu.CompilerParams(
            dimension_semantics=("arbitrary",),                   # reduction axis
            vmem_limit_bytes=vmem_limit),
    )(x, adj_q, row_scale, mask, igs, igb, w01, b01, wcx, wco, bc,
      gs1, gb1, gs2, gb2)


# ----------------------------------------------------------------------------
# Glue (plain JAX): adjacency construction, embedding lookup, parameter setup
# ----------------------------------------------------------------------------
def build_adj_int8(edge_index, edge_weight, n_node):
    """buildAdj(..., aggr='mean') split into (int8 un-normalized adj, row scale).

    adj_norm == adj_q * row_scale[:, None]  with row_scale = quant_scale / deg.
    """
    adj = jnp.zeros((n_node, n_node), jnp.float32)
    adj = adj.at[edge_index[0], edge_index[1]].add(edge_weight)
    deg = adj.sum(axis=1)
    deg = jnp.where(deg < 0.5, deg + 1.0, deg)
    amax = jnp.maximum(jnp.max(jnp.abs(adj)), 1e-12)
    scale = amax / 127.0
    adj_q = jnp.clip(jnp.round(adj / scale), -127, 127).astype(jnp.int8)
    row_scale = (scale / deg).reshape(-1, 1).astype(jnp.float32)
    return adj_q, row_scale


def linear_params(key, fan_in, fan_out):
    k1, k2 = jax.random.split(key)
    bound = 1.0 / jnp.sqrt(jnp.float32(fan_in))
    w = jax.random.uniform(k1, (fan_in, fan_out), jnp.float32, -bound, bound)
    b = jax.random.uniform(k2, (1, fan_out), jnp.float32, -bound, bound)
    return w, b


def _pad2(a, rows, cols):
    return jnp.pad(a, ((0, rows - a.shape[0]), (0, cols - a.shape[1])))


def make_glass_layer_params(key, in_ch, out_ch):
    in_p = _round_up(in_ch, LANE)
    out_p = _round_up(out_ch, LANE)
    ks = jax.random.split(key, 4)
    w0, b0 = linear_params(ks[0], in_ch, out_ch)
    w1, b1 = linear_params(ks[1], in_ch, out_ch)
    wc0, bc0 = linear_params(ks[2], in_ch + out_ch, out_ch)
    wc1, bc1 = linear_params(ks[3], in_ch + out_ch, out_ch)
    # split comb weights for the concat-free formulation: rows [:out_ch] act on
    # the GraphNorm'd aggregation, rows [out_ch:] act on the layer input x_.
    wc0x, wc0o = wc0[:out_ch], wc0[out_ch:]
    wc1x, wc1o = wc1[:out_ch], wc1[out_ch:]
    # pack pairs side by side, zero-pad channel dims to 128 lanes, cast to bf16
    w01 = jnp.concatenate([_pad2(w0, in_p, out_p), _pad2(w1, in_p, out_p)], 1)
    b01 = jnp.concatenate([_pad2(b0, 1, out_p), _pad2(b1, 1, out_p)], 1)
    wcx = jnp.concatenate([_pad2(wc0x, out_p, out_p), _pad2(wc1x, out_p, out_p)], 1)
    wco = jnp.concatenate([_pad2(wc0o, in_p, out_p), _pad2(wc1o, in_p, out_p)], 1)
    bc = jnp.concatenate([_pad2(bc0, 1, out_p), _pad2(bc1, 1, out_p)], 1)
    gs1 = jnp.ones((1, out_p), jnp.float32)
    gb1 = jnp.zeros((1, out_p), jnp.float32)
    gs2 = jnp.ones((1, out_p), jnp.float32)
    gb2 = jnp.zeros((1, out_p), jnp.float32)
    return (w01.astype(jnp.bfloat16), b01,
            wcx.astype(jnp.bfloat16), wco.astype(jnp.bfloat16), bc,
            gs1, gb1, gs2, gb2)


def make_emb_zg_conv_params(key, hidden, out_ch, num_layers, max_deg):
    hid_p = _round_up(hidden, LANE)
    keys = jax.random.split(key, num_layers + 1)
    emb = jax.random.normal(keys[0], (max_deg + 1, hidden), jnp.float32)
    emb = _pad2(emb, max_deg + 1, hid_p)
    emb_gn = (jnp.ones((1, hid_p), jnp.float32), jnp.zeros((1, hid_p), jnp.float32))
    convs = []
    for l in range(num_layers - 1):
        convs.append(make_glass_layer_params(keys[l + 1], hidden, hidden))
    convs.append(make_glass_layer_params(keys[num_layers], hidden, out_ch))
    return dict(emb_table=emb, emb_gn=emb_gn, convs=convs, out_channels=out_ch)


def emb_zg_conv_forward(params, x_ids, edge_index, edge_weight, z=None, *,
                        z_ratio=0.2, force_streaming=False, block_k=None):
    n_true = int(x_ids.shape[0])
    np_ = _round_up(n_true, LANE)
    pad_n = np_ - n_true

    adj_q, row_scale = build_adj_int8(edge_index, edge_weight, n_true)
    adj_q = jnp.pad(adj_q, ((0, pad_n), (0, pad_n)))
    row_scale = jnp.pad(row_scale, ((0, pad_n), (0, 0)))

    if z is None:
        mask = jnp.zeros((n_true, 1), jnp.bfloat16)          # all False
    else:
        mask = (z > 0.5).reshape(-1, 1).astype(jnp.bfloat16)
    mask = jnp.pad(mask, ((0, pad_n), (0, 0)))

    # input embedding lookup is glue (HBM gather, not a Pallas kernel)
    x = jnp.take(params["emb_table"], x_ids, axis=0)         # [N, hid_p] f32
    x = jnp.pad(x, ((0, pad_n), (0, 0)))

    emb_gn = params["emb_gn"]
    convs = params["convs"]
    hid_p = x.shape[1]
    vmem_limit = _vmem_limit_bytes()

    if (not force_streaming) and _fused_fits(np_, hid_p, convs, vmem_limit):
        out = glass_fused_forward(x, adj_q, row_scale, mask, emb_gn, convs,
                                  n_true=n_true, z_ratio=z_ratio,
                                  vmem_limit=vmem_limit)
    else:
        for l, p in enumerate(convs):
            last = (l == len(convs) - 1)
            x = glass_layer_stream(
                x, adj_q, row_scale, mask, p, emb_gn,
                n_true=n_true, z_ratio=z_ratio, apply_relu=not last,
                apply_input_gn=(l == 0),
                out_dtype=(jnp.float32 if last else jnp.bfloat16),
                vmem_limit=vmem_limit, block_k=block_k)
        out = x
    return out[:n_true, :params["out_channels"]]             # strip padding


# ----------------------------------------------------------------------------
# Pure-JAX reference (same quantized adjacency / bf16 casts / packed params)
# ----------------------------------------------------------------------------
def _ref_graph_norm(x, scale, bias):
    mean = x.mean(0, keepdims=True)
    xc = x - mean
    var = (xc * xc).mean(0, keepdims=True)
    return scale * xc * jax.lax.rsqrt(var + EPS) + bias


def reference_forward(params, x_ids, edge_index, edge_weight, z=None, *,
                      z_ratio=0.2):
    n = x_ids.shape[0]
    m = (jnp.zeros((n, 1), jnp.float32) if z is None
         else (z > 0.5).reshape(-1, 1).astype(jnp.float32))
    zr = jnp.float32(z_ratio)
    zc = jnp.float32(2.0 * z_ratio - 1.0)
    a0 = zr - m * zc
    a1 = (1.0 - zr) + m * zc
    adj_q, rs = build_adj_int8(edge_index, edge_weight, n)
    adj = adj_q.astype(jnp.float32).astype(jnp.bfloat16)
    x = jnp.take(params["emb_table"], x_ids, axis=0)
    x = _ref_graph_norm(x, *params["emb_gn"]).astype(jnp.bfloat16)
    convs = params["convs"]
    y = None
    for l, p in enumerate(convs):
        (w01, b01, wcx, wco, bc, gs1, gb1, gs2, gb2) = p
        d = w01.shape[1] // 2
        x01 = jnp.maximum(
            jnp.dot(x, w01, preferred_element_type=jnp.float32) + b01, 0.0)
        xm = (a0 * x01[:, :d] + a1 * x01[:, d:]).astype(jnp.bfloat16)
        xa = jnp.dot(adj, xm, preferred_element_type=jnp.float32) * rs
        xn = _ref_graph_norm(xa, gs1, gb1)
        c01 = (jnp.dot(xn.astype(jnp.bfloat16), wcx,
                       preferred_element_type=jnp.float32)
               + jnp.dot(x, wco, preferred_element_type=jnp.float32) + bc)
        y = _ref_graph_norm(a0 * c01[:, :d] + a1 * c01[:, d:], gs2, gb2)
        if l < len(convs) - 1:
            x = jnp.maximum(y, 0.0).astype(jnp.bfloat16)
    return y[:, :params["out_channels"]]


# ----------------------------------------------------------------------------
if __name__ == "__main__":
    key = jax.random.PRNGKey(0)
    k_param, k_x = jax.random.split(key)

    HIDDEN = 64           # padded to 128 lanes internally
    OUT = 32              # padded to 128 lanes internally
    NUM_LAYERS = 2
    MAX_DEG = 8
    Z_RATIO = 0.2

    params = make_emb_zg_conv_params(k_param, HIDDEN, OUT, NUM_LAYERS, MAX_DEG)

    def make_graph(n):
        # deterministic inputs: integer node features, bidirectional ring graph
        x_ids = jax.random.randint(k_x, (n,), 0, MAX_DEG + 1)
        src = jnp.arange(n, dtype=jnp.int32)
        dst = (src + 1) % n
        edge_index = jnp.stack(
            [jnp.concatenate([src, dst]), jnp.concatenate([dst, src])], axis=0)
        edge_weight = jnp.ones((2 * n,), jnp.float32)
        z = (jnp.arange(n) % 4 == 0).astype(jnp.float32)   # some nodes in subgraph
        return x_ids, edge_index, edge_weight, z

    checks = [
        ("fused,  N=256        ", 256, False, None),
        ("fused,  N=200 (pad)  ", 200, False, None),
        ("stream, N=200 (pad)  ", 200, True, 128),
    ]
    for label, n, force_stream, bk in checks:
        x_ids, edge_index, edge_weight, z = make_graph(n)
        out = emb_zg_conv_forward(params, x_ids, edge_index, edge_weight, z=z,
                                  z_ratio=Z_RATIO, force_streaming=force_stream,
                                  block_k=bk)
        out = jax.block_until_ready(out)
        assert out.shape == (n, OUT) and out.dtype == jnp.float32
        assert bool(jnp.all(jnp.isfinite(out)))
        ref = reference_forward(params, x_ids, edge_index, edge_weight, z=z,
                                z_ratio=Z_RATIO)
        err = float(jnp.max(jnp.abs(out - ref)))
        assert err < 5e-2, f"{label}: max |pallas - ref| = {err}"

    print("KERNEL_OK")
</pallas_src>

<mosaic_0001>
module attributes {stable_mosaic.version = 11 : i64} {
  func.func @glass_fused_kernel(%arg0: memref<256x128xf32, #tpu.memory_space<vmem>>, %arg1: memref<256x256xi8, #tpu.memory_space<vmem>>, %arg2: memref<256x1xf32, #tpu.memory_space<vmem>>, %arg3: memref<256x1xbf16, #tpu.memory_space<vmem>>, %arg4: memref<1x128xf32, #tpu.memory_space<vmem>>, %arg5: memref<1x128xf32, #tpu.memory_space<vmem>>, %arg6: memref<128x256xbf16, #tpu.memory_space<vmem>>, %arg7: memref<1x256xf32, #tpu.memory_space<vmem>>, %arg8: memref<128x256xbf16, #tpu.memory_space<vmem>>, %arg9: memref<128x256xbf16, #tpu.memory_space<vmem>>, %arg10: memref<1x256xf32, #tpu.memory_space<vmem>>, %arg11: memref<1x128xf32, #tpu.memory_space<vmem>>, %arg12: memref<1x128xf32, #tpu.memory_space<vmem>>, %arg13: memref<1x128xf32, #tpu.memory_space<vmem>>, %arg14: memref<1x128xf32, #tpu.memory_space<vmem>>, %arg15: memref<128x256xbf16, #tpu.memory_space<vmem>>, %arg16: memref<1x256xf32, #tpu.memory_space<vmem>>, %arg17: memref<128x256xbf16, #tpu.memory_space<vmem>>, %arg18: memref<128x256xbf16, #tpu.memory_space<vmem>>, %arg19: memref<1x256xf32, #tpu.memory_space<vmem>>, %arg20: memref<1x128xf32, #tpu.memory_space<vmem>>, %arg21: memref<1x128xf32, #tpu.memory_space<vmem>>, %arg22: memref<1x128xf32, #tpu.memory_space<vmem>>, %arg23: memref<1x128xf32, #tpu.memory_space<vmem>>, %arg24: memref<256x128xf32, #tpu.memory_space<vmem>>) attributes {dimension_semantics = [], scalar_prefetch = 0 : i64, scratch_operands = 0 : i64, tpu.core_type = #tpu.core_type<tc>} {
    %0 = tpu.iota {dimensions = array<i32: 0>} : vector<256x1xi32>
    %c256_i32 = arith.constant 256 : i32
    %1 = vector.broadcast %c256_i32 : i32 to vector<256x1xi32>
    %2 = arith.cmpi slt, %0, %1 : vector<256x1xi32>
    %3 = arith.extui %2 : vector<256x1xi1> to vector<256x1xi32>
    %4 = arith.sitofp %3 : vector<256x1xi32> to vector<256x1xf32>
    %c0 = arith.constant 0 : index
    %c0_0 = arith.constant 0 : index
    %5 = vector.load %arg3[%c0, %c0_0] : memref<256x1xbf16, #tpu.memory_space<vmem>>, vector<256x1xbf16>
    %6 = arith.extf %5 : vector<256x1xbf16> to vector<256x1xf32>
    %cst = arith.constant -6.000000e-01 : f32
    %7 = vector.broadcast %cst : f32 to vector<256x1xf32>
    %8 = arith.mulf %6, %7 : vector<256x1xf32>
    %cst_1 = arith.constant 2.000000e-01 : f32
    %9 = vector.broadcast %cst_1 : f32 to vector<256x1xf32>
    %10 = arith.subf %9, %8 : vector<256x1xf32>
    %cst_2 = arith.constant 1.000000e+00 : f32
    %cst_3 = arith.constant 2.000000e-01 : f32
    %11 = arith.subf %cst_2, %cst_3 : f32
    %cst_4 = arith.constant -6.000000e-01 : f32
    %12 = vector.broadcast %cst_4 : f32 to vector<256x1xf32>
    %13 = arith.mulf %6, %12 : vector<256x1xf32>
    %14 = vector.broadcast %11 : f32 to vector<256x1xf32>
    %15 = arith.addf %14, %13 : vector<256x1xf32>
    %c0_5 = arith.constant 0 : index
    %c0_6 = arith.constant 0 : index
    %16 = vector.load %arg0[%c0_5, %c0_6] : memref<256x128xf32, #tpu.memory_space<vmem>>, vector<256x128xf32>
    %c0_7 = arith.constant 0 : index
    %c0_8 = arith.constant 0 : index
    %17 = vector.load %arg4[%c0_7, %c0_8] : memref<1x128xf32, #tpu.memory_space<vmem>>, vector<1x128xf32>
    %c0_9 = arith.constant 0 : index
    %c0_10 = arith.constant 0 : index
    %18 = vector.load %arg5[%c0_9, %c0_10] : memref<1x128xf32, #tpu.memory_space<vmem>>, vector<1x128xf32>
    %19 = vector.broadcast %4 : vector<256x1xf32> to vector<256x128xf32>
    %20 = arith.mulf %16, %19 : vector<256x128xf32>
    %cst_11 = arith.constant dense<0.000000e+00> : vector<128xf32>
    %21 = vector.multi_reduction <add>, %20, %cst_11 [0] : vector<256x128xf32> to vector<128xf32>
    %22 = vector.shape_cast %21 : vector<128xf32> to vector<1x128xf32>
    %cst_12 = arith.constant 3.906250e-03 : f32
    %23 = vector.broadcast %cst_12 : f32 to vector<1x128xf32>
    %24 = arith.mulf %22, %23 : vector<1x128xf32>
    %25 = vector.broadcast %24 : vector<1x128xf32> to vector<256x128xf32>
    %26 = arith.subf %16, %25 : vector<256x128xf32>
    %27 = vector.broadcast %4 : vector<256x1xf32> to vector<256x128xf32>
    %28 = arith.mulf %27, %26 : vector<256x128xf32>
    %29 = arith.mulf %28, %26 : vector<256x128xf32>
    %cst_13 = arith.constant dense<0.000000e+00> : vector<128xf32>
    %30 = vector.multi_reduction <add>, %29, %cst_13 [0] : vector<256x128xf32> to vector<128xf32>
    %31 = vector.shape_cast %30 : vector<128xf32> to vector<1x128xf32>
    %cst_14 = arith.constant 3.906250e-03 : f32
    %32 = vector.broadcast %cst_14 : f32 to vector<1x128xf32>
    %33 = arith.mulf %31, %32 : vector<1x128xf32>
    %34 = vector.broadcast %17 : vector<1x128xf32> to vector<256x128xf32>
    %35 = arith.mulf %34, %26 : vector<256x128xf32>
    %cst_15 = arith.constant 9.99999974E-6 : f32
    %36 = vector.broadcast %cst_15 : f32 to vector<1x128xf32>
    %37 = arith.addf %33, %36 : vector<1x128xf32>
    %38 = math.rsqrt %37 : vector<1x128xf32>
    %39 = vector.broadcast %38 : vector<1x128xf32> to vector<256x128xf32>
    %40 = arith.mulf %35, %39 : vector<256x128xf32>
    %41 = vector.broadcast %18 : vector<1x128xf32> to vector<256x128xf32>
    %42 = arith.addf %40, %41 : vector<256x128xf32>
    %43 = arith.truncf %42 : vector<256x128xf32> to vector<256x128xbf16>
    %c0_16 = arith.constant 0 : index
    %c0_17 = arith.constant 0 : index
    %44 = vector.load %arg1[%c0_16, %c0_17] : memref<256x256xi8, #tpu.memory_space<vmem>>, vector<256x256xi8>
    %45 = arith.sitofp %44 : vector<256x256xi8> to vector<256x256xf32>
    %46 = arith.truncf %45 : vector<256x256xf32> to vector<256x256xbf16>
    %c0_18 = arith.constant 0 : index
    %c0_19 = arith.constant 0 : index
    %47 = vector.load %arg2[%c0_18, %c0_19] : memref<256x1xf32, #tpu.memory_space<vmem>>, vector<256x1xf32>
    %c0_20 = arith.constant 0 : index
    %c0_21 = arith.constant 0 : index
    %48 = vector.load %arg6[%c0_20, %c0_21] : memref<128x256xbf16, #tpu.memory_space<vmem>>, vector<128x256xbf16>
    %cst_22 = arith.constant dense<0.000000e+00> : vector<256x256xf32>
    %49 = tpu.matmul %43, %48, %cst_22 {dimension_numbers = #tpu.dot_dimension_numbers<[1], [0], [0], [1], [0, 0, 1, 1], [], []>} : vector<256x128xbf16>, vector<128x256xbf16>, vector<256x256xf32> -> vector<256x256xf32>
    %c0_23 = arith.constant 0 : index
    %c0_24 = arith.constant 0 : index
    %50 = vector.load %arg7[%c0_23, %c0_24] : memref<1x256xf32, #tpu.memory_space<vmem>>, vector<1x256xf32>
    %51 = vector.broadcast %50 : vector<1x256xf32> to vector<256x256xf32>
    %52 = arith.addf %49, %51 : vector<256x256xf32>
    %cst_25 = arith.constant 0.000000e+00 : f32
    %53 = vector.broadcast %cst_25 : f32 to vector<256x256xf32>
    %54 = arith.maximumf %52, %53 : vector<256x256xf32>
    %55 = vector.extract_strided_slice %54 {offsets = [0, 0], sizes = [256, 128], strides = [1, 1]} : vector<256x256xf32> to vector<256x128xf32>
    %56 = vector.broadcast %10 : vector<256x1xf32> to vector<256x128xf32>
    %57 = arith.mulf %56, %55 : vector<256x128xf32>
    %58 = vector.extract_strided_slice %54 {offsets = [0, 128], sizes = [256, 128], strides = [1, 1]} : vector<256x256xf32> to vector<256x128xf32>
    %59 = vector.broadcast %15 : vector<256x1xf32> to vector<256x128xf32>
    %60 = arith.mulf %59, %58 : vector<256x128xf32>
    %61 = arith.addf %57, %60 : vector<256x128xf32>
    %62 = arith.truncf %61 : vector<256x128xf32> to vector<256x128xbf16>
    %cst_26 = arith.constant dense<0.000000e+00> : vector<256x128xf32>
    %63 = tpu.matmul %46, %62, %cst_26 {dimension_numbers = #tpu.dot_dimension_numbers<[1], [0], [0], [1], [0, 0, 1, 1], [], []>} : vector<256x256xbf16>, vector<256x128xbf16>, vector<256x128xf32> -> vector<256x128xf32>
    %64 = vector.broadcast %47 : vector<256x1xf32> to vector<256x128xf32>
    %65 = arith.mulf %63, %64 : vector<256x128xf32>
    %c0_27 = arith.constant 0 : index
    %c0_28 = arith.constant 0 : index
    %66 = vector.load %arg11[%c0_27, %c0_28] : memref<1x128xf32, #tpu.memory_space<vmem>>, vector<1x128xf32>
    %c0_29 = arith.constant 0 : index
    %c0_30 = arith.constant 0 : index
    %67 = vector.load %arg12[%c0_29, %c0_30] : memref<1x128xf32, #tpu.memory_space<vmem>>, vector<1x128xf32>
    %68 = vector.broadcast %4 : vector<256x1xf32> to vector<256x128xf32>
    %69 = arith.mulf %65, %68 : vector<256x128xf32>
    %cst_31 = arith.constant dense<0.000000e+00> : vector<128xf32>
    %70 = vector.multi_reduction <add>, %69, %cst_31 [0] : vector<256x128xf32> to vector<128xf32>
    %71 = vector.shape_cast %70 : vector<128xf32> to vector<1x128xf32>
    %cst_32 = arith.constant 3.906250e-03 : f32
    %72 = vector.broadcast %cst_32 : f32 to vector<1x128xf32>
    %73 = arith.mulf %71, %72 : vector<1x128xf32>
    %74 = vector.broadcast %73 : vector<1x128xf32> to vector<256x128xf32>
    %75 = arith.subf %65, %74 : vector<256x128xf32>
    %76 = vector.broadcast %4 : vector<256x1xf32> to vector<256x128xf32>
    %77 = arith.mulf %76, %75 : vector<256x128xf32>
    %78 = arith.mulf %77, %75 : vector<256x128xf32>
    %cst_33 = arith.constant dense<0.000000e+00> : vector<128xf32>
    %79 = vector.multi_reduction <add>, %78, %cst_33 [0] : vector<256x128xf32> to vector<128xf32>
    %80 = vector.shape_cast %79 : vector<128xf32> to vector<1x128xf32>
    %cst_34 = arith.constant 3.906250e-03 : f32
    %81 = vector.broadcast %cst_34 : f32 to vector<1x128xf32>
    %82 = arith.mulf %80, %81 : vector<1x128xf32>
    %83 = vector.broadcast %66 : vector<1x128xf32> to vector<256x128xf32>
    %84 = arith.mulf %83, %75 : vector<256x128xf32>
    %cst_35 = arith.constant 9.99999974E-6 : f32
    %85 = vector.broadcast %cst_35 : f32 to vector<1x128xf32>
    %86 = arith.addf %82, %85 : vector<1x128xf32>
    %87 = math.rsqrt %86 : vector<1x128xf32>
    %88 = vector.broadcast %87 : vector<1x128xf32> to vector<256x128xf32>
    %89 = arith.mulf %84, %88 : vector<256x128xf32>
    %90 = vector.broadcast %67 : vector<1x128xf32> to vector<256x128xf32>
    %91 = arith.addf %89, %90 : vector<256x128xf32>
    %92 = arith.truncf %91 : vector<256x128xf32> to vector<256x128xbf16>
    %c0_36 = arith.constant 0 : index
    %c0_37 = arith.constant 0 : index
    %93 = vector.load %arg8[%c0_36, %c0_37] : memref<128x256xbf16, #tpu.memory_space<vmem>>, vector<128x256xbf16>
    %cst_38 = arith.constant dense<0.000000e+00> : vector<256x256xf32>
    %94 = tpu.matmul %92, %93, %cst_38 {dimension_numbers = #tpu.dot_dimension_numbers<[1], [0], [0], [1], [0, 0, 1, 1], [], []>} : vector<256x128xbf16>, vector<128x256xbf16>, vector<256x256xf32> -> vector<256x256xf32>
    %c0_39 = arith.constant 0 : index
    %c0_40 = arith.constant 0 : index
    %95 = vector.load %arg9[%c0_39, %c0_40] : memref<128x256xbf16, #tpu.memory_space<vmem>>, vector<128x256xbf16>
    %cst_41 = arith.constant dense<0.000000e+00> : vector<256x256xf32>
    %96 = tpu.matmul %43, %95, %cst_41 {dimension_numbers = #tpu.dot_dimension_numbers<[1], [0], [0], [1], [0, 0, 1, 1], [], []>} : vector<256x128xbf16>, vector<128x256xbf16>, vector<256x256xf32> -> vector<256x256xf32>
    %97 = arith.addf %94, %96 : vector<256x256xf32>
    %c0_42 = arith.constant 0 : index
    %c0_43 = arith.constant 0 : index
    %98 = vector.load %arg10[%c0_42, %c0_43] : memref<1x256xf32, #tpu.memory_space<vmem>>, vector<1x256xf32>
    %99 = vector.broadcast %98 : vector<1x256xf32> to vector<256x256xf32>
    %100 = arith.addf %97, %99 : vector<256x256xf32>
    %101 = vector.extract_strided_slice %100 {offsets = [0, 0], sizes = [256, 128], strides = [1, 1]} : vector<256x256xf32> to vector<256x128xf32>
    %102 = vector.broadcast %10 : vector<256x1xf32> to vector<256x128xf32>
    %103 = arith.mulf %102, %101 : vector<256x128xf32>
    %104 = vector.extract_strided_slice %100 {offsets = [0, 128], sizes = [256, 128], strides = [1, 1]} : vector<256x256xf32> to vector<256x128xf32>
    %105 = vector.broadcast %15 : vector<256x1xf32> to vector<256x128xf32>
    %106 = arith.mulf %105, %104 : vector<256x128xf32>
    %107 = arith.addf %103, %106 : vector<256x128xf32>
    %c0_44 = arith.constant 0 : index
    %c0_45 = arith.constant 0 : index
    %108 = vector.load %arg13[%c0_44, %c0_45] : memref<1x128xf32, #tpu.memory_space<vmem>>, vector<1x128xf32>
    %c0_46 = arith.constant 0 : index
    %c0_47 = arith.constant 0 : index
    %109 = vector.load %arg14[%c0_46, %c0_47] : memref<1x128xf32, #tpu.memory_space<vmem>>, vector<1x128xf32>
    %110 = vector.broadcast %4 : vector<256x1xf32> to vector<256x128xf32>
    %111 = arith.mulf %107, %110 : vector<256x128xf32>
    %cst_48 = arith.constant dense<0.000000e+00> : vector<128xf32>
    %112 = vector.multi_reduction <add>, %111, %cst_48 [0] : vector<256x128xf32> to vector<128xf32>
    %113 = vector.shape_cast %112 : vector<128xf32> to vector<1x128xf32>
    %cst_49 = arith.constant 3.906250e-03 : f32
    %114 = vector.broadcast %cst_49 : f32 to vector<1x128xf32>
    %115 = arith.mulf %113, %114 : vector<1x128xf32>
    %116 = vector.broadcast %115 : vector<1x128xf32> to vector<256x128xf32>
    %117 = arith.subf %107, %116 : vector<256x128xf32>
    %118 = vector.broadcast %4 : vector<256x1xf32> to vector<256x128xf32>
    %119 = arith.mulf %118, %117 : vector<256x128xf32>
    %120 = arith.mulf %119, %117 : vector<256x128xf32>
    %cst_50 = arith.constant dense<0.000000e+00> : vector<128xf32>
    %121 = vector.multi_reduction <add>, %120, %cst_50 [0] : vector<256x128xf32> to vector<128xf32>
    %122 = vector.shape_cast %121 : vector<128xf32> to vector<1x128xf32>
    %cst_51 = arith.constant 3.906250e-03 : f32
    %123 = vector.broadcast %cst_51 : f32 to vector<1x128xf32>
    %124 = arith.mulf %122, %123 : vector<1x128xf32>
    %125 = vector.broadcast %108 : vector<1x128xf32> to vector<256x128xf32>
    %126 = arith.mulf %125, %117 : vector<256x128xf32>
    %cst_52 = arith.constant 9.99999974E-6 : f32
    %127 = vector.broadcast %cst_52 : f32 to vector<1x128xf32>
    %128 = arith.addf %124, %127 : vector<1x128xf32>
    %129 = math.rsqrt %128 : vector<1x128xf32>
    %130 = vector.broadcast %129 : vector<1x128xf32> to vector<256x128xf32>
    %131 = arith.mulf %126, %130 : vector<256x128xf32>
    %132 = vector.broadcast %109 : vector<1x128xf32> to vector<256x128xf32>
    %133 = arith.addf %131, %132 : vector<256x128xf32>
    %cst_53 = arith.constant 0.000000e+00 : f32
    %134 = vector.broadcast %cst_53 : f32 to vector<256x128xf32>
    %135 = arith.maximumf %133, %134 : vector<256x128xf32>
    %136 = arith.truncf %135 : vector<256x128xf32> to vector<256x128xbf16>
    %c0_54 = arith.constant 0 : index
    %c0_55 = arith.constant 0 : index
    %137 = vector.load %arg15[%c0_54, %c0_55] : memref<128x256xbf16, #tpu.memory_space<vmem>>, vector<128x256xbf16>
    %cst_56 = arith.constant dense<0.000000e+00> : vector<256x256xf32>
    %138 = tpu.matmul %136, %137, %cst_56 {dimension_numbers = #tpu.dot_dimension_numbers<[1], [0], [0], [1], [0, 0, 1, 1], [], []>} : vector<256x128xbf16>, vector<128x256xbf16>, vector<256x256xf32> -> vector<256x256xf32>
    %c0_57 = arith.constant 0 : index
    %c0_58 = arith.constant 0 : index
    %139 = vector.load %arg16[%c0_57, %c0_58] : memref<1x256xf32, #tpu.memory_space<vmem>>, vector<1x256xf32>
    %140 = vector.broadcast %139 : vector<1x256xf32> to vector<256x256xf32>
    %141 = arith.addf %138, %140 : vector<256x256xf32>
    %cst_59 = arith.constant 0.000000e+00 : f32
    %142 = vector.broadcast %cst_59 : f32 to vector<256x256xf32>
    %143 = arith.maximumf %141, %142 : vector<256x256xf32>
    %144 = vector.extract_strided_slice %143 {offsets = [0, 0], sizes = [256, 128], strides = [1, 1]} : vector<256x256xf32> to vector<256x128xf32>
    %145 = vector.broadcast %10 : vector<256x1xf32> to vector<256x128xf32>
    %146 = arith.mulf %145, %144 : vector<256x128xf32>
    %147 = vector.extract_strided_slice %143 {offsets = [0, 128], sizes = [256, 128], strides = [1, 1]} : vector<256x256xf32> to vector<256x128xf32>
    %148 = vector.broadcast %15 : vector<256x1xf32> to vector<256x128xf32>
    %149 = arith.mulf %148, %147 : vector<256x128xf32>
    %150 = arith.addf %146, %149 : vector<256x128xf32>
    %151 = arith.truncf %150 : vector<256x128xf32> to vector<256x128xbf16>
    %cst_60 = arith.constant dense<0.000000e+00> : vector<256x128xf32>
    %152 = tpu.matmul %46, %151, %cst_60 {dimension_numbers = #tpu.dot_dimension_numbers<[1], [0], [0], [1], [0, 0, 1, 1], [], []>} : vector<256x256xbf16>, vector<256x128xbf16>, vector<256x128xf32> -> vector<256x128xf32>
    %153 = vector.broadcast %47 : vector<256x1xf32> to vector<256x128xf32>
    %154 = arith.mulf %152, %153 : vector<256x128xf32>
    %c0_61 = arith.constant 0 : index
    %c0_62 = arith.constant 0 : index
    %155 = vector.load %arg20[%c0_61, %c0_62] : memref<1x128xf32, #tpu.memory_space<vmem>>, vector<1x128xf32>
    %c0_63 = arith.constant 0 : index
    %c0_64 = arith.constant 0 : index
    %156 = vector.load %arg21[%c0_63, %c0_64] : memref<1x128xf32, #tpu.memory_space<vmem>>, vector<1x128xf32>
    %157 = vector.broadcast %4 : vector<256x1xf32> to vector<256x128xf32>
    %158 = arith.mulf %154, %157 : vector<256x128xf32>
    %cst_65 = arith.constant dense<0.000000e+00> : vector<128xf32>
    %159 = vector.multi_reduction <add>, %158, %cst_65 [0] : vector<256x128xf32> to vector<128xf32>
    %160 = vector.shape_cast %159 : vector<128xf32> to vector<1x128xf32>
    %cst_66 = arith.constant 3.906250e-03 : f32
    %161 = vector.broadcast %cst_66 : f32 to vector<1x128xf32>
    %162 = arith.mulf %160, %161 : vector<1x128xf32>
    %163 = vector.broadcast %162 : vector<1x128xf32> to vector<256x128xf32>
    %164 = arith.subf %154, %163 : vector<256x128xf32>
    %165 = vector.broadcast %4 : vector<256x1xf32> to vector<256x128xf32>
    %166 = arith.mulf %165, %164 : vector<256x128xf32>
    %167 = arith.mulf %166, %164 : vector<256x128xf32>
    %cst_67 = arith.constant dense<0.000000e+00> : vector<128xf32>
    %168 = vector.multi_reduction <add>, %167, %cst_67 [0] : vector<256x128xf32> to vector<128xf32>
    %169 = vector.shape_cast %168 : vector<128xf32> to vector<1x128xf32>
    %cst_68 = arith.constant 3.906250e-03 : f32
    %170 = vector.broadcast %cst_68 : f32 to vector<1x128xf32>
    %171 = arith.mulf %169, %170 : vector<1x128xf32>
    %172 = vector.broadcast %155 : vector<1x128xf32> to vector<256x128xf32>
    %173 = arith.mulf %172, %164 : vector<256x128xf32>
    %cst_69 = arith.constant 9.99999974E-6 : f32
    %174 = vector.broadcast %cst_69 : f32 to vector<1x128xf32>
    %175 = arith.addf %171, %174 : vector<1x128xf32>
    %176 = math.rsqrt %175 : vector<1x128xf32>
    %177 = vector.broadcast %176 : vector<1x128xf32> to vector<256x128xf32>
    %178 = arith.mulf %173, %177 : vector<256x128xf32>
    %179 = vector.broadcast %156 : vector<1x128xf32> to vector<256x128xf32>
    %180 = arith.addf %178, %179 : vector<256x128xf32>
    %181 = arith.truncf %180 : vector<256x128xf32> to vector<256x128xbf16>
    %c0_70 = arith.constant 0 : index
    %c0_71 = arith.constant 0 : index
    %182 = vector.load %arg17[%c0_70, %c0_71] : memref<128x256xbf16, #tpu.memory_space<vmem>>, vector<128x256xbf16>
    %cst_72 = arith.constant dense<0.000000e+00> : vector<256x256xf32>
    %183 = tpu.matmul %181, %182, %cst_72 {dimension_numbers = #tpu.dot_dimension_numbers<[1], [0], [0], [1], [0, 0, 1, 1], [], []>} : vector<256x128xbf16>, vector<128x256xbf16>, vector<256x256xf32> -> vector<256x256xf32>
    %c0_73 = arith.constant 0 : index
    %c0_74 = arith.constant 0 : index
    %184 = vector.load %arg18[%c0_73, %c0_74] : memref<128x256xbf16, #tpu.memory_space<vmem>>, vector<128x256xbf16>
    %cst_75 = arith.constant dense<0.000000e+00> : vector<256x256xf32>
    %185 = tpu.matmul %136, %184, %cst_75 {dimension_numbers = #tpu.dot_dimension_numbers<[1], [0], [0], [1], [0, 0, 1, 1], [], []>} : vector<256x128xbf16>, vector<128x256xbf16>, vector<256x256xf32> -> vector<256x256xf32>
    %186 = arith.addf %183, %185 : vector<256x256xf32>
    %c0_76 = arith.constant 0 : index
    %c0_77 = arith.constant 0 : index
    %187 = vector.load %arg19[%c0_76, %c0_77] : memref<1x256xf32, #tpu.memory_space<vmem>>, vector<1x256xf32>
    %188 = vector.broadcast %187 : vector<1x256xf32> to vector<256x256xf32>
    %189 = arith.addf %186, %188 : vector<256x256xf32>
    %190 = vector.extract_strided_slice %189 {offsets = [0, 0], sizes = [256, 128], strides = [1, 1]} : vector<256x256xf32> to vector<256x128xf32>
    %191 = vector.broadcast %10 : vector<256x1xf32> to vector<256x128xf32>
    %192 = arith.mulf %191, %190 : vector<256x128xf32>
    %193 = vector.extract_strided_slice %189 {offsets = [0, 128], sizes = [256, 128], strides = [1, 1]} : vector<256x256xf32> to vector<256x128xf32>
    %194 = vector.broadcast %15 : vector<256x1xf32> to vector<256x128xf32>
    %195 = arith.mulf %194, %193 : vector<256x128xf32>
    %196 = arith.addf %192, %195 : vector<256x128xf32>
    %c0_78 = arith.constant 0 : index
    %c0_79 = arith.constant 0 : index
    %197 = vector.load %arg22[%c0_78, %c0_79] : memref<1x128xf32, #tpu.memory_space<vmem>>, vector<1x128xf32>
    %c0_80 = arith.constant 0 : index
    %c0_81 = arith.constant 0 : index
    %198 = vector.load %arg23[%c0_80, %c0_81] : memref<1x128xf32, #tpu.memory_space<vmem>>, vector<1x128xf32>
    %199 = vector.broadcast %4 : vector<256x1xf32> to vector<256x128xf32>
    %200 = arith.mulf %196, %199 : vector<256x128xf32>
    %cst_82 = arith.constant dense<0.000000e+00> : vector<128xf32>
    %201 = vector.multi_reduction <add>, %200, %cst_82 [0] : vector<256x128xf32> to vector<128xf32>
    %202 = vector.shape_cast %201 : vector<128xf32> to vector<1x128xf32>
    %cst_83 = arith.constant 3.906250e-03 : f32
    %203 = vector.broadcast %cst_83 : f32 to vector<1x128xf32>
    %204 = arith.mulf %202, %203 : vector<1x128xf32>
    %205 = vector.broadcast %204 : vector<1x128xf32> to vector<256x128xf32>
    %206 = arith.subf %196, %205 : vector<256x128xf32>
    %207 = vector.broadcast %4 : vector<256x1xf32> to vector<256x128xf32>
    %208 = arith.mulf %207, %206 : vector<256x128xf32>
    %209 = arith.mulf %208, %206 : vector<256x128xf32>
    %cst_84 = arith.constant dense<0.000000e+00> : vector<128xf32>
    %210 = vector.multi_reduction <add>, %209, %cst_84 [0] : vector<256x128xf32> to vector<128xf32>
    %211 = vector.shape_cast %210 : vector<128xf32> to vector<1x128xf32>
    %cst_85 = arith.constant 3.906250e-03 : f32
    %212 = vector.broadcast %cst_85 : f32 to vector<1x128xf32>
    %213 = arith.mulf %211, %212 : vector<1x128xf32>
    %214 = vector.broadcast %197 : vector<1x128xf32> to vector<256x128xf32>
    %215 = arith.mulf %214, %206 : vector<256x128xf32>
    %cst_86 = arith.constant 9.99999974E-6 : f32
    %216 = vector.broadcast %cst_86 : f32 to vector<1x128xf32>
    %217 = arith.addf %213, %216 : vector<1x128xf32>
    %218 = math.rsqrt %217 : vector<1x128xf32>
    %219 = vector.broadcast %218 : vector<1x128xf32> to vector<256x128xf32>
    %220 = arith.mulf %215, %219 : vector<256x128xf32>
    %221 = vector.broadcast %198 : vector<1x128xf32> to vector<256x128xf32>
    %222 = arith.addf %220, %221 : vector<256x128xf32>
    %c0_87 = arith.constant 0 : index
    %c0_88 = arith.constant 0 : index
    %223 = vector.load %arg24[%c0_87, %c0_88] : memref<256x128xf32, #tpu.memory_space<vmem>>, vector<256x128xf32>
    tpu.vector_store %arg24[%c0_87, %c0_88], %222 {strides = array<i32>} : memref<256x128xf32, #tpu.memory_space<vmem>>, vector<256x128xf32>,
    return
  }
}

</mosaic_0001>

<llo_original>
// kernel: tpu_custom_call.1
$region0: #{tpu_custom_call.1}
  #allocation0 [shape = 'u32[]', space=smem, size = 0x4, offset = 0x4, fixed_abs, tag = 'smem constant byte address 0x4 - core index']
  #allocation1 [shape = 'u32[144,128]{1,0:T(1,128)}', space=vmem, size = 0x12000, scoped, tag = 'internal scratch']
  %s0 = inlined_call_operand.vmem [shape: f32[256,128], index: 0, kind: input, shape index: {}]
  %s1 = inlined_call_operand.vmem [shape: s8[256,256], index: 1, kind: input, shape index: {}]
  %s2 = inlined_call_operand.vmem [shape: f32[256,1], index: 2, kind: input, shape index: {}]
  %s3 = inlined_call_operand.vmem [shape: bf16[256,1], index: 3, kind: input, shape index: {}]
  %s4 = inlined_call_operand.vmem [shape: f32[1,128], index: 4, kind: input, shape index: {}]
  %s5 = inlined_call_operand.hbm [shape: f32[1,128], index: 5, kind: input, shape index: {}]
  %s6 = inlined_call_operand.hbm [shape: bf16[128,256], index: 6, kind: input, shape index: {}]
  %s7 = inlined_call_operand.vmem [shape: f32[1,256], index: 7, kind: input, shape index: {}]
  %s8 = inlined_call_operand.hbm [shape: bf16[128,256], index: 8, kind: input, shape index: {}]
  %s9 = inlined_call_operand.hbm [shape: bf16[128,256], index: 9, kind: input, shape index: {}]
  %s10 = inlined_call_operand.vmem [shape: f32[1,256], index: 10, kind: input, shape index: {}]
  %s11 = inlined_call_operand.vmem [shape: f32[1,128], index: 11, kind: input, shape index: {}]
  %s12 = inlined_call_operand.vmem [shape: f32[1,128], index: 12, kind: input, shape index: {}]
  %s13 = inlined_call_operand.vmem [shape: f32[1,128], index: 13, kind: input, shape index: {}]
  %s14 = inlined_call_operand.vmem [shape: f32[1,128], index: 14, kind: input, shape index: {}]
  %s15 = inlined_call_operand.hbm [shape: bf16[128,256], index: 15, kind: input, shape index: {}]
  %s16 = inlined_call_operand.vmem [shape: f32[1,256], index: 16, kind: input, shape index: {}]
  %s17 = inlined_call_operand.hbm [shape: bf16[128,256], index: 17, kind: input, shape index: {}]
  %s18 = inlined_call_operand.hbm [shape: bf16[128,256], index: 18, kind: input, shape index: {}]
  %s19 = inlined_call_operand.vmem [shape: f32[1,256], index: 19, kind: input, shape index: {}]
  %s20 = inlined_call_operand.vmem [shape: f32[1,128], index: 20, kind: input, shape index: {}]
  %s21 = inlined_call_operand.vmem [shape: f32[1,128], index: 21, kind: input, shape index: {}]
  %s22 = inlined_call_operand.vmem [shape: f32[1,128], index: 22, kind: input, shape index: {}]
  %s23 = inlined_call_operand.vmem [shape: f32[1,128], index: 23, kind: input, shape index: {}]
  %s24 = inlined_call_operand.hbm [shape: f32[256,128], index: 24, kind: output, shape index: {}]
  %s25 = sld [smem:[#allocation0]]
  $region134: #{tpu_custom_call.1} parent=0
    _
  %s27 = ssub.s32 1, %s25
  %s28 = scalar_select 0, %s27, %s25
  $region1: #{tpu_custom_call.1} parent=0
    #allocation2 [shape = 'u8[512]{0}', space=vmem, size = 0x400, scoped, tag = 'input window, operand 5, single buffered']
    #allocation3 [shape = 's32[1]{0}', space=sflag, size = 0x4, scoped, tag = 'scoped memory for tpu_custom_call.1']
    #allocation4 [shape = 's32[1]{0}', space=sflag, size = 0x4, scoped, tag = 'scoped memory for tpu_custom_call.1']
    #allocation5 [shape = 'u8[65536]{0}', space=vmem, size = 0x10000, scoped, tag = 'input window, operand 6, single buffered']
    #allocation6 [shape = 's32[1]{0}', space=sflag, size = 0x4, scoped, tag = 'scoped memory for tpu_custom_call.1']
    #allocation7 [shape = 'u8[65536]{0}', space=vmem, size = 0x10000, scoped, tag = 'input window, operand 8, single buffered']
    #allocation8 [shape = 'u8[65536]{0}', space=vmem, size = 0x10000, scoped, tag = 'input window, operand 9, single buffered']
    #allocation9 [shape = 's32[1]{0}', space=sflag, size = 0x4, scoped, tag = 'scoped memory for tpu_custom_call.1']
    #allocation10 [shape = 'u8[65536]{0}', space=vmem, size = 0x10000, scoped, tag = 'input window, operand 15, single buffered']
    #allocation11 [shape = 'u8[65536]{0}', space=vmem, size = 0x10000, scoped, tag = 'input window, operand 17, single buffered']
    #allocation12 [shape = 's32[1]{0}', space=sflag, size = 0x4, scoped, tag = 'scoped memory for tpu_custom_call.1']
    #allocation13 [shape = 'u8[65536]{0}', space=vmem, size = 0x10000, scoped, tag = 'input window, operand 18, single buffered']
    #allocation14 [shape = 'u8[131072]{0}', space=vmem, size = 0x20000, scoped, tag = 'output window, operand 0, single buffered']
    %29 = vsyncpa [#allocation3], 0
    %30 = vsyncpa [#allocation6], 0
    %31 = vsyncpa [#allocation9], 0
    %32 = vsyncpa [#allocation12], 0
    %33 = vsyncpa [#allocation4], 0
    // Predicated region
    $region2: #{tpu_custom_call.1} parent=1 // pred_check
      _
    $region3: #{tpu_custom_call.1} parent=1 // pred_check_branch
      %35 = sbr.rel (0) target = $region5
    $region4: #{tpu_custom_call.1} parent=1 // pred_region
      _
    $region5: #{tpu_custom_call.1} parent=1 // pred_fallthru
      _
    // Predicated region
    $region6: #{tpu_custom_call.1} parent=1 // pred_check
      _
    $region7: #{tpu_custom_call.1} parent=1 // pred_check_branch
      %37 = sbr.rel (0) target = $region9
    $region8: #{tpu_custom_call.1} parent=1 // pred_region
      _
    $region9: #{tpu_custom_call.1} parent=1 // pred_fallthru
      _
    // Predicated region
    $region10: #{tpu_custom_call.1} parent=1 // pred_check
      _
    $region11: #{tpu_custom_call.1} parent=1 // pred_check_branch
      %39 = sbr.rel (0) target = $region13
    $region12: #{tpu_custom_call.1} parent=1 // pred_region
      _
    $region13: #{tpu_custom_call.1} parent=1 // pred_fallthru
      _
    // Predicated region
    $region14: #{tpu_custom_call.1} parent=1 // pred_check
      _
    $region15: #{tpu_custom_call.1} parent=1 // pred_check_branch
      %41 = sbr.rel (0) target = $region17
    $region16: #{tpu_custom_call.1} parent=1 // pred_region
      _
    $region17: #{tpu_custom_call.1} parent=1 // pred_fallthru
      _
    // Predicated region
    $region18: #{tpu_custom_call.1} parent=1 // pred_check
      _
    $region19: #{tpu_custom_call.1} parent=1 // pred_check_branch
      %43 = sbr.rel (0) target = $region21
    $region20: #{tpu_custom_call.1} parent=1 // pred_region
      _
    $region21: #{tpu_custom_call.1} parent=1 // pred_fallthru
      _
    // Predicated region
    $region22: #{tpu_custom_call.1} parent=1 // pred_check
      _
    $region23: #{tpu_custom_call.1} parent=1 // pred_check_branch
      %45 = sbr.rel (0) target = $region25
    $region24: #{tpu_custom_call.1} parent=1 // pred_region
      %s47 = ssub.s32 16, 16
      %48 = vsyncadd [#allocation3], %s47
      %s50 = sshll.u32 [#allocation2], 4
      %s51 = int_to_ptr.vmem [resolvable:$true] %s50
      %53 = dma.hbm_to_vmem [thread:$0]  %s5, 16, %s51, [#allocation3]
    $region25: #{tpu_custom_call.1} parent=1 // pred_fallthru
      _
    // Predicated region
    $region26: #{tpu_custom_call.1} parent=1 // pred_check
      _
    $region27: #{tpu_custom_call.1} parent=1 // pred_check_branch
      %55 = sbr.rel (0) target = $region29
    $region28: #{tpu_custom_call.1} parent=1 // pred_region
      %s57 = ssub.s32 2048, 2048
      %58 = vsyncadd [#allocation6], %s57
      %s59 = sshll.u32 [#allocation5], 4
      %s60 = int_to_ptr.vmem [resolvable:$true] %s59
      %65 = dma.hbm_to_vmem [thread:$0]  %s6, 2048, %s60, [#allocation6], 128, 128, 8
    $region29: #{tpu_custom_call.1} parent=1 // pred_fallthru
      _
    // Predicated region
    $region30: #{tpu_custom_call.1} parent=1 // pred_check
      _
    $region31: #{tpu_custom_call.1} parent=1 // pred_check_branch
      %67 = sbr.rel (0) target = $region33
    $region32: #{tpu_custom_call.1} parent=1 // pred_region
      _
    $region33: #{tpu_custom_call.1} parent=1 // pred_fallthru
      _
    // Predicated region
    $region34: #{tpu_custom_call.1} parent=1 // pred_check
      _
    $region35: #{tpu_custom_call.1} parent=1 // pred_check_branch
      %69 = sbr.rel (0) target = $region37
    $region36: #{tpu_custom_call.1} parent=1 // pred_region
      %s71 = ssub.s32 2048, 2048
      %72 = vsyncadd [#allocation6], %s71
      %s73 = sshll.u32 [#allocation7], 4
      %s74 = int_to_ptr.vmem [resolvable:$true] %s73
      %79 = dma.hbm_to_vmem [thread:$0]  %s8, 2048, %s74, [#allocation6], 128, 128, 8
    $region37: #{tpu_custom_call.1} parent=1 // pred_fallthru
      _
    // Predicated region
    $region38: #{tpu_custom_call.1} parent=1 // pred_check
      _
    $region39: #{tpu_custom_call.1} parent=1 // pred_check_branch
      %81 = sbr.rel (0) target = $region41
    $region40: #{tpu_custom_call.1} parent=1 // pred_region
      %s83 = ssub.s32 2048, 2048
      %84 = vsyncadd [#allocation9], %s83
      %s85 = sshll.u32 [#allocation8], 4
      %s86 = int_to_ptr.vmem [resolvable:$true] %s85
      %91 = dma.hbm_to_vmem [thread:$0]  %s9, 2048, %s86, [#allocation9], 128, 128, 8
    $region41: #{tpu_custom_call.1} parent=1 // pred_fallthru
      _
    // Predicated region
    $region42: #{tpu_custom_call.1} parent=1 // pred_check
      _
    $region43: #{tpu_custom_call.1} parent=1 // pred_check_branch
      %93 = sbr.rel (0) target = $region45
    $region44: #{tpu_custom_call.1} parent=1 // pred_region
      _
    $region45: #{tpu_custom_call.1} parent=1 // pred_fallthru
      _
    // Predicated region
    $region46: #{tpu_custom_call.1} parent=1 // pred_check
      _
    $region47: #{tpu_custom_call.1} parent=1 // pred_check_branch
      %95 = sbr.rel (0) target = $region49
    $region48: #{tpu_custom_call.1} parent=1 // pred_region
      _
    $region49: #{tpu_custom_call.1} parent=1 // pred_fallthru
      _
    // Predicated region
    $region50: #{tpu_custom_call.1} parent=1 // pred_check
      _
    $region51: #{tpu_custom_call.1} parent=1 // pred_check_branch
      %97 = sbr.rel (0) target = $region53
    $region52: #{tpu_custom_call.1} parent=1 // pred_region
      _
    $region53: #{tpu_custom_call.1} parent=1 // pred_fallthru
      _
    // Predicated region
    $region54: #{tpu_custom_call.1} parent=1 // pred_check
      _
    $region55: #{tpu_custom_call.1} parent=1 // pred_check_branch
      %99 = sbr.rel (0) target = $region57
    $region56: #{tpu_custom_call.1} parent=1 // pred_region
      _
    $region57: #{tpu_custom_call.1} parent=1 // pred_fallthru
      _
    // Predicated region
    $region58: #{tpu_custom_call.1} parent=1 // pred_check
      _
    $region59: #{tpu_custom_call.1} parent=1 // pred_check_branch
      %101 = sbr.rel (0) target = $region61
    $region60: #{tpu_custom_call.1} parent=1 // pred_region
      _
    $region61: #{tpu_custom_call.1} parent=1 // pred_fallthru
      _
    // Predicated region
    $region62: #{tpu_custom_call.1} parent=1 // pred_check
      _
    $region63: #{tpu_custom_call.1} parent=1 // pred_check_branch
      %103 = sbr.rel (0) target = $region65
    $region64: #{tpu_custom_call.1} parent=1 // pred_region
      %s105 = ssub.s32 2048, 2048
      %106 = vsyncadd [#allocation9], %s105
      %s107 = sshll.u32 [#allocation10], 4
      %s108 = int_to_ptr.vmem [resolvable:$true] %s107
      %113 = dma.hbm_to_vmem [thread:$0]  %s15, 2048, %s108, [#allocation9], 128, 128, 8
    $region65: #{tpu_custom_call.1} parent=1 // pred_fallthru
      _
    // Predicated region
    $region66: #{tpu_custom_call.1} parent=1 // pred_check
      _
    $region67: #{tpu_custom_call.1} parent=1 // pred_check_branch
      %115 = sbr.rel (0) target = $region69
    $region68: #{tpu_custom_call.1} parent=1 // pred_region
      _
    $region69: #{tpu_custom_call.1} parent=1 // pred_fallthru
      _
    // Predicated region
    $region70: #{tpu_custom_call.1} parent=1 // pred_check
      _
    $region71: #{tpu_custom_call.1} parent=1 // pred_check_branch
      %117 = sbr.rel (0) target = $region73
    $region72: #{tpu_custom_call.1} parent=1 // pred_region
      %s119 = ssub.s32 2048, 2048
      %120 = vsyncadd [#allocation12], %s119
      %s121 = sshll.u32 [#allocation11], 4
      %s122 = int_to_ptr.vmem [resolvable:$true] %s121
      %127 = dma.hbm_to_vmem [thread:$0]  %s17, 2048, %s122, [#allocation12], 128, 128, 8
    $region73: #{tpu_custom_call.1} parent=1 // pred_fallthru
      _
    // Predicated region
    $region74: #{tpu_custom_call.1} parent=1 // pred_check
      _
    $region75: #{tpu_custom_call.1} parent=1 // pred_check_branch
      %129 = sbr.rel (0) target = $region77
    $region76: #{tpu_custom_call.1} parent=1 // pred_region
      %s131 = ssub.s32 2048, 2048
      %132 = vsyncadd [#allocation12], %s131
      %s133 = sshll.u32 [#allocation13], 4
      %s134 = int_to_ptr.vmem [resolvable:$true] %s133
      %139 = dma.hbm_to_vmem [thread:$0]  %s18, 2048, %s134, [#allocation12], 128, 128, 8
    $region77: #{tpu_custom_call.1} parent=1 // pred_fallthru
      _
    // Predicated region
    $region78: #{tpu_custom_call.1} parent=1 // pred_check
      _
    $region79: #{tpu_custom_call.1} parent=1 // pred_check_branch
      %141 = sbr.rel (0) target = $region81
    $region80: #{tpu_custom_call.1} parent=1 // pred_region
      _
    $region81: #{tpu_custom_call.1} parent=1 // pred_fallthru
      _
    // Predicated region
    $region82: #{tpu_custom_call.1} parent=1 // pred_check
      _
    $region83: #{tpu_custom_call.1} parent=1 // pred_check_branch
      %143 = sbr.rel (0) target = $region85
    $region84: #{tpu_custom_call.1} parent=1 // pred_region
      _
    $region85: #{tpu_custom_call.1} parent=1 // pred_fallthru
      _
    // Predicated region
    $region86: #{tpu_custom_call.1} parent=1 // pred_check
      _
    $region87: #{tpu_custom_call.1} parent=1 // pred_check_branch
      %145 = sbr.rel (0) target = $region89
    $region88: #{tpu_custom_call.1} parent=1 // pred_region
      _
    $region89: #{tpu_custom_call.1} parent=1 // pred_fallthru
      _
    // Predicated region
    $region90: #{tpu_custom_call.1} parent=1 // pred_check
      _
    $region91: #{tpu_custom_call.1} parent=1 // pred_check_branch
      %147 = sbr.rel (0) target = $region93
    $region92: #{tpu_custom_call.1} parent=1 // pred_region
      _
    $region93: #{tpu_custom_call.1} parent=1 // pred_fallthru
      _
    // Predicated region
    $region94: #{tpu_custom_call.1} parent=1 // pred_check
      _
    $region95: #{tpu_custom_call.1} parent=1 // pred_check_branch
      %149 = sbr.rel (0) target = $region97
    $region96: #{tpu_custom_call.1} parent=1 // pred_region
      _
    $region97: #{tpu_custom_call.1} parent=1 // pred_fallthru
      _
    // Predicated region
    $region98: #{tpu_custom_call.1} parent=1 // pred_check
      _
    $region99: #{tpu_custom_call.1} parent=1 // pred_check_branch
      %151 = sbr.rel (0) target = $region101
    $region100: #{tpu_custom_call.1} parent=1 // pred_region
      %152 = dma.done [#allocation3], 16
    $region101: #{tpu_custom_call.1} parent=1 // pred_fallthru
      _
    // Predicated region
    $region102: #{tpu_custom_call.1} parent=1 // pred_check
      _
    $region103: #{tpu_custom_call.1} parent=1 // pred_check_branch
      %154 = sbr.rel (0) target = $region105
    $region104: #{tpu_custom_call.1} parent=1 // pred_region
      %155 = dma.done [#allocation6], 2048
    $region105: #{tpu_custom_call.1} parent=1 // pred_fallthru
      _
    // Predicated region
    $region106: #{tpu_custom_call.1} parent=1 // pred_check
      _
    $region107: #{tpu_custom_call.1} parent=1 // pred_check_branch
      %157 = sbr.rel (0) target = $region109
    $region108: #{tpu_custom_call.1} parent=1 // pred_region
      %158 = dma.done [#allocation6], 2048
    $region109: #{tpu_custom_call.1} parent=1 // pred_fallthru
      _
    // Predicated region
    $region110: #{tpu_custom_call.1} parent=1 // pred_check
      _
    $region111: #{tpu_custom_call.1} parent=1 // pred_check_branch
      %160 = sbr.rel (0) target = $region113
    $region112: #{tpu_custom_call.1} parent=1 // pred_region
      %161 = dma.done [#allocation9], 2048
    $region113: #{tpu_custom_call.1} parent=1 // pred_fallthru
      _
    // Predicated region
    $region114: #{tpu_custom_call.1} parent=1 // pred_check
      _
    $region115: #{tpu_custom_call.1} parent=1 // pred_check_branch
      %163 = sbr.rel (0) target = $region117
    $region116: #{tpu_custom_call.1} parent=1 // pred_region
      %164 = dma.done [#allocation9], 2048
    $region117: #{tpu_custom_call.1} parent=1 // pred_fallthru
      _
    // Predicated region
    $region118: #{tpu_custom_call.1} parent=1 // pred_check
      _
    $region119: #{tpu_custom_call.1} parent=1 // pred_check_branch
      %166 = sbr.rel (0) target = $region121
    $region120: #{tpu_custom_call.1} parent=1 // pred_region
      %167 = dma.done [#allocation12], 2048
    $region121: #{tpu_custom_call.1} parent=1 // pred_fallthru
      _
    // Predicated region
    $region122: #{tpu_custom_call.1} parent=1 // pred_check
      _
    $region123: #{tpu_custom_call.1} parent=1 // pred_check_branch
      %169 = sbr.rel (0) target = $region125
    $region124: #{tpu_custom_call.1} parent=1 // pred_region
      %170 = dma.done [#allocation12], 2048
    $region125: #{tpu_custom_call.1} parent=1 // pred_fallthru
      _
    %v172 = vlaneseq
    %v173 = vshrl.u32 %v172, 7
    %v174 = vadd.s32 %v173, 8
    %v175 = vadd.s32 %v173, 16
    %v176 = vadd.s32 %v173, 24
    %v177 = vadd.s32 %v173, 32
    %v178 = vadd.s32 %v173, 40
    %v179 = vadd.s32 %v173, 48
    %v180 = vadd.s32 %v173, 56
    %v181 = vadd.s32 %v173, 64
    %v182 = vadd.s32 %v173, 72
    %v183 = vadd.s32 %v173, 80
    %v184 = vadd.s32 %v173, 88
    %v185 = vadd.s32 %v173, 96
    %v186 = vadd.s32 %v173, 104
    %v187 = vadd.s32 %v173, 112
    %v188 = vadd.s32 %v173, 120
    %v189 = vadd.s32 %v173, 128
    %v190 = vadd.s32 %v173, 136
    %v191 = vadd.s32 %v173, 144
    %v192 = vadd.s32 %v173, 152
    %v193 = vadd.s32 %v173, 160
    %v194 = vadd.s32 %v173, 168
    %v195 = vadd.s32 %v173, 176
    %v196 = vadd.s32 %v173, 184
    %v197 = vadd.s32 %v173, 192
    %v198 = vadd.s32 %v173, 200
    %v199 = vadd.s32 %v173, 208
    %v200 = vadd.s32 %v173, 216
    %v201 = vadd.s32 %v173, 224
    %v202 = vadd.s32 %v173, 232
    %v203 = vadd.s32 %v173, 240
    %v204 = vadd.s32 %v173, 248
    %vm205 = vcmp.lt.s32.totalorder %v173, 256
    %vm206 = vcmp.lt.s32.totalorder %v174, 256
    %vm207 = vcmp.lt.s32.totalorder %v175, 256
    %vm208 = vcmp.lt.s32.totalorder %v176, 256
    %vm209 = vcmp.lt.s32.totalorder %v177, 256
    %vm210 = vcmp.lt.s32.totalorder %v178, 256
    %vm211 = vcmp.lt.s32.totalorder %v179, 256
    %vm212 = vcmp.lt.s32.totalorder %v180, 256
    %vm213 = vcmp.lt.s32.totalorder %v181, 256
    %vm214 = vcmp.lt.s32.totalorder %v182, 256
    %vm215 = vcmp.lt.s32.totalorder %v183, 256
    %vm216 = vcmp.lt.s32.totalorder %v184, 256
    %vm217 = vcmp.lt.s32.totalorder %v185, 256
    %vm218 = vcmp.lt.s32.totalorder %v186, 256
    %vm219 = vcmp.lt.s32.totalorder %v187, 256
    %vm220 = vcmp.lt.s32.totalorder %v188, 256
    %vm221 = vcmp.lt.s32.totalorder %v189, 256
    %vm222 = vcmp.lt.s32.totalorder %v190, 256
    %vm223 = vcmp.lt.s32.totalorder %v191, 256
    %vm224 = vcmp.lt.s32.totalorder %v192, 256
    %vm225 = vcmp.lt.s32.totalorder %v193, 256
    %vm226 = vcmp.lt.s32.totalorder %v194, 256
    %vm227 = vcmp.lt.s32.totalorder %v195, 256
    %vm228 = vcmp.lt.s32.totalorder %v196, 256
    %vm229 = vcmp.lt.s32.totalorder %v197, 256
    %vm230 = vcmp.lt.s32.totalorder %v198, 256
    %vm231 = vcmp.lt.s32.totalorder %v199, 256
    %vm232 = vcmp.lt.s32.totalorder %v200, 256
    %vm233 = vcmp.lt.s32.totalorder %v201, 256
    %vm234 = vcmp.lt.s32.totalorder %v202, 256
    %vm235 = vcmp.lt.s32.totalorder %v203, 256
    %vm236 = vcmp.lt.s32.totalorder %v204, 256
    %v237 = vsel %vm205, 1, 0
    %v238 = vsel %vm206, 1, 0
    %v239 = vsel %vm207, 1, 0
    %v240 = vsel %vm208, 1, 0
    %v241 = vsel %vm209, 1, 0
    %v242 = vsel %vm210, 1, 0
    %v243 = vsel %vm211, 1, 0
    %v244 = vsel %vm212, 1, 0
    %v245 = vsel %vm213, 1, 0
    %v246 = vsel %vm214, 1, 0
    %v247 = vsel %vm215, 1, 0
    %v248 = vsel %vm216, 1, 0
    %v249 = vsel %vm217, 1, 0
    %v250 = vsel %vm218, 1, 0
    %v251 = vsel %vm219, 1, 0
    %v252 = vsel %vm220, 1, 0
    %v253 = vsel %vm221, 1, 0
    %v254 = vsel %vm222, 1, 0
    %v255 = vsel %vm223, 1, 0
    %v256 = vsel %vm224, 1, 0
    %v257 = vsel %vm225, 1, 0
    %v258 = vsel %vm226, 1, 0
    %v259 = vsel %vm227, 1, 0
    %v260 = vsel %vm228, 1, 0
    %v261 = vsel %vm229, 1, 0
    %v262 = vsel %vm230, 1, 0
    %v263 = vsel %vm231, 1, 0
    %v264 = vsel %vm232, 1, 0
    %v265 = vsel %vm233, 1, 0
    %v266 = vsel %vm234, 1, 0
    %v267 = vsel %vm235, 1, 0
    %v268 = vsel %vm236, 1, 0
    %v269 = vcvt.s32.f32 %v237
    %v270 = vcvt.s32.f32 %v238
    %v271 = vcvt.s32.f32 %v239
    %v272 = vcvt.s32.f32 %v240
    %v273 = vcvt.s32.f32 %v241
    %v274 = vcvt.s32.f32 %v242
    %v275 = vcvt.s32.f32 %v243
    %v276 = vcvt.s32.f32 %v244
    %v277 = vcvt.s32.f32 %v245
    %v278 = vcvt.s32.f32 %v246
    %v279 = vcvt.s32.f32 %v247
    %v280 = vcvt.s32.f32 %v248
    %v281 = vcvt.s32.f32 %v249
    %v282 = vcvt.s32.f32 %v250
    %v283 = vcvt.s32.f32 %v251
    %v284 = vcvt.s32.f32 %v252
    %v285 = vcvt.s32.f32 %v253
    %v286 = vcvt.s32.f32 %v254
    %v287 = vcvt.s32.f32 %v255
    %v288 = vcvt.s32.f32 %v256
    %v289 = vcvt.s32.f32 %v257
    %v290 = vcvt.s32.f32 %v258
    %v291 = vcvt.s32.f32 %v259
    %v292 = vcvt.s32.f32 %v260
    %v293 = vcvt.s32.f32 %v261
    %v294 = vcvt.s32.f32 %v262
    %v295 = vcvt.s32.f32 %v263
    %v296 = vcvt.s32.f32 %v264
    %v297 = vcvt.s32.f32 %v265
    %v298 = vcvt.s32.f32 %v266
    %v299 = vcvt.s32.f32 %v267
    %v300 = vcvt.s32.f32 %v268
    %v301 = vld [vmem:[%s3] sm:$0xf]
    %v302 = vld [vmem:[%s3 + $0x4] sm:$0xf]
    %v303 = vld [vmem:[%s3 + $0x8] sm:$0xf]
    %v304 = vld [vmem:[%s3 + $0xc] sm:$0xf]
    %v305 = vld [vmem:[%s3 + $0x10] sm:$0xf]
    %v306 = vld [vmem:[%s3 + $0x14] sm:$0xf]
    %v307 = vld [vmem:[%s3 + $0x18] sm:$0xf]
    %v308 = vld [vmem:[%s3 + $0x1c] sm:$0xf]
    %v309 = vld [vmem:[%s3 + $0x20] sm:$0xf]
    %v310 = vld [vmem:[%s3 + $0x24] sm:$0xf]
    %v311 = vld [vmem:[%s3 + $0x28] sm:$0xf]
    %v312 = vld [vmem:[%s3 + $0x2c] sm:$0xf]
    %v313 = vld [vmem:[%s3 + $0x30] sm:$0xf]
    %v314 = vld [vmem:[%s3 + $0x34] sm:$0xf]
    %v315 = vld [vmem:[%s3 + $0x38] sm:$0xf]
    %v316 = vld [vmem:[%s3 + $0x3c] sm:$0xf]
    %v317 = vld [vmem:[%s3 + $0x40] sm:$0xf]
    %v318 = vld [vmem:[%s3 + $0x44] sm:$0xf]
    %v319 = vld [vmem:[%s3 + $0x48] sm:$0xf]
    %v320 = vld [vmem:[%s3 + $0x4c] sm:$0xf]
    %v321 = vld [vmem:[%s3 + $0x50] sm:$0xf]
    %v322 = vld [vmem:[%s3 + $0x54] sm:$0xf]
    %v323 = vld [vmem:[%s3 + $0x58] sm:$0xf]
    %v324 = vld [vmem:[%s3 + $0x5c] sm:$0xf]
    %v325 = vld [vmem:[%s3 + $0x60] sm:$0xf]
    %v326 = vld [vmem:[%s3 + $0x64] sm:$0xf]
    %v327 = vld [vmem:[%s3 + $0x68] sm:$0xf]
    %v328 = vld [vmem:[%s3 + $0x6c] sm:$0xf]
    %v329 = vld [vmem:[%s3 + $0x70] sm:$0xf]
    %v330 = vld [vmem:[%s3 + $0x74] sm:$0xf]
    %v331 = vld [vmem:[%s3 + $0x78] sm:$0xf]
    %v332 = vld [vmem:[%s3 + $0x7c] sm:$0xf]
    %v333 = vunpack.c.l.bf16 %v301
    %v334 = vunpack.c.l.bf16 %v302
    %v335 = vunpack.c.l.bf16 %v303
    %v336 = vunpack.c.l.bf16 %v304
    %v337 = vunpack.c.l.bf16 %v305
    %v338 = vunpack.c.l.bf16 %v306
    %v339 = vunpack.c.l.bf16 %v307
    %v340 = vunpack.c.l.bf16 %v308
    %v341 = vunpack.c.l.bf16 %v309
    %v342 = vunpack.c.l.bf16 %v310
    %v343 = vunpack.c.l.bf16 %v311
    %v344 = vunpack.c.l.bf16 %v312
    %v345 = vunpack.c.l.bf16 %v313
    %v346 = vunpack.c.l.bf16 %v314
    %v347 = vunpack.c.l.bf16 %v315
    %v348 = vunpack.c.l.bf16 %v316
    %v349 = vunpack.c.l.bf16 %v317
    %v350 = vunpack.c.l.bf16 %v318
    %v351 = vunpack.c.l.bf16 %v319
    %v352 = vunpack.c.l.bf16 %v320
    %v353 = vunpack.c.l.bf16 %v321
    %v354 = vunpack.c.l.bf16 %v322
    %v355 = vunpack.c.l.bf16 %v323
    %v356 = vunpack.c.l.bf16 %v324
    %v357 = vunpack.c.l.bf16 %v325
    %v358 = vunpack.c.l.bf16 %v326
    %v359 = vunpack.c.l.bf16 %v327
    %v360 = vunpack.c.l.bf16 %v328
    %v361 = vunpack.c.l.bf16 %v329
    %v362 = vunpack.c.l.bf16 %v330
    %v363 = vunpack.c.l.bf16 %v331
    %v364 = vunpack.c.l.bf16 %v332
    %v365 = vmul.f32 %v333, -0.6
    %v366 = vmul.f32 %v334, -0.6
    %v367 = vmul.f32 %v335, -0.6
    %v368 = vmul.f32 %v336, -0.6
    %v369 = vmul.f32 %v337, -0.6
    %v370 = vmul.f32 %v338, -0.6
    %v371 = vmul.f32 %v339, -0.6
    %v372 = vmul.f32 %v340, -0.6
    %v373 = vmul.f32 %v341, -0.6
    %v374 = vmul.f32 %v342, -0.6
    %v375 = vmul.f32 %v343, -0.6
    %v376 = vmul.f32 %v344, -0.6
    %v377 = vmul.f32 %v345, -0.6
    %v378 = vmul.f32 %v346, -0.6
    %v379 = vmul.f32 %v347, -0.6
    %v380 = vmul.f32 %v348, -0.6
    %v381 = vmul.f32 %v349, -0.6
    %v382 = vmul.f32 %v350, -0.6
    %v383 = vmul.f32 %v351, -0.6
    %v384 = vmul.f32 %v352, -0.6
    %v385 = vmul.f32 %v353, -0.6
    %v386 = vmul.f32 %v354, -0.6
    %v387 = vmul.f32 %v355, -0.6
    %v388 = vmul.f32 %v356, -0.6
    %v389 = vmul.f32 %v357, -0.6
    %v390 = vmul.f32 %v358, -0.6
    %v391 = vmul.f32 %v359, -0.6
    %v392 = vmul.f32 %v360, -0.6
    %v393 = vmul.f32 %v361, -0.6
    %v394 = vmul.f32 %v362, -0.6
    %v395 = vmul.f32 %v363, -0.6
    %v396 = vmul.f32 %v364, -0.6
    %v397 = vsub.f32 0.2, %v365
    %v398 = vsub.f32 0.2, %v366
    %v399 = vsub.f32 0.2, %v367
    %v400 = vsub.f32 0.2, %v368
    %v401 = vsub.f32 0.2, %v369
    %v402 = vsub.f32 0.2, %v370
    %v403 = vsub.f32 0.2, %v371
    %v404 = vsub.f32 0.2, %v372
    %v405 = vsub.f32 0.2, %v373
    %v406 = vsub.f32 0.2, %v374
    %v407 = vsub.f32 0.2, %v375
    %v408 = vsub.f32 0.2, %v376
    %v409 = vsub.f32 0.2, %v377
    %v410 = vsub.f32 0.2, %v378
    %v411 = vsub.f32 0.2, %v379
    %v412 = vsub.f32 0.2, %v380
    %v413 = vsub.f32 0.2, %v381
    %v414 = vsub.f32 0.2, %v382
    %v415 = vsub.f32 0.2, %v383
    %v416 = vsub.f32 0.2, %v384
    %v417 = vsub.f32 0.2, %v385
    %v418 = vsub.f32 0.2, %v386
    %v419 = vsub.f32 0.2, %v387
    %v420 = vsub.f32 0.2, %v388
    %v421 = vsub.f32 0.2, %v389
    %v422 = vsub.f32 0.2, %v390
    %v423 = vsub.f32 0.2, %v391
    %v424 = vsub.f32 0.2, %v392
    %v425 = vsub.f32 0.2, %v393
    %v426 = vsub.f32 0.2, %v394
    %v427 = vsub.f32 0.2, %v395
    %v428 = vsub.f32 0.2, %v396
    %v429 = vadd.f32 %v365, 0.8
    %v430 = vadd.f32 %v366, 0.8
    %v431 = vadd.f32 %v367, 0.8
    %v432 = vadd.f32 %v368, 0.8
    %v433 = vadd.f32 %v369, 0.8
    %v434 = vadd.f32 %v370, 0.8
    %v435 = vadd.f32 %v371, 0.8
    %v436 = vadd.f32 %v372, 0.8
    %v437 = vadd.f32 %v373, 0.8
    %v438 = vadd.f32 %v374, 0.8
    %v439 = vadd.f32 %v375, 0.8
    %v440 = vadd.f32 %v376, 0.8
    %v441 = vadd.f32 %v377, 0.8
    %v442 = vadd.f32 %v378, 0.8
    %v443 = vadd.f32 %v379, 0.8
    %v444 = vadd.f32 %v380, 0.8
    %v445 = vadd.f32 %v381, 0.8
    %v446 = vadd.f32 %v382, 0.8
    %v447 = vadd.f32 %v383, 0.8
    %v448 = vadd.f32 %v384, 0.8
    %v449 = vadd.f32 %v385, 0.8
    %v450 = vadd.f32 %v386, 0.8
    %v451 = vadd.f32 %v387, 0.8
    %v452 = vadd.f32 %v388, 0.8
    %v453 = vadd.f32 %v389, 0.8
    %v454 = vadd.f32 %v390, 0.8
    %v455 = vadd.f32 %v391, 0.8
    %v456 = vadd.f32 %v392, 0.8
    %v457 = vadd.f32 %v393, 0.8
    %v458 = vadd.f32 %v394, 0.8
    %v459 = vadd.f32 %v395, 0.8
    %v460 = vadd.f32 %v396, 0.8
    %v461 = vld [vmem:[%s0] sm:$0xff]
    %v462 = vld [vmem:[%s0 + $0x8] sm:$0xff]
    %v463 = vld [vmem:[%s0 + $0x10] sm:$0xff]
    %v464 = vld [vmem:[%s0 + $0x18] sm:$0xff]
    %v465 = vld [vmem:[%s0 + $0x20] sm:$0xff]
    %v466 = vld [vmem:[%s0 + $0x28] sm:$0xff]
    %v467 = vld [vmem:[%s0 + $0x30] sm:$0xff]
    %v468 = vld [vmem:[%s0 + $0x38] sm:$0xff]
    %v469 = vld [vmem:[%s0 + $0x40] sm:$0xff]
    %v470 = vld [vmem:[%s0 + $0x48] sm:$0xff]
    %v471 = vld [vmem:[%s0 + $0x50] sm:$0xff]
    %v472 = vld [vmem:[%s0 + $0x58] sm:$0xff]
    %v473 = vld [vmem:[%s0 + $0x60] sm:$0xff]
    %v474 = vld [vmem:[%s0 + $0x68] sm:$0xff]
    %v475 = vld [vmem:[%s0 + $0x70] sm:$0xff]
    %v476 = vld [vmem:[%s0 + $0x78] sm:$0xff]
    %v477 = vld [vmem:[%s0 + $0x80] sm:$0xff]
    %v478 = vld [vmem:[%s0 + $0x88] sm:$0xff]
    %v479 = vld [vmem:[%s0 + $0x90] sm:$0xff]
    %v480 = vld [vmem:[%s0 + $0x98] sm:$0xff]
    %v481 = vld [vmem:[%s0 + $0xa0] sm:$0xff]
    %v482 = vld [vmem:[%s0 + $0xa8] sm:$0xff]
    %v483 = vld [vmem:[%s0 + $0xb0] sm:$0xff]
    %v484 = vld [vmem:[%s0 + $0xb8] sm:$0xff]
    %v485 = vld [vmem:[%s0 + $0xc0] sm:$0xff]
    %v486 = vld [vmem:[%s0 + $0xc8] sm:$0xff]
    %v487 = vld [vmem:[%s0 + $0xd0] sm:$0xff]
    %v488 = vld [vmem:[%s0 + $0xd8] sm:$0xff]
    %v489 = vld [vmem:[%s0 + $0xe0] sm:$0xff]
    %v490 = vld [vmem:[%s0 + $0xe8] sm:$0xff]
    %v491 = vld [vmem:[%s0 + $0xf0] sm:$0xff]
    %v492 = vld [vmem:[%s0 + $0xf8] sm:$0xff]
    %v493 = vld [vmem:[%s4] sm:$0x1]
    %v494 = vld [vmem:[#allocation2] sm:$0x1]
    %v495 = vmul.f32 %v461, %v269
    %v496 = vmul.f32 %v462, %v270
    %v497 = vmul.f32 %v463, %v271
    %v498 = vmul.f32 %v464, %v272
    %v499 = vmul.f32 %v465, %v273
    %v500 = vmul.f32 %v466, %v274
    %v501 = vmul.f32 %v467, %v275
    %v502 = vmul.f32 %v468, %v276
    %v503 = vmul.f32 %v469, %v277
    %v504 = vmul.f32 %v470, %v278
    %v505 = vmul.f32 %v471, %v279
    %v506 = vmul.f32 %v472, %v280
    %v507 = vmul.f32 %v473, %v281
    %v508 = vmul.f32 %v474, %v282
    %v509 = vmul.f32 %v475, %v283
    %v510 = vmul.f32 %v476, %v284
    %v511 = vmul.f32 %v477, %v285
    %v512 = vmul.f32 %v478, %v286
    %v513 = vmul.f32 %v479, %v287
    %v514 = vmul.f32 %v480, %v288
    %v515 = vmul.f32 %v481, %v289
    %v516 = vmul.f32 %v482, %v290
    %v517 = vmul.f32 %v483, %v291
    %v518 = vmul.f32 %v484, %v292
    %v519 = vmul.f32 %v485, %v293
    %v520 = vmul.f32 %v486, %v294
    %v521 = vmul.f32 %v487, %v295
    %v522 = vmul.f32 %v488, %v296
    %v523 = vmul.f32 %v489, %v297
    %v524 = vmul.f32 %v490, %v298
    %v525 = vmul.f32 %v491, %v299
    %v526 = vmul.f32 %v492, %v300
    %v527 = vadd.f32 %v495, %v496
    %v528 = vadd.f32 %v527, %v497
    %v529 = vadd.f32 %v528, %v498
    %v530 = vadd.f32 %v529, %v499
    %v531 = vadd.f32 %v530, %v500
    %v532 = vadd.f32 %v531, %v501
    %v533 = vadd.f32 %v532, %v502
    %v534 = vadd.f32 %v533, %v503
    %v535 = vadd.f32 %v534, %v504
    %v536 = vadd.f32 %v535, %v505
    %v537 = vadd.f32 %v536, %v506
    %v538 = vadd.f32 %v537, %v507
    %v539 = vadd.f32 %v538, %v508
    %v540 = vadd.f32 %v539, %v509
    %v541 = vadd.f32 %v540, %v510
    %v542 = vadd.f32 %v541, %v511
    %v543 = vadd.f32 %v542, %v512
    %v544 = vadd.f32 %v543, %v513
    %v545 = vadd.f32 %v544, %v514
    %v546 = vadd.f32 %v545, %v515
    %v547 = vadd.f32 %v546, %v516
    %v548 = vadd.f32 %v547, %v517
    %v549 = vadd.f32 %v548, %v518
    %v550 = vadd.f32 %v549, %v519
    %v551 = vadd.f32 %v550, %v520
    %v552 = vadd.f32 %v551, %v521
    %v553 = vadd.f32 %v552, %v522
    %v554 = vadd.f32 %v553, %v523
    %v555 = vadd.f32 %v554, %v524
    %v556 = vadd.f32 %v555, %v525
    %v557 = vadd.f32 %v556, %v526
    %v558 = vrot.slane %v557, 4
    %v559 = vadd.f32 %v557, %v558
    %v560 = vrot.slane %v559, 2
    %v561 = vadd.f32 %v559, %v560
    %v562 = vrot.slane %v561, 1
    %v563 = vadd.f32 %v561, %v562
    %v564 = vmul.f32 %v563, 0.00390625
    %v565 = vsub.f32 %v461, %v564
    %v566 = vsub.f32 %v462, %v564
    %v567 = vsub.f32 %v463, %v564
    %v568 = vsub.f32 %v464, %v564
    %v569 = vsub.f32 %v465, %v564
    %v570 = vsub.f32 %v466, %v564
    %v571 = vsub.f32 %v467, %v564
    %v572 = vsub.f32 %v468, %v564
    %v573 = vsub.f32 %v469, %v564
    %v574 = vsub.f32 %v470, %v564
    %v575 = vsub.f32 %v471, %v564
    %v576 = vsub.f32 %v472, %v564
    %v577 = vsub.f32 %v473, %v564
    %v578 = vsub.f32 %v474, %v564
    %v579 = vsub.f32 %v475, %v564
    %v580 = vsub.f32 %v476, %v564
    %v581 = vsub.f32 %v477, %v564
    %v582 = vsub.f32 %v478, %v564
    %v583 = vsub.f32 %v479, %v564
    %v584 = vsub.f32 %v480, %v564
    %v585 = vsub.f32 %v481, %v564
    %v586 = vsub.f32 %v482, %v564
    %v587 = vsub.f32 %v483, %v564
    %v588 = vsub.f32 %v484, %v564
    %v589 = vsub.f32 %v485, %v564
    %v590 = vsub.f32 %v486, %v564
    %v591 = vsub.f32 %v487, %v564
    %v592 = vsub.f32 %v488, %v564
    %v593 = vsub.f32 %v489, %v564
    %v594 = vsub.f32 %v490, %v564
    %v595 = vsub.f32 %v491, %v564
    %v596 = vsub.f32 %v492, %v564
    %v597 = vmul.f32 %v269, %v565
    %v598 = vmul.f32 %v270, %v566
    %v599 = vmul.f32 %v271, %v567
    %v600 = vmul.f32 %v272, %v568
    %v601 = vmul.f32 %v273, %v569
    %v602 = vmul.f32 %v274, %v570
    %v603 = vmul.f32 %v275, %v571
    %v604 = vmul.f32 %v276, %v572
    %v605 = vmul.f32 %v277, %v573
    %v606 = vmul.f32 %v278, %v574
    %v607 = vmul.f32 %v279, %v575
    %v608 = vmul.f32 %v280, %v576
    %v609 = vmul.f32 %v281, %v577
    %v610 = vmul.f32 %v282, %v578
    %v611 = vmul.f32 %v283, %v579
    %v612 = vmul.f32 %v284, %v580
    %v613 = vmul.f32 %v285, %v581
    %v614 = vmul.f32 %v286, %v582
    %v615 = vmul.f32 %v287, %v583
    %v616 = vmul.f32 %v288, %v584
    %v617 = vmul.f32 %v289, %v585
    %v618 = vmul.f32 %v290, %v586
    %v619 = vmul.f32 %v291, %v587
    %v620 = vmul.f32 %v292, %v588
    %v621 = vmul.f32 %v293, %v589
    %v622 = vmul.f32 %v294, %v590
    %v623 = vmul.f32 %v295, %v591
    %v624 = vmul.f32 %v296, %v592
    %v625 = vmul.f32 %v297, %v593
    %v626 = vmul.f32 %v298, %v594
    %v627 = vmul.f32 %v299, %v595
    %v628 = vmul.f32 %v300, %v596
    %v629 = vmul.f32 %v597, %v565
    %v630 = vmul.f32 %v598, %v566
    %v631 = vmul.f32 %v599, %v567
    %v632 = vmul.f32 %v600, %v568
    %v633 = vmul.f32 %v601, %v569
    %v634 = vmul.f32 %v602, %v570
    %v635 = vmul.f32 %v603, %v571
    %v636 = vmul.f32 %v604, %v572
    %v637 = vmul.f32 %v605, %v573
    %v638 = vmul.f32 %v606, %v574
    %v639 = vmul.f32 %v607, %v575
    %v640 = vmul.f32 %v608, %v576
    %v641 = vmul.f32 %v609, %v577
    %v642 = vmul.f32 %v610, %v578
    %v643 = vmul.f32 %v611, %v579
    %v644 = vmul.f32 %v612, %v580
    %v645 = vmul.f32 %v613, %v581
    %v646 = vmul.f32 %v614, %v582
    %v647 = vmul.f32 %v615, %v583
    %v648 = vmul.f32 %v616, %v584
    %v649 = vmul.f32 %v617, %v585
    %v650 = vmul.f32 %v618, %v586
    %v651 = vmul.f32 %v619, %v587
    %v652 = vmul.f32 %v620, %v588
    %v653 = vmul.f32 %v621, %v589
    %v654 = vmul.f32 %v622, %v590
    %v655 = vmul.f32 %v623, %v591
    %v656 = vmul.f32 %v624, %v592
    %v657 = vmul.f32 %v625, %v593
    %v658 = vmul.f32 %v626, %v594
    %v659 = vmul.f32 %v627, %v595
    %v660 = vmul.f32 %v628, %v596
    %v661 = vadd.f32 %v629, %v630
    %v662 = vadd.f32 %v661, %v631
    %v663 = vadd.f32 %v662, %v632
    %v664 = vadd.f32 %v663, %v633
    %v665 = vadd.f32 %v664, %v634
    %v666 = vadd.f32 %v665, %v635
    %v667 = vadd.f32 %v666, %v636
    %v668 = vadd.f32 %v667, %v637
    %v669 = vadd.f32 %v668, %v638
    %v670 = vadd.f32 %v669, %v639
    %v671 = vadd.f32 %v670, %v640
    %v672 = vadd.f32 %v671, %v641
    %v673 = vadd.f32 %v672, %v642
    %v674 = vadd.f32 %v673, %v643
    %v675 = vadd.f32 %v674, %v644
    %v676 = vadd.f32 %v675, %v645
    %v677 = vadd.f32 %v676, %v646
    %v678 = vadd.f32 %v677, %v647
    %v679 = vadd.f32 %v678, %v648
    %v680 = vadd.f32 %v679, %v649
    %v681 = vadd.f32 %v680, %v650
    %v682 = vadd.f32 %v681, %v651
    %v683 = vadd.f32 %v682, %v652
    %v684 = vadd.f32 %v683, %v653
    %v685 = vadd.f32 %v684, %v654
    %v686 = vadd.f32 %v685, %v655
    %v687 = vadd.f32 %v686, %v656
    %v688 = vadd.f32 %v687, %v657
    %v689 = vadd.f32 %v688, %v658
    %v690 = vadd.f32 %v689, %v659
    %v691 = vadd.f32 %v690, %v660
    %v692 = vrot.slane %v691, 4
    %v693 = vadd.f32 %v691, %v692
    %v694 = vrot.slane %v693, 2
    %v695 = vadd.f32 %v693, %v694
    %v696 = vrot.slane %v695, 1
    %v697 = vadd.f32 %v695, %v696
    %v698 = vmul.f32 %v697, 0.00390625
    %v700 = vlaneseq
    %v701 = vshrl.u32 %v700, 7
    %v702 = vsub.s32 0, %v701
    %v703 = vrot.slane %v493, %v702
    %v705 = vmul.f32 %v703, %v565
    %v706 = vmul.f32 %v703, %v566
    %v707 = vmul.f32 %v703, %v567
    %v708 = vmul.f32 %v703, %v568
    %v709 = vmul.f32 %v703, %v569
    %v710 = vmul.f32 %v703, %v570
    %v711 = vmul.f32 %v703, %v571
    %v712 = vmul.f32 %v703, %v572
    %v713 = vmul.f32 %v703, %v573
    %v714 = vmul.f32 %v703, %v574
    %v715 = vmul.f32 %v703, %v575
    %v716 = vmul.f32 %v703, %v576
    %v717 = vmul.f32 %v703, %v577
    %v718 = vmul.f32 %v703, %v578
    %v719 = vmul.f32 %v703, %v579
    %v720 = vmul.f32 %v703, %v580
    %v721 = vmul.f32 %v703, %v581
    %v722 = vmul.f32 %v703, %v582
    %v723 = vmul.f32 %v703, %v583
    %v724 = vmul.f32 %v703, %v584
    %v725 = vmul.f32 %v703, %v585
    %v726 = vmul.f32 %v703, %v586
    %v727 = vmul.f32 %v703, %v587
    %v728 = vmul.f32 %v703, %v588
    %v729 = vmul.f32 %v703, %v589
    %v730 = vmul.f32 %v703, %v590
    %v731 = vmul.f32 %v703, %v591
    %v732 = vmul.f32 %v703, %v592
    %v733 = vmul.f32 %v703, %v593
    %v734 = vmul.f32 %v703, %v594
    %v735 = vmul.f32 %v703, %v595
    %v736 = vmul.f32 %v703, %v596
    %v737 = vadd.f32 %v698, 1e-05
    %v738 = vrsqrt.pop %v737
    %v739 = vmul.f32 %v705, %v738
    %v740 = vmul.f32 %v706, %v738
    %v741 = vmul.f32 %v707, %v738
    %v742 = vmul.f32 %v708, %v738
    %v743 = vmul.f32 %v709, %v738
    %v744 = vmul.f32 %v710, %v738
    %v745 = vmul.f32 %v711, %v738
    %v746 = vmul.f32 %v712, %v738
    %v747 = vmul.f32 %v713, %v738
    %v748 = vmul.f32 %v714, %v738
    %v749 = vmul.f32 %v715, %v738
    %v750 = vmul.f32 %v716, %v738
    %v751 = vmul.f32 %v717, %v738
    %v752 = vmul.f32 %v718, %v738
    %v753 = vmul.f32 %v719, %v738
    %v754 = vmul.f32 %v720, %v738
    %v755 = vmul.f32 %v721, %v738
    %v756 = vmul.f32 %v722, %v738
    %v757 = vmul.f32 %v723, %v738
    %v758 = vmul.f32 %v724, %v738
    %v759 = vmul.f32 %v725, %v738
    %v760 = vmul.f32 %v726, %v738
    %v761 = vmul.f32 %v727, %v738
    %v762 = vmul.f32 %v728, %v738
    %v763 = vmul.f32 %v729, %v738
    %v764 = vmul.f32 %v730, %v738
    %v765 = vmul.f32 %v731, %v738
    %v766 = vmul.f32 %v732, %v738
    %v767 = vmul.f32 %v733, %v738
    %v768 = vmul.f32 %v734, %v738
    %v769 = vmul.f32 %v735, %v738
    %v770 = vmul.f32 %v736, %v738
    %v772 = vlaneseq
    %v773 = vshrl.u32 %v772, 7
    %v774 = vsub.s32 0, %v773
    %v775 = vrot.slane %v494, %v774
    %v777 = vadd.f32 %v739, %v775
    %v778 = vadd.f32 %v740, %v775
    %v779 = vadd.f32 %v741, %v775
    %v780 = vadd.f32 %v742, %v775
    %v781 = vadd.f32 %v743, %v775
    %v782 = vadd.f32 %v744, %v775
    %v783 = vadd.f32 %v745, %v775
    %v784 = vadd.f32 %v746, %v775
    %v785 = vadd.f32 %v747, %v775
    %v786 = vadd.f32 %v748, %v775
    %v787 = vadd.f32 %v749, %v775
    %v788 = vadd.f32 %v750, %v775
    %v789 = vadd.f32 %v751, %v775
    %v790 = vadd.f32 %v752, %v775
    %v791 = vadd.f32 %v753, %v775
    %v792 = vadd.f32 %v754, %v775
    %v793 = vadd.f32 %v755, %v775
    %v794 = vadd.f32 %v756, %v775
    %v795 = vadd.f32 %v757, %v775
    %v796 = vadd.f32 %v758, %v775
    %v797 = vadd.f32 %v759, %v775
    %v798 = vadd.f32 %v760, %v775
    %v799 = vadd.f32 %v761, %v775
    %v800 = vadd.f32 %v762, %v775
    %v801 = vadd.f32 %v763, %v775
    %v802 = vadd.f32 %v764, %v775
    %v803 = vadd.f32 %v765, %v775
    %v804 = vadd.f32 %v766, %v775
    %v805 = vadd.f32 %v767, %v775
    %v806 = vadd.f32 %v768, %v775
    %v807 = vadd.f32 %v769, %v775
    %v808 = vadd.f32 %v770, %v775
    %v809 = vpack.c.bf16 %v778, %v777
    %v810 = vpack.c.bf16 %v780, %v779
    %v811 = vpack.c.bf16 %v782, %v781
    %v812 = vpack.c.bf16 %v784, %v783
    %v813 = vpack.c.bf16 %v786, %v785
    %v814 = vpack.c.bf16 %v788, %v787
    %v815 = vpack.c.bf16 %v790, %v789
    %v816 = vpack.c.bf16 %v792, %v791
    %v817 = vpack.c.bf16 %v794, %v793
    %v818 = vpack.c.bf16 %v796, %v795
    %v819 = vpack.c.bf16 %v798, %v797
    %v820 = vpack.c.bf16 %v800, %v799
    %v821 = vpack.c.bf16 %v802, %v801
    %v822 = vpack.c.bf16 %v804, %v803
    %v823 = vpack.c.bf16 %v806, %v805
    %v824 = vpack.c.bf16 %v808, %v807
    %v825 = vld [vmem:[%s1] sm:$0xff]
    %v826 = vld [vmem:[%s1 + $0x8] sm:$0xff]
    %v827 = vld [vmem:[%s1 + $0x10] sm:$0xff]
    %v828 = vld [vmem:[%s1 + $0x18] sm:$0xff]
    %v829 = vld [vmem:[%s1 + $0x20] sm:$0xff]
    %v830 = vld [vmem:[%s1 + $0x28] sm:$0xff]
    %v831 = vld [vmem:[%s1 + $0x30] sm:$0xff]
    %v832 = vld [vmem:[%s1 + $0x38] sm:$0xff]
    %v833 = vld [vmem:[%s1 + $0x40] sm:$0xff]
    %v834 = vld [vmem:[%s1 + $0x48] sm:$0xff]
    %v835 = vld [vmem:[%s1 + $0x50] sm:$0xff]
    %v836 = vld [vmem:[%s1 + $0x58] sm:$0xff]
    %v837 = vld [vmem:[%s1 + $0x60] sm:$0xff]
    %v838 = vld [vmem:[%s1 + $0x68] sm:$0xff]
    %v839 = vld [vmem:[%s1 + $0x70] sm:$0xff]
    %v840 = vld [vmem:[%s1 + $0x78] sm:$0xff]
    %v841 = vunpack.c.l.s8.bf16 %v825
    %v842 = vunpack.c.l.s8.bf16 %v826
    %v843 = vunpack.c.h.s8.bf16 %v825
    %v844 = vunpack.c.h.s8.bf16 %v826
    %v845 = vunpack.c.l.s8.bf16 %v827
    %v846 = vunpack.c.l.s8.bf16 %v828
    %v847 = vunpack.c.h.s8.bf16 %v827
    %v848 = vunpack.c.h.s8.bf16 %v828
    %v849 = vunpack.c.l.s8.bf16 %v829
    %v850 = vunpack.c.l.s8.bf16 %v830
    %v851 = vunpack.c.h.s8.bf16 %v829
    %v852 = vunpack.c.h.s8.bf16 %v830
    %v853 = vunpack.c.l.s8.bf16 %v831
    %v854 = vunpack.c.l.s8.bf16 %v832
    %v855 = vunpack.c.h.s8.bf16 %v831
    %v856 = vunpack.c.h.s8.bf16 %v832
    %v857 = vunpack.c.l.s8.bf16 %v833
    %v858 = vunpack.c.l.s8.bf16 %v834
    %v859 = vunpack.c.h.s8.bf16 %v833
    %v860 = vunpack.c.h.s8.bf16 %v834
    %v861 = vunpack.c.l.s8.bf16 %v835
    %v862 = vunpack.c.l.s8.bf16 %v836
    %v863 = vunpack.c.h.s8.bf16 %v835
    %v864 = vunpack.c.h.s8.bf16 %v836
    %v865 = vunpack.c.l.s8.bf16 %v837
    %v866 = vunpack.c.l.s8.bf16 %v838
    %v867 = vunpack.c.h.s8.bf16 %v837
    %v868 = vunpack.c.h.s8.bf16 %v838
    %v869 = vunpack.c.l.s8.bf16 %v839
    %v870 = vunpack.c.l.s8.bf16 %v840
    %v871 = vunpack.c.h.s8.bf16 %v839
    %v872 = vunpack.c.h.s8.bf16 %v840
    %v873 = vld [vmem:[%s2] sm:$0xff]
    %v874 = vld [vmem:[%s2 + $0x8] sm:$0xff]
    %v875 = vld [vmem:[%s2 + $0x10] sm:$0xff]
    %v876 = vld [vmem:[%s2 + $0x18] sm:$0xff]
    %v877 = vld [vmem:[%s2 + $0x20] sm:$0xff]
    %v878 = vld [vmem:[%s2 + $0x28] sm:$0xff]
    %v879 = vld [vmem:[%s2 + $0x30] sm:$0xff]
    %v880 = vld [vmem:[%s2 + $0x38] sm:$0xff]
    %v881 = vld [vmem:[%s2 + $0x40] sm:$0xff]
    %v882 = vld [vmem:[%s2 + $0x48] sm:$0xff]
    %v883 = vld [vmem:[%s2 + $0x50] sm:$0xff]
    %v884 = vld [vmem:[%s2 + $0x58] sm:$0xff]
    %v885 = vld [vmem:[%s2 + $0x60] sm:$0xff]
    %v886 = vld [vmem:[%s2 + $0x68] sm:$0xff]
    %v887 = vld [vmem:[%s2 + $0x70] sm:$0xff]
    %v888 = vld [vmem:[%s2 + $0x78] sm:$0xff]
    %v889 = vld [vmem:[%s2 + $0x80] sm:$0xff]
    %v890 = vld [vmem:[%s2 + $0x88] sm:$0xff]
    %v891 = vld [vmem:[%s2 + $0x90] sm:$0xff]
    %v892 = vld [vmem:[%s2 + $0x98] sm:$0xff]
    %v893 = vld [vmem:[%s2 + $0xa0] sm:$0xff]
    %v894 = vld [vmem:[%s2 + $0xa8] sm:$0xff]
    %v895 = vld [vmem:[%s2 + $0xb0] sm:$0xff]
    %v896 = vld [vmem:[%s2 + $0xb8] sm:$0xff]
    %v897 = vld [vmem:[%s2 + $0xc0] sm:$0xff]
    %v898 = vld [vmem:[%s2 + $0xc8] sm:$0xff]
    %v899 = vld [vmem:[%s2 + $0xd0] sm:$0xff]
    %v900 = vld [vmem:[%s2 + $0xd8] sm:$0xff]
    %v901 = vld [vmem:[%s2 + $0xe0] sm:$0xff]
    %v902 = vld [vmem:[%s2 + $0xe8] sm:$0xff]
    %v903 = vld [vmem:[%s2 + $0xf0] sm:$0xff]
    %v904 = vld [vmem:[%s2 + $0xf8] sm:$0xff]
    %v905 = vld [vmem:[#allocation5] sm:$0xff]
    %v906 = vld [vmem:[#allocation5 + $0x8] sm:$0xff]
    %v907 = vld [vmem:[#allocation5 + $0x10] sm:$0xff]
    %v908 = vld [vmem:[#allocation5 + $0x18] sm:$0xff]
    %v909 = vld [vmem:[#allocation5 + $0x20] sm:$0xff]
    %v910 = vld [vmem:[#allocation5 + $0x28] sm:$0xff]
    %v911 = vld [vmem:[#allocation5 + $0x30] sm:$0xff]
    %v912 = vld [vmem:[#allocation5 + $0x38] sm:$0xff]
    %v913 = vld [vmem:[#allocation5 + $0x40] sm:$0xff]
    %v914 = vld [vmem:[#allocation5 + $0x48] sm:$0xff]
    %v915 = vld [vmem:[#allocation5 + $0x50] sm:$0xff]
    %v916 = vld [vmem:[#allocation5 + $0x58] sm:$0xff]
    %v917 = vld [vmem:[#allocation5 + $0x60] sm:$0xff]
    %v918 = vld [vmem:[#allocation5 + $0x68] sm:$0xff]
    %v919 = vld [vmem:[#allocation5 + $0x70] sm:$0xff]
    %v920 = vld [vmem:[#allocation5 + $0x78] sm:$0xff]
    %v921 = vld [vmem:[%s7] sm:$0x3]
    %v923 = vlaneseq
    %v924 = vshrl.u32 %v923, 7
    %v925 = vsub.s32 0, %v924
    %v926 = vrot.slane %v921, %v925
    %v927 = vlaneseq
    %v928 = vshrl.u32 %v927, 7
    %v929 = vsub.s32 1, %v928
    %v930 = vrot.slane %v921, %v929
    %v949 = vunpack.c.l.b16 %v905
    %v950 = vunpack.c.h.b16 %v905
    %v951 = vunpack.c.l.b16 %v906
    %v952 = vunpack.c.h.b16 %v906
    %v953 = vunpack.c.l.b16 %v907
    %v954 = vunpack.c.h.b16 %v907
    %v955 = vunpack.c.l.b16 %v908
    %v956 = vunpack.c.h.b16 %v908
    %v957 = vunpack.c.l.b16 %v909
    %v958 = vunpack.c.h.b16 %v909
    %v959 = vunpack.c.l.b16 %v910
    %v960 = vunpack.c.h.b16 %v910
    %v961 = vunpack.c.l.b16 %v911
    %v962 = vunpack.c.h.b16 %v911
    %v963 = vunpack.c.l.b16 %v912
    %v964 = vunpack.c.h.b16 %v912
    %v965 = vunpack.c.l.b16 %v913
    %v966 = vunpack.c.h.b16 %v913
    %v967 = vunpack.c.l.b16 %v914
    %v968 = vunpack.c.h.b16 %v914
    %v969 = vunpack.c.l.b16 %v915
    %v970 = vunpack.c.h.b16 %v915
    %v971 = vunpack.c.l.b16 %v916
    %v972 = vunpack.c.h.b16 %v916
    %v973 = vunpack.c.l.b16 %v917
    %v974 = vunpack.c.h.b16 %v917
    %v975 = vunpack.c.l.b16 %v918
    %v976 = vunpack.c.h.b16 %v918
    %v977 = vunpack.c.l.b16 %v919
    %v978 = vunpack.c.h.b16 %v919
    %v979 = vunpack.c.l.b16 %v920
    %v980 = vunpack.c.h.b16 %v920
    %v981 = vpack.c.b16 %v951, %v949
    %v982 = vpack.c.b16 %v952, %v950
    %v983 = vpack.c.b16 %v955, %v953
    %v984 = vpack.c.b16 %v956, %v954
    %v985 = vpack.c.b16 %v959, %v957
    %v986 = vpack.c.b16 %v960, %v958
    %v987 = vpack.c.b16 %v963, %v961
    %v988 = vpack.c.b16 %v964, %v962
    %v989 = vpack.c.b16 %v967, %v965
    %v990 = vpack.c.b16 %v968, %v966
    %v991 = vpack.c.b16 %v971, %v969
    %v992 = vpack.c.b16 %v972, %v970
    %v993 = vpack.c.b16 %v975, %v973
    %v994 = vpack.c.b16 %v976, %v974
    %v995 = vpack.c.b16 %v979, %v977
    %v996 = vpack.c.b16 %v980, %v978
    %1013 = vmatprep.subr.bf16.mxu0 %v996
    %1014 = vmatpush1.bf16.msra.mxu0 %v995
    %1015 = vmatprep.subr.bf16.mxu0 %v994
    %1016 = vmatpush1.bf16.msra.mxu0 %v993
    %1017 = vmatprep.subr.bf16.mxu0 %v992
    %1018 = vmatpush1.bf16.msra.mxu0 %v991
    %1019 = vmatprep.subr.bf16.mxu0 %v990
    %1020 = vmatpush1.bf16.msra.mxu0 %v989
    %1021 = vmatprep.subr.bf16.mxu0 %v988
    %1022 = vmatpush1.bf16.msra.mxu0 %v987
    %1023 = vmatprep.subr.bf16.mxu0 %v986
    %1024 = vmatpush1.bf16.msra.mxu0 %v985
    %1025 = vmatprep.subr.bf16.mxu0 %v984
    %1026 = vmatpush1.bf16.msra.mxu0 %v983
    %1027 = vmatprep.subr.bf16.mxu0 %v982
    %1028 = vmatpush1.bf16.msra.mxu0 %v981
    %1029 = vmatprep.subr.bf16.mxu0 0
    %1030 = vmatpush2.bf16.msra.mxu0 0
    %1031 = vmatprep.subr.bf16.mxu0 0
    %1032 = vmatpush2.bf16.msra.mxu0 0
    %1033 = vmatprep.subr.bf16.mxu0 0
    %1034 = vmatpush2.bf16.msra.mxu0 0
    %1035 = vmatprep.subr.bf16.mxu0 0
    %1036 = vmatpush2.bf16.msra.mxu0 0
    %1037 = vmatprep.subr.bf16.mxu0 0
    %1038 = vmatpush2.bf16.msra.mxu0 0
    %1039 = vmatprep.subr.bf16.mxu0 0
    %1040 = vmatpush2.bf16.msra.mxu0 0
    %1041 = vmatprep.subr.bf16.mxu0 0
    %1042 = vmatpush2.bf16.msra.mxu0 0
    %1043 = vmatprep.subr.bf16.mxu0 0
    %1044 = vmatpush2.bf16.msra.mxu0 0
    %1045 = vmatprep.mubr.bf16.mxu0 0
    %1046 = vmatmul.mubr.bf16.gmra.mxu0 %v809
    %v1047 = vpop.f32.mrf.mxu0
    %v1048 = vadd.f32 %v926, %v1047
    %v1049 = vpop.f32.mrf.mxu0
    %v1050 = vadd.f32 %v930, %v1049
    %v1051 = vpop.f32.mrf.mxu0
    %v1052 = vadd.f32 %v926, %v1051
    %v1053 = vpop.f32.mrf.mxu0
    %v1054 = vadd.f32 %v930, %v1053
    %1055 = vmatprep.mubr.bf16.mxu0 0
    %1056 = vmatmul.mubr.bf16.gmra.mxu0 %v810
    %v1057 = vpop.f32.mrf.mxu0
    %v1058 = vadd.f32 %v926, %v1057
    %v1059 = vpop.f32.mrf.mxu0
    %v1060 = vadd.f32 %v930, %v1059
    %v1061 = vpop.f32.mrf.mxu0
    %v1062 = vadd.f32 %v926, %v1061
    %v1063 = vpop.f32.mrf.mxu0
    %v1064 = vadd.f32 %v930, %v1063
    %1065 = vmatprep.mubr.bf16.mxu0 0
    %1066 = vmatmul.mubr.bf16.gmra.mxu0 %v811
    %v1067 = vpop.f32.mrf.mxu0
    %v1068 = vadd.f32 %v926, %v1067
    %v1069 = vpop.f32.mrf.mxu0
    %v1070 = vadd.f32 %v930, %v1069
    %v1071 = vpop.f32.mrf.mxu0
    %v1072 = vadd.f32 %v926, %v1071
    %v1073 = vpop.f32.mrf.mxu0
    %v1074 = vadd.f32 %v930, %v1073
    %1075 = vmatprep.mubr.bf16.mxu0 0
    %1076 = vmatmul.mubr.bf16.gmra.mxu0 %v812
    %v1077 = vpop.f32.mrf.mxu0
    %v1078 = vadd.f32 %v926, %v1077
    %v1079 = vpop.f32.mrf.mxu0
    %v1080 = vadd.f32 %v930, %v1079
    %v1081 = vpop.f32.mrf.mxu0
    %v1082 = vadd.f32 %v926, %v1081
    %v1083 = vpop.f32.mrf.mxu0
    %v1084 = vadd.f32 %v930, %v1083
    %1085 = vmatprep.mubr.bf16.mxu0 0
    %1086 = vmatmul.mubr.bf16.gmra.mxu0 %v813
    %v1087 = vpop.f32.mrf.mxu0
    %v1088 = vadd.f32 %v926, %v1087
    %v1089 = vpop.f32.mrf.mxu0
    %v1090 = vadd.f32 %v930, %v1089
    %v1091 = vpop.f32.mrf.mxu0
    %v1092 = vadd.f32 %v926, %v1091
    %v1093 = vpop.f32.mrf.mxu0
    %v1094 = vadd.f32 %v930, %v1093
    %1095 = vmatprep.mubr.bf16.mxu0 0
    %1096 = vmatmul.mubr.bf16.gmra.mxu0 %v814
    %v1097 = vpop.f32.mrf.mxu0
    %v1098 = vadd.f32 %v926, %v1097
    %v1099 = vpop.f32.mrf.mxu0
    %v1100 = vadd.f32 %v930, %v1099
    %v1101 = vpop.f32.mrf.mxu0
    %v1102 = vadd.f32 %v926, %v1101
    %v1103 = vpop.f32.mrf.mxu0
    %v1104 = vadd.f32 %v930, %v1103
    %1105 = vmatprep.mubr.bf16.mxu0 0
    %1106 = vmatmul.mubr.bf16.gmra.mxu0 %v815
    %v1107 = vpop.f32.mrf.mxu0
    %v1108 = vadd.f32 %v926, %v1107
    %v1109 = vpop.f32.mrf.mxu0
    %v1110 = vadd.f32 %v930, %v1109
    %v1111 = vpop.f32.mrf.mxu0
    %v1112 = vadd.f32 %v926, %v1111
    %v1113 = vpop.f32.mrf.mxu0
    %v1114 = vadd.f32 %v930, %v1113
    %1115 = vmatprep.mubr.bf16.mxu0 0
    %1116 = vmatmul.mubr.bf16.gmra.mxu0 %v816
    %v1117 = vpop.f32.mrf.mxu0
    %v1118 = vadd.f32 %v926, %v1117
    %v1119 = vpop.f32.mrf.mxu0
    %v1120 = vadd.f32 %v930, %v1119
    %v1121 = vpop.f32.mrf.mxu0
    %v1122 = vadd.f32 %v926, %v1121
    %v1123 = vpop.f32.mrf.mxu0
    %v1124 = vadd.f32 %v930, %v1123
    %1125 = vmatprep.mubr.bf16.mxu0 0
    %1126 = vmatmul.mubr.bf16.gmra.mxu0 %v817
    %v1127 = vpop.f32.mrf.mxu0
    %v1128 = vadd.f32 %v926, %v1127
    %v1129 = vpop.f32.mrf.mxu0
    %v1130 = vadd.f32 %v930, %v1129
    %v1131 = vpop.f32.mrf.mxu0
    %v1132 = vadd.f32 %v926, %v1131
    %v1133 = vpop.f32.mrf.mxu0
    %v1134 = vadd.f32 %v930, %v1133
    %1135 = vmatprep.mubr.bf16.mxu0 0
    %1136 = vmatmul.mubr.bf16.gmra.mxu0 %v818
    %v1137 = vpop.f32.mrf.mxu0
    %v1138 = vadd.f32 %v926, %v1137
    %v1139 = vpop.f32.mrf.mxu0
    %v1140 = vadd.f32 %v930, %v1139
    %v1141 = vpop.f32.mrf.mxu0
    %v1142 = vadd.f32 %v926, %v1141
    %v1143 = vpop.f32.mrf.mxu0
    %v1144 = vadd.f32 %v930, %v1143
    %1145 = vmatprep.mubr.bf16.mxu0 0
    %1146 = vmatmul.mubr.bf16.gmra.mxu0 %v819
    %v1147 = vpop.f32.mrf.mxu0
    %v1148 = vadd.f32 %v926, %v1147
    %v1149 = vpop.f32.mrf.mxu0
    %v1150 = vadd.f32 %v930, %v1149
    %v1151 = vpop.f32.mrf.mxu0
    %v1152 = vadd.f32 %v926, %v1151
    %v1153 = vpop.f32.mrf.mxu0
    %v1154 = vadd.f32 %v930, %v1153
    %1155 = vmatprep.mubr.bf16.mxu0 0
    %1156 = vmatmul.mubr.bf16.gmra.mxu0 %v820
    %v1157 = vpop.f32.mrf.mxu0
    %v1158 = vadd.f32 %v926, %v1157
    %v1159 = vpop.f32.mrf.mxu0
    %v1160 = vadd.f32 %v930, %v1159
    %v1161 = vpop.f32.mrf.mxu0
    %v1162 = vadd.f32 %v926, %v1161
    %v1163 = vpop.f32.mrf.mxu0
    %v1164 = vadd.f32 %v930, %v1163
    %1165 = vmatprep.mubr.bf16.mxu0 0
    %1166 = vmatmul.mubr.bf16.gmra.mxu0 %v821
    %v1167 = vpop.f32.mrf.mxu0
    %v1168 = vadd.f32 %v926, %v1167
    %v1169 = vpop.f32.mrf.mxu0
    %v1170 = vadd.f32 %v930, %v1169
    %v1171 = vpop.f32.mrf.mxu0
    %v1172 = vadd.f32 %v926, %v1171
    %v1173 = vpop.f32.mrf.mxu0
    %v1174 = vadd.f32 %v930, %v1173
    %1175 = vmatprep.mubr.bf16.mxu0 0
    %1176 = vmatmul.mubr.bf16.gmra.mxu0 %v822
    %v1177 = vpop.f32.mrf.mxu0
    %v1178 = vadd.f32 %v926, %v1177
    %v1179 = vpop.f32.mrf.mxu0
    %v1180 = vadd.f32 %v930, %v1179
    %v1181 = vpop.f32.mrf.mxu0
    %v1182 = vadd.f32 %v926, %v1181
    %v1183 = vpop.f32.mrf.mxu0
    %v1184 = vadd.f32 %v930, %v1183
    %1185 = vmatprep.mubr.bf16.mxu0 0
    %1186 = vmatmul.mubr.bf16.gmra.mxu0 %v823
    %v1187 = vpop.f32.mrf.mxu0
    %v1188 = vadd.f32 %v926, %v1187
    %v1189 = vpop.f32.mrf.mxu0
    %v1190 = vadd.f32 %v930, %v1189
    %v1191 = vpop.f32.mrf.mxu0
    %v1192 = vadd.f32 %v926, %v1191
    %v1193 = vpop.f32.mrf.mxu0
    %v1194 = vadd.f32 %v930, %v1193
    %1195 = vmatprep.mubr.bf16.mxu0 0
    %1196 = vmatmul.mubr.bf16.gmra.mxu0 %v824
    %v1197 = vpop.f32.mrf.mxu0
    %v1198 = vadd.f32 %v926, %v1197
    %v1199 = vpop.f32.mrf.mxu0
    %v1200 = vadd.f32 %v930, %v1199
    %v1201 = vpop.f32.mrf.mxu0
    %v1202 = vadd.f32 %v926, %v1201
    %v1203 = vpop.f32.mrf.mxu0
    %v1204 = vadd.f32 %v930, %v1203
    %1205 = vdwg.mxu0
    %v1206 = vmax.f32 %v1048, 0.0
    %v1207 = vmax.f32 %v1050, 0.0
    %v1208 = vmax.f32 %v1052, 0.0
    %v1209 = vmax.f32 %v1054, 0.0
    %v1210 = vmax.f32 %v1058, 0.0
    %v1211 = vmax.f32 %v1060, 0.0
    %v1212 = vmax.f32 %v1062, 0.0
    %v1213 = vmax.f32 %v1064, 0.0
    %v1214 = vmax.f32 %v1068, 0.0
    %v1215 = vmax.f32 %v1070, 0.0
    %v1216 = vmax.f32 %v1072, 0.0
    %v1217 = vmax.f32 %v1074, 0.0
    %v1218 = vmax.f32 %v1078, 0.0
    %v1219 = vmax.f32 %v1080, 0.0
    %v1220 = vmax.f32 %v1082, 0.0
    %v1221 = vmax.f32 %v1084, 0.0
    %v1222 = vmax.f32 %v1088, 0.0
    %v1223 = vmax.f32 %v1090, 0.0
    %v1224 = vmax.f32 %v1092, 0.0
    %v1225 = vmax.f32 %v1094, 0.0
    %v1226 = vmax.f32 %v1098, 0.0
    %v1227 = vmax.f32 %v1100, 0.0
    %v1228 = vmax.f32 %v1102, 0.0
    %v1229 = vmax.f32 %v1104, 0.0
    %v1230 = vmax.f32 %v1108, 0.0
    %v1231 = vmax.f32 %v1110, 0.0
    %v1232 = vmax.f32 %v1112, 0.0
    %v1233 = vmax.f32 %v1114, 0.0
    %v1234 = vmax.f32 %v1118, 0.0
    %v1235 = vmax.f32 %v1120, 0.0
    %v1236 = vmax.f32 %v1122, 0.0
    %v1237 = vmax.f32 %v1124, 0.0
    %v1238 = vmax.f32 %v1128, 0.0
    %v1239 = vmax.f32 %v1130, 0.0
    %v1240 = vmax.f32 %v1132, 0.0
    %v1241 = vmax.f32 %v1134, 0.0
    %v1242 = vmax.f32 %v1138, 0.0
    %v1243 = vmax.f32 %v1140, 0.0
    %v1244 = vmax.f32 %v1142, 0.0
    %v1245 = vmax.f32 %v1144, 0.0
    %v1246 = vmax.f32 %v1148, 0.0
    %v1247 = vmax.f32 %v1150, 0.0
    %v1248 = vmax.f32 %v1152, 0.0
    %v1249 = vmax.f32 %v1154, 0.0
    %v1250 = vmax.f32 %v1158, 0.0
    %v1251 = vmax.f32 %v1160, 0.0
    %v1252 = vmax.f32 %v1162, 0.0
    %v1253 = vmax.f32 %v1164, 0.0
    %v1254 = vmax.f32 %v1168, 0.0
    %v1255 = vmax.f32 %v1170, 0.0
    %v1256 = vmax.f32 %v1172, 0.0
    %v1257 = vmax.f32 %v1174, 0.0
    %v1258 = vmax.f32 %v1178, 0.0
    %v1259 = vmax.f32 %v1180, 0.0
    %v1260 = vmax.f32 %v1182, 0.0
    %v1261 = vmax.f32 %v1184, 0.0
    %v1262 = vmax.f32 %v1188, 0.0
    %v1263 = vmax.f32 %v1190, 0.0
    %v1264 = vmax.f32 %v1192, 0.0
    %v1265 = vmax.f32 %v1194, 0.0
    %v1266 = vmax.f32 %v1198, 0.0
    %v1267 = vmax.f32 %v1200, 0.0
    %v1268 = vmax.f32 %v1202, 0.0
    %v1269 = vmax.f32 %v1204, 0.0
    %1271 = vset.pattern.permute.xlu0 0
    %1272 = vperm.xlu0 %1271, %v397
    %v1273 = vpop.permute.xlu0 %1272
    %1276 = vset.pattern.permute.xlu0 0
    %1277 = vperm.xlu0 %1276, %v398
    %v1278 = vpop.permute.xlu0 %1277
    %1281 = vset.pattern.permute.xlu0 0
    %1282 = vperm.xlu0 %1281, %v399
    %v1283 = vpop.permute.xlu0 %1282
    %1286 = vset.pattern.permute.xlu0 0
    %1287 = vperm.xlu0 %1286, %v400
    %v1288 = vpop.permute.xlu0 %1287
    %1291 = vset.pattern.permute.xlu0 0
    %1292 = vperm.xlu0 %1291, %v401
    %v1293 = vpop.permute.xlu0 %1292
    %1296 = vset.pattern.permute.xlu0 0
    %1297 = vperm.xlu0 %1296, %v402
    %v1298 = vpop.permute.xlu0 %1297
    %1301 = vset.pattern.permute.xlu0 0
    %1302 = vperm.xlu0 %1301, %v403
    %v1303 = vpop.permute.xlu0 %1302
    %1306 = vset.pattern.permute.xlu0 0
    %1307 = vperm.xlu0 %1306, %v404
    %v1308 = vpop.permute.xlu0 %1307
    %1311 = vset.pattern.permute.xlu0 0
    %1312 = vperm.xlu0 %1311, %v405
    %v1313 = vpop.permute.xlu0 %1312
    %1316 = vset.pattern.permute.xlu0 0
    %1317 = vperm.xlu0 %1316, %v406
    %v1318 = vpop.permute.xlu0 %1317
    %1321 = vset.pattern.permute.xlu0 0
    %1322 = vperm.xlu0 %1321, %v407
    %v1323 = vpop.permute.xlu0 %1322
    %1326 = vset.pattern.permute.xlu0 0
    %1327 = vperm.xlu0 %1326, %v408
    %v1328 = vpop.permute.xlu0 %1327
    %1331 = vset.pattern.permute.xlu0 0
    %1332 = vperm.xlu0 %1331, %v409
    %v1333 = vpop.permute.xlu0 %1332
    %1336 = vset.pattern.permute.xlu0 0
    %1337 = vperm.xlu0 %1336, %v410
    %v1338 = vpop.permute.xlu0 %1337
    %1341 = vset.pattern.permute.xlu0 0
    %1342 = vperm.xlu0 %1341, %v411
    %v1343 = vpop.permute.xlu0 %1342
    %1346 = vset.pattern.permute.xlu0 0
    %1347 = vperm.xlu0 %1346, %v412
    %v1348 = vpop.permute.xlu0 %1347
    %1351 = vset.pattern.permute.xlu0 0
    %1352 = vperm.xlu0 %1351, %v413
    %v1353 = vpop.permute.xlu0 %1352
    %1356 = vset.pattern.permute.xlu0 0
    %1357 = vperm.xlu0 %1356, %v414
    %v1358 = vpop.permute.xlu0 %1357
    %1361 = vset.pattern.permute.xlu0 0
    %1362 = vperm.xlu0 %1361, %v415
    %v1363 = vpop.permute.xlu0 %1362
    %1366 = vset.pattern.permute.xlu0 0
    %1367 = vperm.xlu0 %1366, %v416
    %v1368 = vpop.permute.xlu0 %1367
    %1371 = vset.pattern.permute.xlu0 0
    %1372 = vperm.xlu0 %1371, %v417
    %v1373 = vpop.permute.xlu0 %1372
    %1376 = vset.pattern.permute.xlu0 0
    %1377 = vperm.xlu0 %1376, %v418
    %v1378 = vpop.permute.xlu0 %1377
    %1381 = vset.pattern.permute.xlu0 0
    %1382 = vperm.xlu0 %1381, %v419
    %v1383 = vpop.permute.xlu0 %1382
    %1386 = vset.pattern.permute.xlu0 0
    %1387 = vperm.xlu0 %1386, %v420
    %v1388 = vpop.permute.xlu0 %1387
    %1391 = vset.pattern.permute.xlu0 0
    %1392 = vperm.xlu0 %1391, %v421
    %v1393 = vpop.permute.xlu0 %1392
    %1396 = vset.pattern.permute.xlu0 0
    %1397 = vperm.xlu0 %1396, %v422
    %v1398 = vpop.permute.xlu0 %1397
    %1401 = vset.pattern.permute.xlu0 0
    %1402 = vperm.xlu0 %1401, %v423
    %v1403 = vpop.permute.xlu0 %1402
    %1406 = vset.pattern.permute.xlu0 0
    %1407 = vperm.xlu0 %1406, %v424
    %v1408 = vpop.permute.xlu0 %1407
    %1411 = vset.pattern.permute.xlu0 0
    %1412 = vperm.xlu0 %1411, %v425
    %v1413 = vpop.permute.xlu0 %1412
    %1416 = vset.pattern.permute.xlu0 0
    %1417 = vperm.xlu0 %1416, %v426
    %v1418 = vpop.permute.xlu0 %1417
    %1421 = vset.pattern.permute.xlu0 0
    %1422 = vperm.xlu0 %1421, %v427
    %v1423 = vpop.permute.xlu0 %1422
    %1426 = vset.pattern.permute.xlu0 0
    %1427 = vperm.xlu0 %1426, %v428
    %v1428 = vpop.permute.xlu0 %1427
    %v1430 = vmul.f32 %v1273, %v1206
    %v1431 = vmul.f32 %v1278, %v1208
    %v1432 = vmul.f32 %v1283, %v1210
    %v1433 = vmul.f32 %v1288, %v1212
    %v1434 = vmul.f32 %v1293, %v1214
    %v1435 = vmul.f32 %v1298, %v1216
    %v1436 = vmul.f32 %v1303, %v1218
    %v1437 = vmul.f32 %v1308, %v1220
    %v1438 = vmul.f32 %v1313, %v1222
    %v1439 = vmul.f32 %v1318, %v1224
    %v1440 = vmul.f32 %v1323, %v1226
    %v1441 = vmul.f32 %v1328, %v1228
    %v1442 = vmul.f32 %v1333, %v1230
    %v1443 = vmul.f32 %v1338, %v1232
    %v1444 = vmul.f32 %v1343, %v1234
    %v1445 = vmul.f32 %v1348, %v1236
    %v1446 = vmul.f32 %v1353, %v1238
    %v1447 = vmul.f32 %v1358, %v1240
    %v1448 = vmul.f32 %v1363, %v1242
    %v1449 = vmul.f32 %v1368, %v1244
    %v1450 = vmul.f32 %v1373, %v1246
    %v1451 = vmul.f32 %v1378, %v1248
    %v1452 = vmul.f32 %v1383, %v1250
    %v1453 = vmul.f32 %v1388, %v1252
    %v1454 = vmul.f32 %v1393, %v1254
    %v1455 = vmul.f32 %v1398, %v1256
    %v1456 = vmul.f32 %v1403, %v1258
    %v1457 = vmul.f32 %v1408, %v1260
    %v1458 = vmul.f32 %v1413, %v1262
    %v1459 = vmul.f32 %v1418, %v1264
    %v1460 = vmul.f32 %v1423, %v1266
    %v1461 = vmul.f32 %v1428, %v1268
    %1463 = vset.pattern.permute.xlu0 0
    %1464 = vperm.xlu0 %1463, %v429
    %v1465 = vpop.permute.xlu0 %1464
    %1468 = vset.pattern.permute.xlu0 0
    %1469 = vperm.xlu0 %1468, %v430
    %v1470 = vpop.permute.xlu0 %1469
    %1473 = vset.pattern.permute.xlu0 0
    %1474 = vperm.xlu0 %1473, %v431
    %v1475 = vpop.permute.xlu0 %1474
    %1478 = vset.pattern.permute.xlu0 0
    %1479 = vperm.xlu0 %1478, %v432
    %v1480 = vpop.permute.xlu0 %1479
    %1483 = vset.pattern.permute.xlu0 0
    %1484 = vperm.xlu0 %1483, %v433
    %v1485 = vpop.permute.xlu0 %1484
    %1488 = vset.pattern.permute.xlu0 0
    %1489 = vperm.xlu0 %1488, %v434
    %v1490 = vpop.permute.xlu0 %1489
    %1493 = vset.pattern.permute.xlu0 0
    %1494 = vperm.xlu0 %1493, %v435
    %v1495 = vpop.permute.xlu0 %1494
    %1498 = vset.pattern.permute.xlu0 0
    %1499 = vperm.xlu0 %1498, %v436
    %v1500 = vpop.permute.xlu0 %1499
    %1503 = vset.pattern.permute.xlu0 0
    %1504 = vperm.xlu0 %1503, %v437
    %v1505 = vpop.permute.xlu0 %1504
    %1508 = vset.pattern.permute.xlu0 0
    %1509 = vperm.xlu0 %1508, %v438
    %v1510 = vpop.permute.xlu0 %1509
    %1513 = vset.pattern.permute.xlu0 0
    %1514 = vperm.xlu0 %1513, %v439
    %v1515 = vpop.permute.xlu0 %1514
    %1518 = vset.pattern.permute.xlu0 0
    %1519 = vperm.xlu0 %1518, %v440
    %v1520 = vpop.permute.xlu0 %1519
    %1523 = vset.pattern.permute.xlu0 0
    %1524 = vperm.xlu0 %1523, %v441
    %v1525 = vpop.permute.xlu0 %1524
    %1528 = vset.pattern.permute.xlu0 0
    %1529 = vperm.xlu0 %1528, %v442
    %v1530 = vpop.permute.xlu0 %1529
    %1533 = vset.pattern.permute.xlu0 0
    %1534 = vperm.xlu0 %1533, %v443
    %v1535 = vpop.permute.xlu0 %1534
    %1538 = vset.pattern.permute.xlu0 0
    %1539 = vperm.xlu0 %1538, %v444
    %v1540 = vpop.permute.xlu0 %1539
    %1543 = vset.pattern.permute.xlu0 0
    %1544 = vperm.xlu0 %1543, %v445
    %v1545 = vpop.permute.xlu0 %1544
    %1548 = vset.pattern.permute.xlu0 0
    %1549 = vperm.xlu0 %1548, %v446
    %v1550 = vpop.permute.xlu0 %1549
    %1553 = vset.pattern.permute.xlu0 0
    %1554 = vperm.xlu0 %1553, %v447
    %v1555 = vpop.permute.xlu0 %1554
    %1558 = vset.pattern.permute.xlu0 0
    %1559 = vperm.xlu0 %1558, %v448
    %v1560 = vpop.permute.xlu0 %1559
    %1563 = vset.pattern.permute.xlu0 0
    %1564 = vperm.xlu0 %1563, %v449
    %v1565 = vpop.permute.xlu0 %1564
    %1568 = vset.pattern.permute.xlu0 0
    %1569 = vperm.xlu0 %1568, %v450
    %v1570 = vpop.permute.xlu0 %1569
    %1573 = vset.pattern.permute.xlu0 0
    %1574 = vperm.xlu0 %1573, %v451
    %v1575 = vpop.permute.xlu0 %1574
    %1578 = vset.pattern.permute.xlu0 0
    %1579 = vperm.xlu0 %1578, %v452
    %v1580 = vpop.permute.xlu0 %1579
    %1583 = vset.pattern.permute.xlu0 0
    %1584 = vperm.xlu0 %1583, %v453
    %v1585 = vpop.permute.xlu0 %1584
    %1588 = vset.pattern.permute.xlu0 0
    %1589 = vperm.xlu0 %1588, %v454
    %v1590 = vpop.permute.xlu0 %1589
    %1593 = vset.pattern.permute.xlu0 0
    %1594 = vperm.xlu0 %1593, %v455
    %v1595 = vpop.permute.xlu0 %1594
    %1598 = vset.pattern.permute.xlu0 0
    %1599 = vperm.xlu0 %1598, %v456
    %v1600 = vpop.permute.xlu0 %1599
    %1603 = vset.pattern.permute.xlu0 0
    %1604 = vperm.xlu0 %1603, %v457
    %v1605 = vpop.permute.xlu0 %1604
    %1608 = vset.pattern.permute.xlu0 0
    %1609 = vperm.xlu0 %1608, %v458
    %v1610 = vpop.permute.xlu0 %1609
    %1613 = vset.pattern.permute.xlu0 0
    %1614 = vperm.xlu0 %1613, %v459
    %v1615 = vpop.permute.xlu0 %1614
    %1618 = vset.pattern.permute.xlu0 0
    %1619 = vperm.xlu0 %1618, %v460
    %v1620 = vpop.permute.xlu0 %1619
    %v1622 = vmul.f32 %v1465, %v1207
    %v1623 = vmul.f32 %v1470, %v1209
    %v1624 = vmul.f32 %v1475, %v1211
    %v1625 = vmul.f32 %v1480, %v1213
    %v1626 = vmul.f32 %v1485, %v1215
    %v1627 = vmul.f32 %v1490, %v1217
    %v1628 = vmul.f32 %v1495, %v1219
    %v1629 = vmul.f32 %v1500, %v1221
    %v1630 = vmul.f32 %v1505, %v1223
    %v1631 = vmul.f32 %v1510, %v1225
    %v1632 = vmul.f32 %v1515, %v1227
    %v1633 = vmul.f32 %v1520, %v1229
    %v1634 = vmul.f32 %v1525, %v1231
    %v1635 = vmul.f32 %v1530, %v1233
    %v1636 = vmul.f32 %v1535, %v1235
    %v1637 = vmul.f32 %v1540, %v1237
    %v1638 = vmul.f32 %v1545, %v1239
    %v1639 = vmul.f32 %v1550, %v1241
    %v1640 = vmul.f32 %v1555, %v1243
    %v1641 = vmul.f32 %v1560, %v1245
    %v1642 = vmul.f32 %v1565, %v1247
    %v1643 = vmul.f32 %v1570, %v1249
    %v1644 = vmul.f32 %v1575, %v1251
    %v1645 = vmul.f32 %v1580, %v1253
    %v1646 = vmul.f32 %v1585, %v1255
    %v1647 = vmul.f32 %v1590, %v1257
    %v1648 = vmul.f32 %v1595, %v1259
    %v1649 = vmul.f32 %v1600, %v1261
    %v1650 = vmul.f32 %v1605, %v1263
    %v1651 = vmul.f32 %v1610, %v1265
    %v1652 = vmul.f32 %v1615, %v1267
    %v1653 = vmul.f32 %v1620, %v1269
    %v1654 = vadd.f32 %v1430, %v1622
    %v1655 = vadd.f32 %v1431, %v1623
    %v1656 = vadd.f32 %v1432, %v1624
    %v1657 = vadd.f32 %v1433, %v1625
    %v1658 = vadd.f32 %v1434, %v1626
    %v1659 = vadd.f32 %v1435, %v1627
    %v1660 = vadd.f32 %v1436, %v1628
    %v1661 = vadd.f32 %v1437, %v1629
    %v1662 = vadd.f32 %v1438, %v1630
    %v1663 = vadd.f32 %v1439, %v1631
    %v1664 = vadd.f32 %v1440, %v1632
    %v1665 = vadd.f32 %v1441, %v1633
    %v1666 = vadd.f32 %v1442, %v1634
    %v1667 = vadd.f32 %v1443, %v1635
    %v1668 = vadd.f32 %v1444, %v1636
    %v1669 = vadd.f32 %v1445, %v1637
    %v1670 = vadd.f32 %v1446, %v1638
    %v1671 = vadd.f32 %v1447, %v1639
    %v1672 = vadd.f32 %v1448, %v1640
    %v1673 = vadd.f32 %v1449, %v1641
    %v1674 = vadd.f32 %v1450, %v1642
    %v1675 = vadd.f32 %v1451, %v1643
    %v1676 = vadd.f32 %v1452, %v1644
    %v1677 = vadd.f32 %v1453, %v1645
    %v1678 = vadd.f32 %v1454, %v1646
    %v1679 = vadd.f32 %v1455, %v1647
    %v1680 = vadd.f32 %v1456, %v1648
    %v1681 = vadd.f32 %v1457, %v1649
    %v1682 = vadd.f32 %v1458, %v1650
    %v1683 = vadd.f32 %v1459, %v1651
    %v1684 = vadd.f32 %v1460, %v1652
    %v1685 = vadd.f32 %v1461, %v1653
    %v1686 = vpack.c.bf16 %v1655, %v1654
    %v1687 = vpack.c.bf16 %v1657, %v1656
    %v1688 = vpack.c.bf16 %v1659, %v1658
    %v1689 = vpack.c.bf16 %v1661, %v1660
    %v1690 = vpack.c.bf16 %v1663, %v1662
    %v1691 = vpack.c.bf16 %v1665, %v1664
    %v1692 = vpack.c.bf16 %v1667, %v1666
    %v1693 = vpack.c.bf16 %v1669, %v1668
    %v1694 = vpack.c.bf16 %v1671, %v1670
    %v1695 = vpack.c.bf16 %v1673, %v1672
    %v1696 = vpack.c.bf16 %v1675, %v1674
    %v1697 = vpack.c.bf16 %v1677, %v1676
    %v1698 = vpack.c.bf16 %v1679, %v1678
    %v1699 = vpack.c.bf16 %v1681, %v1680
    %v1700 = vpack.c.bf16 %v1683, %v1682
    %v1701 = vpack.c.bf16 %v1685, %v1684
    %1702 = vmatprep.subr.bf16.mxu0 0
    %1703 = vmatpush1.bf16.msra.mxu0 %v1693
    %1704 = vmatprep.subr.bf16.mxu0 0
    %1705 = vmatpush1.bf16.msra.mxu0 %v1692
    %1706 = vmatprep.subr.bf16.mxu0 0
    %1707 = vmatpush1.bf16.msra.mxu0 %v1691
    %1708 = vmatprep.subr.bf16.mxu0 0
    %1709 = vmatpush1.bf16.msra.mxu0 %v1690
    %1710 = vmatprep.subr.bf16.mxu0 0
    %1711 = vmatpush1.bf16.msra.mxu0 %v1689
    %1712 = vmatprep.subr.bf16.mxu0 0
    %1713 = vmatpush1.bf16.msra.mxu0 %v1688
    %1714 = vmatprep.subr.bf16.mxu0 0
    %1715 = vmatpush1.bf16.msra.mxu0 %v1687
    %1716 = vmatprep.subr.bf16.mxu0 0
    %1717 = vmatpush1.bf16.msra.mxu0 %v1686
    %1718 = vmatprep.subr.bf16.mxu0 0
    %1719 = vmatpush2.bf16.msra.mxu0 %v1701
    %1720 = vmatprep.subr.bf16.mxu0 0
    %1721 = vmatpush2.bf16.msra.mxu0 %v1700
    %1722 = vmatprep.subr.bf16.mxu0 0
    %1723 = vmatpush2.bf16.msra.mxu0 %v1699
    %1724 = vmatprep.subr.bf16.mxu0 0
    %1725 = vmatpush2.bf16.msra.mxu0 %v1698
    %1726 = vmatprep.subr.bf16.mxu0 0
    %1727 = vmatpush2.bf16.msra.mxu0 %v1697
    %1728 = vmatprep.subr.bf16.mxu0 0
    %1729 = vmatpush2.bf16.msra.mxu0 %v1696
    %1730 = vmatprep.subr.bf16.mxu0 0
    %1731 = vmatpush2.bf16.msra.mxu0 %v1695
    %1732 = vmatprep.subr.bf16.mxu0 0
    %1733 = vmatpush2.bf16.msra.mxu0 %v1694
    %1734 = vmatprep.mubr.bf16.mxu0 %v842
    %1735 = vmatmul.mubr.bf16.gmra.mxu0 %v841
    %v1736 = vpop.f32.mrf.mxu0
    %v1737 = vadd.f32 0.0, %v1736
    %v1738 = vpop.f32.mrf.mxu0
    %v1739 = vpop.f32.mrf.mxu0
    %v1740 = vadd.f32 0.0, %v1739
    %v1741 = vpop.f32.mrf.mxu0
    %1742 = vmatprep.mubr.bf16.mxu0 %v844
    %1743 = vmatmul.mubr.bf16.gmra.mxu0 %v843
    %v1744 = vpop.f32.mrf.mxu0
    %v1745 = vadd.f32 0.0, %v1744
    %v1746 = vpop.f32.mrf.mxu0
    %v1747 = vpop.f32.mrf.mxu0
    %v1748 = vadd.f32 0.0, %v1747
    %v1749 = vpop.f32.mrf.mxu0
    %1750 = vmatprep.mubr.bf16.mxu0 %v846
    %1751 = vmatmul.mubr.bf16.gmra.mxu0 %v845
    %v1752 = vpop.f32.mrf.mxu0
    %v1753 = vadd.f32 0.0, %v1752
    %v1754 = vpop.f32.mrf.mxu0
    %v1755 = vpop.f32.mrf.mxu0
    %v1756 = vadd.f32 0.0, %v1755
    %v1757 = vpop.f32.mrf.mxu0
    %1758 = vmatprep.mubr.bf16.mxu0 %v848
    %1759 = vmatmul.mubr.bf16.gmra.mxu0 %v847
    %v1760 = vpop.f32.mrf.mxu0
    %v1761 = vadd.f32 0.0, %v1760
    %v1762 = vpop.f32.mrf.mxu0
    %v1763 = vpop.f32.mrf.mxu0
    %v1764 = vadd.f32 0.0, %v1763
    %v1765 = vpop.f32.mrf.mxu0
    %1766 = vmatprep.mubr.bf16.mxu0 %v850
    %1767 = vmatmul.mubr.bf16.gmra.mxu0 %v849
    %v1768 = vpop.f32.mrf.mxu0
    %v1769 = vadd.f32 0.0, %v1768
    %v1770 = vpop.f32.mrf.mxu0
    %v1771 = vpop.f32.mrf.mxu0
    %v1772 = vadd.f32 0.0, %v1771
    %v1773 = vpop.f32.mrf.mxu0
    %1774 = vmatprep.mubr.bf16.mxu0 %v852
    %1775 = vmatmul.mubr.bf16.gmra.mxu0 %v851
    %v1776 = vpop.f32.mrf.mxu0
    %v1777 = vadd.f32 0.0, %v1776
    %v1778 = vpop.f32.mrf.mxu0
    %v1779 = vpop.f32.mrf.mxu0
    %v1780 = vadd.f32 0.0, %v1779
    %v1781 = vpop.f32.mrf.mxu0
    %1782 = vmatprep.mubr.bf16.mxu0 %v854
    %1783 = vmatmul.mubr.bf16.gmra.mxu0 %v853
    %v1784 = vpop.f32.mrf.mxu0
    %v1785 = vadd.f32 0.0, %v1784
    %v1786 = vpop.f32.mrf.mxu0
    %v1787 = vpop.f32.mrf.mxu0
    %v1788 = vadd.f32 0.0, %v1787
    %v1789 = vpop.f32.mrf.mxu0
    %1790 = vmatprep.mubr.bf16.mxu0 %v856
    %1791 = vmatmul.mubr.bf16.gmra.mxu0 %v855
    %v1792 = vpop.f32.mrf.mxu0
    %v1793 = vadd.f32 0.0, %v1792
    %v1794 = vpop.f32.mrf.mxu0
    %v1795 = vpop.f32.mrf.mxu0
    %v1796 = vadd.f32 0.0, %v1795
    %v1797 = vpop.f32.mrf.mxu0
    %1798 = vmatprep.mubr.bf16.mxu0 %v858
    %1799 = vmatmul.mubr.bf16.gmra.mxu0 %v857
    %v1800 = vpop.f32.mrf.mxu0
    %v1801 = vadd.f32 0.0, %v1800
    %v1802 = vpop.f32.mrf.mxu0
    %v1803 = vpop.f32.mrf.mxu0
    %v1804 = vadd.f32 0.0, %v1803
    %v1805 = vpop.f32.mrf.mxu0
    %1806 = vmatprep.mubr.bf16.mxu0 %v860
    %1807 = vmatmul.mubr.bf16.gmra.mxu0 %v859
    %v1808 = vpop.f32.mrf.mxu0
    %v1809 = vadd.f32 0.0, %v1808
    %v1810 = vpop.f32.mrf.mxu0
    %v1811 = vpop.f32.mrf.mxu0
    %v1812 = vadd.f32 0.0, %v1811
    %v1813 = vpop.f32.mrf.mxu0
    %1814 = vmatprep.mubr.bf16.mxu0 %v862
    %1815 = vmatmul.mubr.bf16.gmra.mxu0 %v861
    %v1816 = vpop.f32.mrf.mxu0
    %v1817 = vadd.f32 0.0, %v1816
    %v1818 = vpop.f32.mrf.mxu0
    %v1819 = vpop.f32.mrf.mxu0
    %v1820 = vadd.f32 0.0, %v1819
    %v1821 = vpop.f32.mrf.mxu0
    %1822 = vmatprep.mubr.bf16.mxu0 %v864
    %1823 = vmatmul.mubr.bf16.gmra.mxu0 %v863
    %v1824 = vpop.f32.mrf.mxu0
    %v1825 = vadd.f32 0.0, %v1824
    %v1826 = vpop.f32.mrf.mxu0
    %v1827 = vpop.f32.mrf.mxu0
    %v1828 = vadd.f32 0.0, %v1827
    %v1829 = vpop.f32.mrf.mxu0
    %1830 = vmatprep.mubr.bf16.mxu0 %v866
    %1831 = vmatmul.mubr.bf16.gmra.mxu0 %v865
    %v1832 = vpop.f32.mrf.mxu0
    %v1833 = vadd.f32 0.0, %v1832
    %v1834 = vpop.f32.mrf.mxu0
    %v1835 = vpop.f32.mrf.mxu0
    %v1836 = vadd.f32 0.0, %v1835
    %v1837 = vpop.f32.mrf.mxu0
    %1838 = vmatprep.mubr.bf16.mxu0 %v868
    %1839 = vmatmul.mubr.bf16.gmra.mxu0 %v867
    %v1840 = vpop.f32.mrf.mxu0
    %v1841 = vadd.f32 0.0, %v1840
    %v1842 = vpop.f32.mrf.mxu0
    %v1843 = vpop.f32.mrf.mxu0
    %v1844 = vadd.f32 0.0, %v1843
    %v1845 = vpop.f32.mrf.mxu0
    %1846 = vmatprep.mubr.bf16.mxu0 %v870
    %1847 = vmatmul.mubr.bf16.gmra.mxu0 %v869
    %v1848 = vpop.f32.mrf.mxu0
    %v1849 = vadd.f32 0.0, %v1848
    %v1850 = vpop.f32.mrf.mxu0
    %v1851 = vpop.f32.mrf.mxu0
    %v1852 = vadd.f32 0.0, %v1851
    %v1853 = vpop.f32.mrf.mxu0
    %1854 = vmatprep.mubr.bf16.mxu0 %v872
    %1855 = vmatmul.mubr.bf16.gmra.mxu0 %v871
    %v1856 = vpop.f32.mrf.mxu0
    %v1857 = vadd.f32 0.0, %v1856
    %v1858 = vpop.f32.mrf.mxu0
    %v1859 = vpop.f32.mrf.mxu0
    %v1860 = vadd.f32 0.0, %v1859
    %v1861 = vpop.f32.mrf.mxu0
    %1862 = vdwg.mxu0
    %1864 = vset.pattern.permute.xlu0 0
    %1865 = vperm.xlu0 %1864, %v873
    %v1866 = vpop.permute.xlu0 %1865
    %1869 = vset.pattern.permute.xlu0 0
    %1870 = vperm.xlu0 %1869, %v874
    %v1871 = vpop.permute.xlu0 %1870
    %1874 = vset.pattern.permute.xlu0 0
    %1875 = vperm.xlu0 %1874, %v875
    %v1876 = vpop.permute.xlu0 %1875
    %1879 = vset.pattern.permute.xlu0 0
    %1880 = vperm.xlu0 %1879, %v876
    %v1881 = vpop.permute.xlu0 %1880
    %1884 = vset.pattern.permute.xlu0 0
    %1885 = vperm.xlu0 %1884, %v877
    %v1886 = vpop.permute.xlu0 %1885
    %1889 = vset.pattern.permute.xlu0 0
    %1890 = vperm.xlu0 %1889, %v878
    %v1891 = vpop.permute.xlu0 %1890
    %1894 = vset.pattern.permute.xlu0 0
    %1895 = vperm.xlu0 %1894, %v879
    %v1896 = vpop.permute.xlu0 %1895
    %1899 = vset.pattern.permute.xlu0 0
    %1900 = vperm.xlu0 %1899, %v880
    %v1901 = vpop.permute.xlu0 %1900
    %1904 = vset.pattern.permute.xlu0 0
    %1905 = vperm.xlu0 %1904, %v881
    %v1906 = vpop.permute.xlu0 %1905
    %1909 = vset.pattern.permute.xlu0 0
    %1910 = vperm.xlu0 %1909, %v882
    %v1911 = vpop.permute.xlu0 %1910
    %1914 = vset.pattern.permute.xlu0 0
    %1915 = vperm.xlu0 %1914, %v883
    %v1916 = vpop.permute.xlu0 %1915
    %1919 = vset.pattern.permute.xlu0 0
    %1920 = vperm.xlu0 %1919, %v884
    %v1921 = vpop.permute.xlu0 %1920
    %1924 = vset.pattern.permute.xlu0 0
    %1925 = vperm.xlu0 %1924, %v885
    %v1926 = vpop.permute.xlu0 %1925
    %1929 = vset.pattern.permute.xlu0 0
    %1930 = vperm.xlu0 %1929, %v886
    %v1931 = vpop.permute.xlu0 %1930
    %1934 = vset.pattern.permute.xlu0 0
    %1935 = vperm.xlu0 %1934, %v887
    %v1936 = vpop.permute.xlu0 %1935
    %1939 = vset.pattern.permute.xlu0 0
    %1940 = vperm.xlu0 %1939, %v888
    %v1941 = vpop.permute.xlu0 %1940
    %1944 = vset.pattern.permute.xlu0 0
    %1945 = vperm.xlu0 %1944, %v889
    %v1946 = vpop.permute.xlu0 %1945
    %1949 = vset.pattern.permute.xlu0 0
    %1950 = vperm.xlu0 %1949, %v890
    %v1951 = vpop.permute.xlu0 %1950
    %1954 = vset.pattern.permute.xlu0 0
    %1955 = vperm.xlu0 %1954, %v891
    %v1956 = vpop.permute.xlu0 %1955
    %1959 = vset.pattern.permute.xlu0 0
    %1960 = vperm.xlu0 %1959, %v892
    %v1961 = vpop.permute.xlu0 %1960
    %1964 = vset.pattern.permute.xlu0 0
    %1965 = vperm.xlu0 %1964, %v893
    %v1966 = vpop.permute.xlu0 %1965
    %1969 = vset.pattern.permute.xlu0 0
    %1970 = vperm.xlu0 %1969, %v894
    %v1971 = vpop.permute.xlu0 %1970
    %1974 = vset.pattern.permute.xlu0 0
    %1975 = vperm.xlu0 %1974, %v895
    %v1976 = vpop.permute.xlu0 %1975
    %1979 = vset.pattern.permute.xlu0 0
    %1980 = vperm.xlu0 %1979, %v896
    %v1981 = vpop.permute.xlu0 %1980
    %1984 = vset.pattern.permute.xlu0 0
    %1985 = vperm.xlu0 %1984, %v897
    %v1986 = vpop.permute.xlu0 %1985
    %1989 = vset.pattern.permute.xlu0 0
    %1990 = vperm.xlu0 %1989, %v898
    %v1991 = vpop.permute.xlu0 %1990
    %1994 = vset.pattern.permute.xlu0 0
    %1995 = vperm.xlu0 %1994, %v899
    %v1996 = vpop.permute.xlu0 %1995
    %1999 = vset.pattern.permute.xlu0 0
    %2000 = vperm.xlu0 %1999, %v900
    %v2001 = vpop.permute.xlu0 %2000
    %2004 = vset.pattern.permute.xlu0 0
    %2005 = vperm.xlu0 %2004, %v901
    %v2006 = vpop.permute.xlu0 %2005
    %2009 = vset.pattern.permute.xlu0 0
    %2010 = vperm.xlu0 %2009, %v902
    %v2011 = vpop.permute.xlu0 %2010
    %2014 = vset.pattern.permute.xlu0 0
    %2015 = vperm.xlu0 %2014, %v903
    %v2016 = vpop.permute.xlu0 %2015
    %2019 = vset.pattern.permute.xlu0 0
    %2020 = vperm.xlu0 %2019, %v904
    %v2021 = vpop.permute.xlu0 %2020
    %v2023 = vmul.f32 %v1737, %v1866
    %v2024 = vmul.f32 %v1740, %v1871
    %v2025 = vmul.f32 %v1745, %v1876
    %v2026 = vmul.f32 %v1748, %v1881
    %v2027 = vmul.f32 %v1753, %v1886
    %v2028 = vmul.f32 %v1756, %v1891
    %v2029 = vmul.f32 %v1761, %v1896
    %v2030 = vmul.f32 %v1764, %v1901
    %v2031 = vmul.f32 %v1769, %v1906
    %v2032 = vmul.f32 %v1772, %v1911
    %v2033 = vmul.f32 %v1777, %v1916
    %v2034 = vmul.f32 %v1780, %v1921
    %v2035 = vmul.f32 %v1785, %v1926
    %v2036 = vmul.f32 %v1788, %v1931
    %v2037 = vmul.f32 %v1793, %v1936
    %v2038 = vmul.f32 %v1796, %v1941
    %v2039 = vmul.f32 %v1801, %v1946
    %v2040 = vmul.f32 %v1804, %v1951
    %v2041 = vmul.f32 %v1809, %v1956
    %v2042 = vmul.f32 %v1812, %v1961
    %v2043 = vmul.f32 %v1817, %v1966
    %v2044 = vmul.f32 %v1820, %v1971
    %v2045 = vmul.f32 %v1825, %v1976
    %v2046 = vmul.f32 %v1828, %v1981
    %v2047 = vmul.f32 %v1833, %v1986
    %v2048 = vmul.f32 %v1836, %v1991
    %v2049 = vmul.f32 %v1841, %v1996
    %v2050 = vmul.f32 %v1844, %v2001
    %v2051 = vmul.f32 %v1849, %v2006
    %v2052 = vmul.f32 %v1852, %v2011
    %v2053 = vmul.f32 %v1857, %v2016
    %v2054 = vmul.f32 %v1860, %v2021
    %v2055 = vld [vmem:[%s11] sm:$0x1]
    %v2056 = vld [vmem:[%s12] sm:$0x1]
    %v2057 = vmul.f32 %v2023, %v269
    %v2058 = vmul.f32 %v2024, %v270
    %v2059 = vmul.f32 %v2025, %v271
    %v2060 = vmul.f32 %v2026, %v272
    %v2061 = vmul.f32 %v2027, %v273
    %v2062 = vmul.f32 %v2028, %v274
    %v2063 = vmul.f32 %v2029, %v275
    %v2064 = vmul.f32 %v2030, %v276
    %v2065 = vmul.f32 %v2031, %v277
    %v2066 = vmul.f32 %v2032, %v278
    %v2067 = vmul.f32 %v2033, %v279
    %v2068 = vmul.f32 %v2034, %v280
    %v2069 = vmul.f32 %v2035, %v281
    %v2070 = vmul.f32 %v2036, %v282
    %v2071 = vmul.f32 %v2037, %v283
    %v2072 = vmul.f32 %v2038, %v284
    %v2073 = vmul.f32 %v2039, %v285
    %v2074 = vmul.f32 %v2040, %v286
    %v2075 = vmul.f32 %v2041, %v287
    %v2076 = vmul.f32 %v2042, %v288
    %v2077 = vmul.f32 %v2043, %v289
    %v2078 = vmul.f32 %v2044, %v290
    %v2079 = vmul.f32 %v2045, %v291
    %v2080 = vmul.f32 %v2046, %v292
    %v2081 = vmul.f32 %v2047, %v293
    %v2082 = vmul.f32 %v2048, %v294
    %v2083 = vmul.f32 %v2049, %v295
    %v2084 = vmul.f32 %v2050, %v296
    %v2085 = vmul.f32 %v2051, %v297
    %v2086 = vmul.f32 %v2052, %v298
    %v2087 = vmul.f32 %v2053, %v299
    %v2088 = vmul.f32 %v2054, %v300
    %v2089 = vadd.f32 %v2057, %v2058
    %v2090 = vadd.f32 %v2089, %v2059
    %v2091 = vadd.f32 %v2090, %v2060
    %v2092 = vadd.f32 %v2091, %v2061
    %v2093 = vadd.f32 %v2092, %v2062
    %v2094 = vadd.f32 %v2093, %v2063
    %v2095 = vadd.f32 %v2094, %v2064
    %v2096 = vadd.f32 %v2095, %v2065
    %v2097 = vadd.f32 %v2096, %v2066
    %v2098 = vadd.f32 %v2097, %v2067
    %v2099 = vadd.f32 %v2098, %v2068
    %v2100 = vadd.f32 %v2099, %v2069
    %v2101 = vadd.f32 %v2100, %v2070
    %v2102 = vadd.f32 %v2101, %v2071
    %v2103 = vadd.f32 %v2102, %v2072
    %v2104 = vadd.f32 %v2103, %v2073
    %v2105 = vadd.f32 %v2104, %v2074
    %v2106 = vadd.f32 %v2105, %v2075
    %v2107 = vadd.f32 %v2106, %v2076
    %v2108 = vadd.f32 %v2107, %v2077
    %v2109 = vadd.f32 %v2108, %v2078
    %v2110 = vadd.f32 %v2109, %v2079
    %v2111 = vadd.f32 %v2110, %v2080
    %v2112 = vadd.f32 %v2111, %v2081
    %v2113 = vadd.f32 %v2112, %v2082
    %v2114 = vadd.f32 %v2113, %v2083
    %v2115 = vadd.f32 %v2114, %v2084
    %v2116 = vadd.f32 %v2115, %v2085
    %v2117 = vadd.f32 %v2116, %v2086
    %v2118 = vadd.f32 %v2117, %v2087
    %v2119 = vadd.f32 %v2118, %v2088
    %v2120 = vrot.slane %v2119, 4
    %v2121 = vadd.f32 %v2119, %v2120
    %v2122 = vrot.slane %v2121, 2
    %v2123 = vadd.f32 %v2121, %v2122
    %v2124 = vrot.slane %v2123, 1
    %v2125 = vadd.f32 %v2123, %v2124
    %v2126 = vmul.f32 %v2125, 0.00390625
    %v2127 = vsub.f32 %v2023, %v2126
    %v2128 = vsub.f32 %v2024, %v2126
    %v2129 = vsub.f32 %v2025, %v2126
    %v2130 = vsub.f32 %v2026, %v2126
    %v2131 = vsub.f32 %v2027, %v2126
    %v2132 = vsub.f32 %v2028, %v2126
    %v2133 = vsub.f32 %v2029, %v2126
    %v2134 = vsub.f32 %v2030, %v2126
    %v2135 = vsub.f32 %v2031, %v2126
    %v2136 = vsub.f32 %v2032, %v2126
    %v2137 = vsub.f32 %v2033, %v2126
    %v2138 = vsub.f32 %v2034, %v2126
    %v2139 = vsub.f32 %v2035, %v2126
    %v2140 = vsub.f32 %v2036, %v2126
    %v2141 = vsub.f32 %v2037, %v2126
    %v2142 = vsub.f32 %v2038, %v2126
    %v2143 = vsub.f32 %v2039, %v2126
    %v2144 = vsub.f32 %v2040, %v2126
    %v2145 = vsub.f32 %v2041, %v2126
    %v2146 = vsub.f32 %v2042, %v2126
    %v2147 = vsub.f32 %v2043, %v2126
    %v2148 = vsub.f32 %v2044, %v2126
    %v2149 = vsub.f32 %v2045, %v2126
    %v2150 = vsub.f32 %v2046, %v2126
    %v2151 = vsub.f32 %v2047, %v2126
    %v2152 = vsub.f32 %v2048, %v2126
    %v2153 = vsub.f32 %v2049, %v2126
    %v2154 = vsub.f32 %v2050, %v2126
    %v2155 = vsub.f32 %v2051, %v2126
    %v2156 = vsub.f32 %v2052, %v2126
    %v2157 = vsub.f32 %v2053, %v2126
    %v2158 = vsub.f32 %v2054, %v2126
    %v2159 = vmul.f32 %v269, %v2127
    %v2160 = vmul.f32 %v270, %v2128
    %v2161 = vmul.f32 %v271, %v2129
    %v2162 = vmul.f32 %v272, %v2130
    %v2163 = vmul.f32 %v273, %v2131
    %v2164 = vmul.f32 %v274, %v2132
    %v2165 = vmul.f32 %v275, %v2133
    %v2166 = vmul.f32 %v276, %v2134
    %v2167 = vmul.f32 %v277, %v2135
    %v2168 = vmul.f32 %v278, %v2136
    %v2169 = vmul.f32 %v279, %v2137
    %v2170 = vmul.f32 %v280, %v2138
    %v2171 = vmul.f32 %v281, %v2139
    %v2172 = vmul.f32 %v282, %v2140
    %v2173 = vmul.f32 %v283, %v2141
    %v2174 = vmul.f32 %v284, %v2142
    %v2175 = vmul.f32 %v285, %v2143
    %v2176 = vmul.f32 %v286, %v2144
    %v2177 = vmul.f32 %v287, %v2145
    %v2178 = vmul.f32 %v288, %v2146
    %v2179 = vmul.f32 %v289, %v2147
    %v2180 = vmul.f32 %v290, %v2148
    %v2181 = vmul.f32 %v291, %v2149
    %v2182 = vmul.f32 %v292, %v2150
    %v2183 = vmul.f32 %v293, %v2151
    %v2184 = vmul.f32 %v294, %v2152
    %v2185 = vmul.f32 %v295, %v2153
    %v2186 = vmul.f32 %v296, %v2154
    %v2187 = vmul.f32 %v297, %v2155
    %v2188 = vmul.f32 %v298, %v2156
    %v2189 = vmul.f32 %v299, %v2157
    %v2190 = vmul.f32 %v300, %v2158
    %v2191 = vmul.f32 %v2159, %v2127
    %v2192 = vmul.f32 %v2160, %v2128
    %v2193 = vmul.f32 %v2161, %v2129
    %v2194 = vmul.f32 %v2162, %v2130
    %v2195 = vmul.f32 %v2163, %v2131
    %v2196 = vmul.f32 %v2164, %v2132
    %v2197 = vmul.f32 %v2165, %v2133
    %v2198 = vmul.f32 %v2166, %v2134
    %v2199 = vmul.f32 %v2167, %v2135
    %v2200 = vmul.f32 %v2168, %v2136
    %v2201 = vmul.f32 %v2169, %v2137
    %v2202 = vmul.f32 %v2170, %v2138
    %v2203 = vmul.f32 %v2171, %v2139
    %v2204 = vmul.f32 %v2172, %v2140
    %v2205 = vmul.f32 %v2173, %v2141
    %v2206 = vmul.f32 %v2174, %v2142
    %v2207 = vmul.f32 %v2175, %v2143
    %v2208 = vmul.f32 %v2176, %v2144
    %v2209 = vmul.f32 %v2177, %v2145
    %v2210 = vmul.f32 %v2178, %v2146
    %v2211 = vmul.f32 %v2179, %v2147
    %v2212 = vmul.f32 %v2180, %v2148
    %v2213 = vmul.f32 %v2181, %v2149
    %v2214 = vmul.f32 %v2182, %v2150
    %v2215 = vmul.f32 %v2183, %v2151
    %v2216 = vmul.f32 %v2184, %v2152
    %v2217 = vmul.f32 %v2185, %v2153
    %v2218 = vmul.f32 %v2186, %v2154
    %v2219 = vmul.f32 %v2187, %v2155
    %v2220 = vmul.f32 %v2188, %v2156
    %v2221 = vmul.f32 %v2189, %v2157
    %v2222 = vmul.f32 %v2190, %v2158
    %v2223 = vadd.f32 %v2191, %v2192
    %v2224 = vadd.f32 %v2223, %v2193
    %v2225 = vadd.f32 %v2224, %v2194
    %v2226 = vadd.f32 %v2225, %v2195
    %v2227 = vadd.f32 %v2226, %v2196
    %v2228 = vadd.f32 %v2227, %v2197
    %v2229 = vadd.f32 %v2228, %v2198
    %v2230 = vadd.f32 %v2229, %v2199
    %v2231 = vadd.f32 %v2230, %v2200
    %v2232 = vadd.f32 %v2231, %v2201
    %v2233 = vadd.f32 %v2232, %v2202
    %v2234 = vadd.f32 %v2233, %v2203
    %v2235 = vadd.f32 %v2234, %v2204
    %v2236 = vadd.f32 %v2235, %v2205
    %v2237 = vadd.f32 %v2236, %v2206
    %v2238 = vadd.f32 %v2237, %v2207
    %v2239 = vadd.f32 %v2238, %v2208
    %v2240 = vadd.f32 %v2239, %v2209
    %v2241 = vadd.f32 %v2240, %v2210
    %v2242 = vadd.f32 %v2241, %v2211
    %v2243 = vadd.f32 %v2242, %v2212
    %v2244 = vadd.f32 %v2243, %v2213
    %v2245 = vadd.f32 %v2244, %v2214
    %v2246 = vadd.f32 %v2245, %v2215
    %v2247 = vadd.f32 %v2246, %v2216
    %v2248 = vadd.f32 %v2247, %v2217
    %v2249 = vadd.f32 %v2248, %v2218
    %v2250 = vadd.f32 %v2249, %v2219
    %v2251 = vadd.f32 %v2250, %v2220
    %v2252 = vadd.f32 %v2251, %v2221
    %v2253 = vadd.f32 %v2252, %v2222
    %v2254 = vrot.slane %v2253, 4
    %v2255 = vadd.f32 %v2253, %v2254
    %v2256 = vrot.slane %v2255, 2
    %v2257 = vadd.f32 %v2255, %v2256
    %v2258 = vrot.slane %v2257, 1
    %v2259 = vadd.f32 %v2257, %v2258
    %v2260 = vmul.f32 %v2259, 0.00390625
    %v2262 = vlaneseq
    %v2263 = vshrl.u32 %v2262, 7
    %v2264 = vsub.s32 0, %v2263
    %v2265 = vrot.slane %v2055, %v2264
    %v2267 = vmul.f32 %v2265, %v2127
    %v2268 = vmul.f32 %v2265, %v2128
    %v2269 = vmul.f32 %v2265, %v2129
    %v2270 = vmul.f32 %v2265, %v2130
    %v2271 = vmul.f32 %v2265, %v2131
    %v2272 = vmul.f32 %v2265, %v2132
    %v2273 = vmul.f32 %v2265, %v2133
    %v2274 = vmul.f32 %v2265, %v2134
    %v2275 = vmul.f32 %v2265, %v2135
    %v2276 = vmul.f32 %v2265, %v2136
    %v2277 = vmul.f32 %v2265, %v2137
    %v2278 = vmul.f32 %v2265, %v2138
    %v2279 = vmul.f32 %v2265, %v2139
    %v2280 = vmul.f32 %v2265, %v2140
    %v2281 = vmul.f32 %v2265, %v2141
    %v2282 = vmul.f32 %v2265, %v2142
    %v2283 = vmul.f32 %v2265, %v2143
    %v2284 = vmul.f32 %v2265, %v2144
    %v2285 = vmul.f32 %v2265, %v2145
    %v2286 = vmul.f32 %v2265, %v2146
    %v2287 = vmul.f32 %v2265, %v2147
    %v2288 = vmul.f32 %v2265, %v2148
    %v2289 = vmul.f32 %v2265, %v2149
    %v2290 = vmul.f32 %v2265, %v2150
    %v2291 = vmul.f32 %v2265, %v2151
    %v2292 = vmul.f32 %v2265, %v2152
    %v2293 = vmul.f32 %v2265, %v2153
    %v2294 = vmul.f32 %v2265, %v2154
    %v2295 = vmul.f32 %v2265, %v2155
    %v2296 = vmul.f32 %v2265, %v2156
    %v2297 = vmul.f32 %v2265, %v2157
    %v2298 = vmul.f32 %v2265, %v2158
    %v2299 = vadd.f32 %v2260, 1e-05
    %v2300 = vrsqrt.pop %v2299
    %v2301 = vmul.f32 %v2267, %v2300
    %v2302 = vmul.f32 %v2268, %v2300
    %v2303 = vmul.f32 %v2269, %v2300
    %v2304 = vmul.f32 %v2270, %v2300
    %v2305 = vmul.f32 %v2271, %v2300
    %v2306 = vmul.f32 %v2272, %v2300
    %v2307 = vmul.f32 %v2273, %v2300
    %v2308 = vmul.f32 %v2274, %v2300
    %v2309 = vmul.f32 %v2275, %v2300
    %v2310 = vmul.f32 %v2276, %v2300
    %v2311 = vmul.f32 %v2277, %v2300
    %v2312 = vmul.f32 %v2278, %v2300
    %v2313 = vmul.f32 %v2279, %v2300
    %v2314 = vmul.f32 %v2280, %v2300
    %v2315 = vmul.f32 %v2281, %v2300
    %v2316 = vmul.f32 %v2282, %v2300
    %v2317 = vmul.f32 %v2283, %v2300
    %v2318 = vmul.f32 %v2284, %v2300
    %v2319 = vmul.f32 %v2285, %v2300
    %v2320 = vmul.f32 %v2286, %v2300
    %v2321 = vmul.f32 %v2287, %v2300
    %v2322 = vmul.f32 %v2288, %v2300
    %v2323 = vmul.f32 %v2289, %v2300
    %v2324 = vmul.f32 %v2290, %v2300
    %v2325 = vmul.f32 %v2291, %v2300
    %v2326 = vmul.f32 %v2292, %v2300
    %v2327 = vmul.f32 %v2293, %v2300
    %v2328 = vmul.f32 %v2294, %v2300
    %v2329 = vmul.f32 %v2295, %v2300
    %v2330 = vmul.f32 %v2296, %v2300
    %v2331 = vmul.f32 %v2297, %v2300
    %v2332 = vmul.f32 %v2298, %v2300
    %v2334 = vlaneseq
    %v2335 = vshrl.u32 %v2334, 7
    %v2336 = vsub.s32 0, %v2335
    %v2337 = vrot.slane %v2056, %v2336
    %v2339 = vadd.f32 %v2301, %v2337
    %v2340 = vadd.f32 %v2302, %v2337
    %v2341 = vadd.f32 %v2303, %v2337
    %v2342 = vadd.f32 %v2304, %v2337
    %v2343 = vadd.f32 %v2305, %v2337
    %v2344 = vadd.f32 %v2306, %v2337
    %v2345 = vadd.f32 %v2307, %v2337
    %v2346 = vadd.f32 %v2308, %v2337
    %v2347 = vadd.f32 %v2309, %v2337
    %v2348 = vadd.f32 %v2310, %v2337
    %v2349 = vadd.f32 %v2311, %v2337
    %v2350 = vadd.f32 %v2312, %v2337
    %v2351 = vadd.f32 %v2313, %v2337
    %v2352 = vadd.f32 %v2314, %v2337
    %v2353 = vadd.f32 %v2315, %v2337
    %v2354 = vadd.f32 %v2316, %v2337
    %v2355 = vadd.f32 %v2317, %v2337
    %v2356 = vadd.f32 %v2318, %v2337
    %v2357 = vadd.f32 %v2319, %v2337
    %v2358 = vadd.f32 %v2320, %v2337
    %v2359 = vadd.f32 %v2321, %v2337
    %v2360 = vadd.f32 %v2322, %v2337
    %v2361 = vadd.f32 %v2323, %v2337
    %v2362 = vadd.f32 %v2324, %v2337
    %v2363 = vadd.f32 %v2325, %v2337
    %v2364 = vadd.f32 %v2326, %v2337
    %v2365 = vadd.f32 %v2327, %v2337
    %v2366 = vadd.f32 %v2328, %v2337
    %v2367 = vadd.f32 %v2329, %v2337
    %v2368 = vadd.f32 %v2330, %v2337
    %v2369 = vadd.f32 %v2331, %v2337
    %v2370 = vadd.f32 %v2332, %v2337
    %v2371 = vpack.c.bf16 %v2340, %v2339
    %v2372 = vpack.c.bf16 %v2342, %v2341
    %v2373 = vpack.c.bf16 %v2344, %v2343
    %v2374 = vpack.c.bf16 %v2346, %v2345
    %v2375 = vpack.c.bf16 %v2348, %v2347
    %v2376 = vpack.c.bf16 %v2350, %v2349
    %v2377 = vpack.c.bf16 %v2352, %v2351
    %v2378 = vpack.c.bf16 %v2354, %v2353
    %v2379 = vpack.c.bf16 %v2356, %v2355
    %v2380 = vpack.c.bf16 %v2358, %v2357
    %v2381 = vpack.c.bf16 %v2360, %v2359
    %v2382 = vpack.c.bf16 %v2362, %v2361
    %v2383 = vpack.c.bf16 %v2364, %v2363
    %v2384 = vpack.c.bf16 %v2366, %v2365
    %v2385 = vpack.c.bf16 %v2368, %v2367
    %v2386 = vpack.c.bf16 %v2370, %v2369
    %v2387 = vld [vmem:[#allocation7] sm:$0xff]
    %v2388 = vld [vmem:[#allocation7 + $0x8] sm:$0xff]
    %v2389 = vld [vmem:[#allocation7 + $0x10] sm:$0xff]
    %v2390 = vld [vmem:[#allocation7 + $0x18] sm:$0xff]
    %v2391 = vld [vmem:[#allocation7 + $0x20] sm:$0xff]
    %v2392 = vld [vmem:[#allocation7 + $0x28] sm:$0xff]
    %v2393 = vld [vmem:[#allocation7 + $0x30] sm:$0xff]
    %v2394 = vld [vmem:[#allocation7 + $0x38] sm:$0xff]
    %v2395 = vld [vmem:[#allocation7 + $0x40] sm:$0xff]
    %v2396 = vld [vmem:[#allocation7 + $0x48] sm:$0xff]
    %v2397 = vld [vmem:[#allocation7 + $0x50] sm:$0xff]
    %v2398 = vld [vmem:[#allocation7 + $0x58] sm:$0xff]
    %v2399 = vld [vmem:[#allocation7 + $0x60] sm:$0xff]
    %v2400 = vld [vmem:[#allocation7 + $0x68] sm:$0xff]
    %v2401 = vld [vmem:[#allocation7 + $0x70] sm:$0xff]
    %v2402 = vld [vmem:[#allocation7 + $0x78] sm:$0xff]
    %v2403 = vld [vmem:[#allocation8] sm:$0xff]
    %v2404 = vld [vmem:[#allocation8 + $0x8] sm:$0xff]
    %v2405 = vld [vmem:[#allocation8 + $0x10] sm:$0xff]
    %v2406 = vld [vmem:[#allocation8 + $0x18] sm:$0xff]
    %v2407 = vld [vmem:[#allocation8 + $0x20] sm:$0xff]
    %v2408 = vld [vmem:[#allocation8 + $0x28] sm:$0xff]
    %v2409 = vld [vmem:[#allocation8 + $0x30] sm:$0xff]
    %v2410 = vld [vmem:[#allocation8 + $0x38] sm:$0xff]
    %v2411 = vld [vmem:[#allocation8 + $0x40] sm:$0xff]
    %v2412 = vld [vmem:[#allocation8 + $0x48] sm:$0xff]
    %v2413 = vld [vmem:[#allocation8 + $0x50] sm:$0xff]
    %v2414 = vld [vmem:[#allocation8 + $0x58] sm:$0xff]
    %v2415 = vld [vmem:[#allocation8 + $0x60] sm:$0xff]
    %v2416 = vld [vmem:[#allocation8 + $0x68] sm:$0xff]
    %v2417 = vld [vmem:[#allocation8 + $0x70] sm:$0xff]
    %v2418 = vld [vmem:[#allocation8 + $0x78] sm:$0xff]
    %v2435 = vunpack.c.l.b16 %v2403
    %v2436 = vunpack.c.h.b16 %v2403
    %v2437 = vunpack.c.l.b16 %v2404
    %v2438 = vunpack.c.h.b16 %v2404
    %v2439 = vunpack.c.l.b16 %v2405
    %v2440 = vunpack.c.h.b16 %v2405
    %v2441 = vunpack.c.l.b16 %v2406
    %v2442 = vunpack.c.h.b16 %v2406
    %v2443 = vunpack.c.l.b16 %v2407
    %v2444 = vunpack.c.h.b16 %v2407
    %v2445 = vunpack.c.l.b16 %v2408
    %v2446 = vunpack.c.h.b16 %v2408
    %v2447 = vunpack.c.l.b16 %v2409
    %v2448 = vunpack.c.h.b16 %v2409
    %v2449 = vunpack.c.l.b16 %v2410
    %v2450 = vunpack.c.h.b16 %v2410
    %v2451 = vunpack.c.l.b16 %v2411
    %v2452 = vunpack.c.h.b16 %v2411
    %v2453 = vunpack.c.l.b16 %v2412
    %v2454 = vunpack.c.h.b16 %v2412
    %v2455 = vunpack.c.l.b16 %v2413
    %v2456 = vunpack.c.h.b16 %v2413
    %v2457 = vunpack.c.l.b16 %v2414
    %v2458 = vunpack.c.h.b16 %v2414
    %v2459 = vunpack.c.l.b16 %v2415
    %v2460 = vunpack.c.h.b16 %v2415
    %v2461 = vunpack.c.l.b16 %v2416
    %v2462 = vunpack.c.h.b16 %v2416
    %v2463 = vunpack.c.l.b16 %v2417
    %v2464 = vunpack.c.h.b16 %v2417
    %v2465 = vunpack.c.l.b16 %v2418
    %v2466 = vunpack.c.h.b16 %v2418
    %v2467 = vpack.c.b16 %v2437, %v2435
    %v2468 = vpack.c.b16 %v2438, %v2436
    %v2469 = vpack.c.b16 %v2441, %v2439
    %v2470 = vpack.c.b16 %v2442, %v2440
    %v2471 = vpack.c.b16 %v2445, %v2443
    %v2472 = vpack.c.b16 %v2446, %v2444
    %v2473 = vpack.c.b16 %v2449, %v2447
    %v2474 = vpack.c.b16 %v2450, %v2448
    %v2475 = vpack.c.b16 %v2453, %v2451
    %v2476 = vpack.c.b16 %v2454, %v2452
    %v2477 = vpack.c.b16 %v2457, %v2455
    %v2478 = vpack.c.b16 %v2458, %v2456
    %v2479 = vpack.c.b16 %v2461, %v2459
    %v2480 = vpack.c.b16 %v2462, %v2460
    %v2481 = vpack.c.b16 %v2465, %v2463
    %v2482 = vpack.c.b16 %v2466, %v2464
    %2499 = vmatprep.subr.bf16.mxu0 %v2482
    %2500 = vmatpush1.bf16.msra.mxu0 %v2481
    %2501 = vmatprep.subr.bf16.mxu0 %v2480
    %2502 = vmatpush1.bf16.msra.mxu0 %v2479
    %2503 = vmatprep.subr.bf16.mxu0 %v2478
    %2504 = vmatpush1.bf16.msra.mxu0 %v2477
    %2505 = vmatprep.subr.bf16.mxu0 %v2476
    %2506 = vmatpush1.bf16.msra.mxu0 %v2475
    %2507 = vmatprep.subr.bf16.mxu0 %v2474
    %2508 = vmatpush1.bf16.msra.mxu0 %v2473
    %2509 = vmatprep.subr.bf16.mxu0 %v2472
    %2510 = vmatpush1.bf16.msra.mxu0 %v2471
    %2511 = vmatprep.subr.bf16.mxu0 %v2470
    %2512 = vmatpush1.bf16.msra.mxu0 %v2469
    %2513 = vmatprep.subr.bf16.mxu0 %v2468
    %2514 = vmatpush1.bf16.msra.mxu0 %v2467
    %2515 = vmatprep.subr.bf16.mxu0 0
    %2516 = vmatpush2.bf16.msra.mxu0 0
    %2517 = vmatprep.subr.bf16.mxu0 0
    %2518 = vmatpush2.bf16.msra.mxu0 0
    %2519 = vmatprep.subr.bf16.mxu0 0
    %2520 = vmatpush2.bf16.msra.mxu0 0
    %2521 = vmatprep.subr.bf16.mxu0 0
    %2522 = vmatpush2.bf16.msra.mxu0 0
    %2523 = vmatprep.subr.bf16.mxu0 0
    %2524 = vmatpush2.bf16.msra.mxu0 0
    %2525 = vmatprep.subr.bf16.mxu0 0
    %2526 = vmatpush2.bf16.msra.mxu0 0
    %2527 = vmatprep.subr.bf16.mxu0 0
    %2528 = vmatpush2.bf16.msra.mxu0 0
    %2529 = vmatprep.subr.bf16.mxu0 0
    %2530 = vmatpush2.bf16.msra.mxu0 0
    %2531 = vmatprep.mubr.bf16.mxu0 0
    %2532 = vmatmul.mubr.bf16.gmra.mxu0 %v809
    %v2533 = vpop.f32.mrf.mxu0
    %v2534 = vadd.f32 0.0, %v2533
    %v2535 = vpop.f32.mrf.mxu0
    %v2536 = vadd.f32 0.0, %v2535
    %v2537 = vpop.f32.mrf.mxu0
    %v2538 = vadd.f32 0.0, %v2537
    %v2539 = vpop.f32.mrf.mxu0
    %v2540 = vadd.f32 0.0, %v2539
    %2541 = vmatprep.mubr.bf16.mxu0 0
    %2542 = vmatmul.mubr.bf16.gmra.mxu0 %v810
    %v2543 = vpop.f32.mrf.mxu0
    %v2544 = vadd.f32 0.0, %v2543
    %v2545 = vpop.f32.mrf.mxu0
    %v2546 = vadd.f32 0.0, %v2545
    %v2547 = vpop.f32.mrf.mxu0
    %v2548 = vadd.f32 0.0, %v2547
    %v2549 = vpop.f32.mrf.mxu0
    %v2550 = vadd.f32 0.0, %v2549
    %2551 = vmatprep.mubr.bf16.mxu0 0
    %2552 = vmatmul.mubr.bf16.gmra.mxu0 %v811
    %v2553 = vpop.f32.mrf.mxu0
    %v2554 = vadd.f32 0.0, %v2553
    %v2555 = vpop.f32.mrf.mxu0
    %v2556 = vadd.f32 0.0, %v2555
    %v2557 = vpop.f32.mrf.mxu0
    %v2558 = vadd.f32 0.0, %v2557
    %v2559 = vpop.f32.mrf.mxu0
    %v2560 = vadd.f32 0.0, %v2559
    %2561 = vmatprep.mubr.bf16.mxu0 0
    %2562 = vmatmul.mubr.bf16.gmra.mxu0 %v812
    %v2563 = vpop.f32.mrf.mxu0
    %v2564 = vadd.f32 0.0, %v2563
    %v2565 = vpop.f32.mrf.mxu0
    %v2566 = vadd.f32 0.0, %v2565
    %v2567 = vpop.f32.mrf.mxu0
    %v2568 = vadd.f32 0.0, %v2567
    %v2569 = vpop.f32.mrf.mxu0
    %v2570 = vadd.f32 0.0, %v2569
    %2571 = vmatprep.mubr.bf16.mxu0 0
    %2572 = vmatmul.mubr.bf16.gmra.mxu0 %v813
    %v2573 = vpop.f32.mrf.mxu0
    %v2574 = vadd.f32 0.0, %v2573
    %v2575 = vpop.f32.mrf.mxu0
    %v2576 = vadd.f32 0.0, %v2575
    %v2577 = vpop.f32.mrf.mxu0
    %v2578 = vadd.f32 0.0, %v2577
    %v2579 = vpop.f32.mrf.mxu0
    %v2580 = vadd.f32 0.0, %v2579
    %2581 = vmatprep.mubr.bf16.mxu0 0
    %2582 = vmatmul.mubr.bf16.gmra.mxu0 %v814
    %v2583 = vpop.f32.mrf.mxu0
    %v2584 = vadd.f32 0.0, %v2583
    %v2585 = vpop.f32.mrf.mxu0
    %v2586 = vadd.f32 0.0, %v2585
    %v2587 = vpop.f32.mrf.mxu0
    %v2588 = vadd.f32 0.0, %v2587
    %v2589 = vpop.f32.mrf.mxu0
    %v2590 = vadd.f32 0.0, %v2589
    %2591 = vmatprep.mubr.bf16.mxu0 0
    %2592 = vmatmul.mubr.bf16.gmra.mxu0 %v815
    %v2593 = vpop.f32.mrf.mxu0
    %v2594 = vadd.f32 0.0, %v2593
    %v2595 = vpop.f32.mrf.mxu0
    %v2596 = vadd.f32 0.0, %v2595
    %v2597 = vpop.f32.mrf.mxu0
    %v2598 = vadd.f32 0.0, %v2597
    %v2599 = vpop.f32.mrf.mxu0
    %v2600 = vadd.f32 0.0, %v2599
    %2601 = vmatprep.mubr.bf16.mxu0 0
    %2602 = vmatmul.mubr.bf16.gmra.mxu0 %v816
    %v2603 = vpop.f32.mrf.mxu0
    %v2604 = vadd.f32 0.0, %v2603
    %v2605 = vpop.f32.mrf.mxu0
    %v2606 = vadd.f32 0.0, %v2605
    %v2607 = vpop.f32.mrf.mxu0
    %v2608 = vadd.f32 0.0, %v2607
    %v2609 = vpop.f32.mrf.mxu0
    %v2610 = vadd.f32 0.0, %v2609
    %2611 = vmatprep.mubr.bf16.mxu0 0
    %2612 = vmatmul.mubr.bf16.gmra.mxu0 %v817
    %v2613 = vpop.f32.mrf.mxu0
    %v2614 = vadd.f32 0.0, %v2613
    %v2615 = vpop.f32.mrf.mxu0
    %v2616 = vadd.f32 0.0, %v2615
    %v2617 = vpop.f32.mrf.mxu0
    %v2618 = vadd.f32 0.0, %v2617
    %v2619 = vpop.f32.mrf.mxu0
    %v2620 = vadd.f32 0.0, %v2619
    %2621 = vmatprep.mubr.bf16.mxu0 0
    %2622 = vmatmul.mubr.bf16.gmra.mxu0 %v818
    %v2623 = vpop.f32.mrf.mxu0
    %v2624 = vadd.f32 0.0, %v2623
    %v2625 = vpop.f32.mrf.mxu0
    %v2626 = vadd.f32 0.0, %v2625
    %v2627 = vpop.f32.mrf.mxu0
    %v2628 = vadd.f32 0.0, %v2627
    %v2629 = vpop.f32.mrf.mxu0
    %v2630 = vadd.f32 0.0, %v2629
    %2631 = vmatprep.mubr.bf16.mxu0 0
    %2632 = vmatmul.mubr.bf16.gmra.mxu0 %v819
    %v2633 = vpop.f32.mrf.mxu0
    %v2634 = vadd.f32 0.0, %v2633
    %v2635 = vpop.f32.mrf.mxu0
    %v2636 = vadd.f32 0.0, %v2635
    %v2637 = vpop.f32.mrf.mxu0
    %v2638 = vadd.f32 0.0, %v2637
    %v2639 = vpop.f32.mrf.mxu0
    %v2640 = vadd.f32 0.0, %v2639
    %2641 = vmatprep.mubr.bf16.mxu0 0
    %2642 = vmatmul.mubr.bf16.gmra.mxu0 %v820
    %v2643 = vpop.f32.mrf.mxu0
    %v2644 = vadd.f32 0.0, %v2643
    %v2645 = vpop.f32.mrf.mxu0
    %v2646 = vadd.f32 0.0, %v2645
    %v2647 = vpop.f32.mrf.mxu0
    %v2648 = vadd.f32 0.0, %v2647
    %v2649 = vpop.f32.mrf.mxu0
    %v2650 = vadd.f32 0.0, %v2649
    %2651 = vmatprep.mubr.bf16.mxu0 0
    %2652 = vmatmul.mubr.bf16.gmra.mxu0 %v821
    %v2653 = vpop.f32.mrf.mxu0
    %v2654 = vadd.f32 0.0, %v2653
    %v2655 = vpop.f32.mrf.mxu0
    %v2656 = vadd.f32 0.0, %v2655
    %v2657 = vpop.f32.mrf.mxu0
    %v2658 = vadd.f32 0.0, %v2657
    %v2659 = vpop.f32.mrf.mxu0
    %v2660 = vadd.f32 0.0, %v2659
    %2661 = vmatprep.mubr.bf16.mxu0 0
    %2662 = vmatmul.mubr.bf16.gmra.mxu0 %v822
    %v2663 = vpop.f32.mrf.mxu0
    %v2664 = vadd.f32 0.0, %v2663
    %v2665 = vpop.f32.mrf.mxu0
    %v2666 = vadd.f32 0.0, %v2665
    %v2667 = vpop.f32.mrf.mxu0
    %v2668 = vadd.f32 0.0, %v2667
    %v2669 = vpop.f32.mrf.mxu0
    %v2670 = vadd.f32 0.0, %v2669
    %2671 = vmatprep.mubr.bf16.mxu0 0
    %2672 = vmatmul.mubr.bf16.gmra.mxu0 %v823
    %v2673 = vpop.f32.mrf.mxu0
    %v2674 = vadd.f32 0.0, %v2673
    %v2675 = vpop.f32.mrf.mxu0
    %v2676 = vadd.f32 0.0, %v2675
    %v2677 = vpop.f32.mrf.mxu0
    %v2678 = vadd.f32 0.0, %v2677
    %v2679 = vpop.f32.mrf.mxu0
    %v2680 = vadd.f32 0.0, %v2679
    %2681 = vmatprep.mubr.bf16.mxu0 0
    %2682 = vmatmul.mubr.bf16.gmra.mxu0 %v824
    %v2683 = vpop.f32.mrf.mxu0
    %v2684 = vadd.f32 0.0, %v2683
    %v2685 = vpop.f32.mrf.mxu0
    %v2686 = vadd.f32 0.0, %v2685
    %v2687 = vpop.f32.mrf.mxu0
    %v2688 = vadd.f32 0.0, %v2687
    %v2689 = vpop.f32.mrf.mxu0
    %v2690 = vadd.f32 0.0, %v2689
    %2691 = vdwg.mxu0
    %v2708 = vunpack.c.l.b16 %v2387
    %v2709 = vunpack.c.h.b16 %v2387
    %v2710 = vunpack.c.l.b16 %v2388
    %v2711 = vunpack.c.h.b16 %v2388
    %v2712 = vunpack.c.l.b16 %v2389
    %v2713 = vunpack.c.h.b16 %v2389
    %v2714 = vunpack.c.l.b16 %v2390
    %v2715 = vunpack.c.h.b16 %v2390
    %v2716 = vunpack.c.l.b16 %v2391
    %v2717 = vunpack.c.h.b16 %v2391
    %v2718 = vunpack.c.l.b16 %v2392
    %v2719 = vunpack.c.h.b16 %v2392
    %v2720 = vunpack.c.l.b16 %v2393
    %v2721 = vunpack.c.h.b16 %v2393
    %v2722 = vunpack.c.l.b16 %v2394
    %v2723 = vunpack.c.h.b16 %v2394
    %v2724 = vunpack.c.l.b16 %v2395
    %v2725 = vunpack.c.h.b16 %v2395
    %v2726 = vunpack.c.l.b16 %v2396
    %v2727 = vunpack.c.h.b16 %v2396
    %v2728 = vunpack.c.l.b16 %v2397
    %v2729 = vunpack.c.h.b16 %v2397
    %v2730 = vunpack.c.l.b16 %v2398
    %v2731 = vunpack.c.h.b16 %v2398
    %v2732 = vunpack.c.l.b16 %v2399
    %v2733 = vunpack.c.h.b16 %v2399
    %v2734 = vunpack.c.l.b16 %v2400
    %v2735 = vunpack.c.h.b16 %v2400
    %v2736 = vunpack.c.l.b16 %v2401
    %v2737 = vunpack.c.h.b16 %v2401
    %v2738 = vunpack.c.l.b16 %v2402
    %v2739 = vunpack.c.h.b16 %v2402
    %v2740 = vpack.c.b16 %v2710, %v2708
    %v2741 = vpack.c.b16 %v2711, %v2709
    %v2742 = vpack.c.b16 %v2714, %v2712
    %v2743 = vpack.c.b16 %v2715, %v2713
    %v2744 = vpack.c.b16 %v2718, %v2716
    %v2745 = vpack.c.b16 %v2719, %v2717
    %v2746 = vpack.c.b16 %v2722, %v2720
    %v2747 = vpack.c.b16 %v2723, %v2721
    %v2748 = vpack.c.b16 %v2726, %v2724
    %v2749 = vpack.c.b16 %v2727, %v2725
    %v2750 = vpack.c.b16 %v2730, %v2728
    %v2751 = vpack.c.b16 %v2731, %v2729
    %v2752 = vpack.c.b16 %v2734, %v2732
    %v2753 = vpack.c.b16 %v2735, %v2733
    %v2754 = vpack.c.b16 %v2738, %v2736
    %v2755 = vpack.c.b16 %v2739, %v2737
    %2772 = vmatprep.subr.bf16.mxu0 %v2755
    %2773 = vmatpush1.bf16.msra.mxu0 %v2754
    %2774 = vmatprep.subr.bf16.mxu0 %v2753
    %2775 = vmatpush1.bf16.msra.mxu0 %v2752
    %2776 = vmatprep.subr.bf16.mxu0 %v2751
    %2777 = vmatpush1.bf16.msra.mxu0 %v2750
    %2778 = vmatprep.subr.bf16.mxu0 %v2749
    %2779 = vmatpush1.bf16.msra.mxu0 %v2748
    %2780 = vmatprep.subr.bf16.mxu0 %v2747
    %2781 = vmatpush1.bf16.msra.mxu0 %v2746
    %2782 = vmatprep.subr.bf16.mxu0 %v2745
    %2783 = vmatpush1.bf16.msra.mxu0 %v2744
    %2784 = vmatprep.subr.bf16.mxu0 %v2743
    %2785 = vmatpush1.bf16.msra.mxu0 %v2742
    %2786 = vmatprep.subr.bf16.mxu0 %v2741
    %2787 = vmatpush1.bf16.msra.mxu0 %v2740
    %2788 = vmatprep.subr.bf16.mxu0 0
    %2789 = vmatpush2.bf16.msra.mxu0 0
    %2790 = vmatprep.subr.bf16.mxu0 0
    %2791 = vmatpush2.bf16.msra.mxu0 0
    %2792 = vmatprep.subr.bf16.mxu0 0
    %2793 = vmatpush2.bf16.msra.mxu0 0
    %2794 = vmatprep.subr.bf16.mxu0 0
    %2795 = vmatpush2.bf16.msra.mxu0 0
    %2796 = vmatprep.subr.bf16.mxu0 0
    %2797 = vmatpush2.bf16.msra.mxu0 0
    %2798 = vmatprep.subr.bf16.mxu0 0
    %2799 = vmatpush2.bf16.msra.mxu0 0
    %2800 = vmatprep.subr.bf16.mxu0 0
    %2801 = vmatpush2.bf16.msra.mxu0 0
    %2802 = vmatprep.subr.bf16.mxu0 0
    %2803 = vmatpush2.bf16.msra.mxu0 0
    %2804 = vmatprep.mubr.bf16.mxu0 0
    %2805 = vmatmul.mubr.bf16.gmra.mxu0 %v2371
    %v2806 = vpop.f32.mrf.mxu0
    %v2807 = vadd.f32 %v2534, %v2806
    %v2808 = vpop.f32.mrf.mxu0
    %v2809 = vadd.f32 %v2536, %v2808
    %v2810 = vpop.f32.mrf.mxu0
    %v2811 = vadd.f32 %v2538, %v2810
    %v2812 = vpop.f32.mrf.mxu0
    %v2813 = vadd.f32 %v2540, %v2812
    %2814 = vmatprep.mubr.bf16.mxu0 0
    %2815 = vmatmul.mubr.bf16.gmra.mxu0 %v2372
    %v2816 = vpop.f32.mrf.mxu0
    %v2817 = vadd.f32 %v2544, %v2816
    %v2818 = vpop.f32.mrf.mxu0
    %v2819 = vadd.f32 %v2546, %v2818
    %v2820 = vpop.f32.mrf.mxu0
    %v2821 = vadd.f32 %v2548, %v2820
    %v2822 = vpop.f32.mrf.mxu0
    %v2823 = vadd.f32 %v2550, %v2822
    %2824 = vmatprep.mubr.bf16.mxu0 0
    %2825 = vmatmul.mubr.bf16.gmra.mxu0 %v2373
    %v2826 = vpop.f32.mrf.mxu0
    %v2827 = vadd.f32 %v2554, %v2826
    %v2828 = vpop.f32.mrf.mxu0
    %v2829 = vadd.f32 %v2556, %v2828
    %v2830 = vpop.f32.mrf.mxu0
    %v2831 = vadd.f32 %v2558, %v2830
    %v2832 = vpop.f32.mrf.mxu0
    %v2833 = vadd.f32 %v2560, %v2832
    %2834 = vmatprep.mubr.bf16.mxu0 0
    %2835 = vmatmul.mubr.bf16.gmra.mxu0 %v2374
    %v2836 = vpop.f32.mrf.mxu0
    %v2837 = vadd.f32 %v2564, %v2836
    %v2838 = vpop.f32.mrf.mxu0
    %v2839 = vadd.f32 %v2566, %v2838
    %v2840 = vpop.f32.mrf.mxu0
    %v2841 = vadd.f32 %v2568, %v2840
    %v2842 = vpop.f32.mrf.mxu0
    %v2843 = vadd.f32 %v2570, %v2842
    %2844 = vmatprep.mubr.bf16.mxu0 0
    %2845 = vmatmul.mubr.bf16.gmra.mxu0 %v2375
    %v2846 = vpop.f32.mrf.mxu0
    %v2847 = vadd.f32 %v2574, %v2846
    %v2848 = vpop.f32.mrf.mxu0
    %v2849 = vadd.f32 %v2576, %v2848
    %v2850 = vpop.f32.mrf.mxu0
    %v2851 = vadd.f32 %v2578, %v2850
    %v2852 = vpop.f32.mrf.mxu0
    %v2853 = vadd.f32 %v2580, %v2852
    %2854 = vmatprep.mubr.bf16.mxu0 0
    %2855 = vmatmul.mubr.bf16.gmra.mxu0 %v2376
    %v2856 = vpop.f32.mrf.mxu0
    %v2857 = vadd.f32 %v2584, %v2856
    %v2858 = vpop.f32.mrf.mxu0
    %v2859 = vadd.f32 %v2586, %v2858
    %v2860 = vpop.f32.mrf.mxu0
    %v2861 = vadd.f32 %v2588, %v2860
    %v2862 = vpop.f32.mrf.mxu0
    %v2863 = vadd.f32 %v2590, %v2862
    %2864 = vmatprep.mubr.bf16.mxu0 0
    %2865 = vmatmul.mubr.bf16.gmra.mxu0 %v2377
    %v2866 = vpop.f32.mrf.mxu0
    %v2867 = vadd.f32 %v2594, %v2866
    %v2868 = vpop.f32.mrf.mxu0
    %v2869 = vadd.f32 %v2596, %v2868
    %v2870 = vpop.f32.mrf.mxu0
    %v2871 = vadd.f32 %v2598, %v2870
    %v2872 = vpop.f32.mrf.mxu0
    %v2873 = vadd.f32 %v2600, %v2872
    %2874 = vmatprep.mubr.bf16.mxu0 0
    %2875 = vmatmul.mubr.bf16.gmra.mxu0 %v2378
    %v2876 = vpop.f32.mrf.mxu0
    %v2877 = vadd.f32 %v2604, %v2876
    %v2878 = vpop.f32.mrf.mxu0
    %v2879 = vadd.f32 %v2606, %v2878
    %v2880 = vpop.f32.mrf.mxu0
    %v2881 = vadd.f32 %v2608, %v2880
    %v2882 = vpop.f32.mrf.mxu0
    %v2883 = vadd.f32 %v2610, %v2882
    %2884 = vmatprep.mubr.bf16.mxu0 0
    %2885 = vmatmul.mubr.bf16.gmra.mxu0 %v2379
    %v2886 = vpop.f32.mrf.mxu0
    %v2887 = vadd.f32 %v2614, %v2886
    %v2888 = vpop.f32.mrf.mxu0
    %v2889 = vadd.f32 %v2616, %v2888
    %v2890 = vpop.f32.mrf.mxu0
    %v2891 = vadd.f32 %v2618, %v2890
    %v2892 = vpop.f32.mrf.mxu0
    %v2893 = vadd.f32 %v2620, %v2892
    %2894 = vmatprep.mubr.bf16.mxu0 0
    %2895 = vmatmul.mubr.bf16.gmra.mxu0 %v2380
    %v2896 = vpop.f32.mrf.mxu0
    %v2897 = vadd.f32 %v2624, %v2896
    %v2898 = vpop.f32.mrf.mxu0
    %v2899 = vadd.f32 %v2626, %v2898
    %v2900 = vpop.f32.mrf.mxu0
    %v2901 = vadd.f32 %v2628, %v2900
    %v2902 = vpop.f32.mrf.mxu0
    %v2903 = vadd.f32 %v2630, %v2902
    %2904 = vmatprep.mubr.bf16.mxu0 0
    %2905 = vmatmul.mubr.bf16.gmra.mxu0 %v2381
    %v2906 = vpop.f32.mrf.mxu0
    %v2907 = vadd.f32 %v2634, %v2906
    %v2908 = vpop.f32.mrf.mxu0
    %v2909 = vadd.f32 %v2636, %v2908
    %v2910 = vpop.f32.mrf.mxu0
    %v2911 = vadd.f32 %v2638, %v2910
    %v2912 = vpop.f32.mrf.mxu0
    %v2913 = vadd.f32 %v2640, %v2912
    %2914 = vmatprep.mubr.bf16.mxu0 0
    %2915 = vmatmul.mubr.bf16.gmra.mxu0 %v2382
    %v2916 = vpop.f32.mrf.mxu0
    %v2917 = vadd.f32 %v2644, %v2916
    %v2918 = vpop.f32.mrf.mxu0
    %v2919 = vadd.f32 %v2646, %v2918
    %v2920 = vpop.f32.mrf.mxu0
    %v2921 = vadd.f32 %v2648, %v2920
    %v2922 = vpop.f32.mrf.mxu0
    %v2923 = vadd.f32 %v2650, %v2922
    %2924 = vmatprep.mubr.bf16.mxu0 0
    %2925 = vmatmul.mubr.bf16.gmra.mxu0 %v2383
    %v2926 = vpop.f32.mrf.mxu0
    %v2927 = vadd.f32 %v2654, %v2926
    %v2928 = vpop.f32.mrf.mxu0
    %v2929 = vadd.f32 %v2656, %v2928
    %v2930 = vpop.f32.mrf.mxu0
    %v2931 = vadd.f32 %v2658, %v2930
    %v2932 = vpop.f32.mrf.mxu0
    %v2933 = vadd.f32 %v2660, %v2932
    %2934 = vmatprep.mubr.bf16.mxu0 0
    %2935 = vmatmul.mubr.bf16.gmra.mxu0 %v2384
    %v2936 = vpop.f32.mrf.mxu0
    %v2937 = vadd.f32 %v2664, %v2936
    %v2938 = vpop.f32.mrf.mxu0
    %v2939 = vadd.f32 %v2666, %v2938
    %v2940 = vpop.f32.mrf.mxu0
    %v2941 = vadd.f32 %v2668, %v2940
    %v2942 = vpop.f32.mrf.mxu0
    %v2943 = vadd.f32 %v2670, %v2942
    %2944 = vmatprep.mubr.bf16.mxu0 0
    %2945 = vmatmul.mubr.bf16.gmra.mxu0 %v2385
    %v2946 = vpop.f32.mrf.mxu0
    %v2947 = vadd.f32 %v2674, %v2946
    %v2948 = vpop.f32.mrf.mxu0
    %v2949 = vadd.f32 %v2676, %v2948
    %v2950 = vpop.f32.mrf.mxu0
    %v2951 = vadd.f32 %v2678, %v2950
    %v2952 = vpop.f32.mrf.mxu0
    %v2953 = vadd.f32 %v2680, %v2952
    %2954 = vmatprep.mubr.bf16.mxu0 0
    %2955 = vmatmul.mubr.bf16.gmra.mxu0 %v2386
    %v2956 = vpop.f32.mrf.mxu0
    %v2957 = vadd.f32 %v2684, %v2956
    %v2958 = vpop.f32.mrf.mxu0
    %v2959 = vadd.f32 %v2686, %v2958
    %v2960 = vpop.f32.mrf.mxu0
    %v2961 = vadd.f32 %v2688, %v2960
    %v2962 = vpop.f32.mrf.mxu0
    %v2963 = vadd.f32 %v2690, %v2962
    %2964 = vdwg.mxu0
    %v2965 = vld [vmem:[%s10] sm:$0x3]
    %v2967 = vlaneseq
    %v2968 = vshrl.u32 %v2967, 7
    %v2969 = vsub.s32 0, %v2968
    %v2970 = vrot.slane %v2965, %v2969
    %v2971 = vlaneseq
    %v2972 = vshrl.u32 %v2971, 7
    %v2973 = vsub.s32 1, %v2972
    %v2974 = vrot.slane %v2965, %v2973
    %v2977 = vadd.f32 %v2807, %v2970
    %v2978 = vadd.f32 %v2809, %v2974
    %v2979 = vadd.f32 %v2811, %v2970
    %v2980 = vadd.f32 %v2813, %v2974
    %v2981 = vadd.f32 %v2817, %v2970
    %v2982 = vadd.f32 %v2819, %v2974
    %v2983 = vadd.f32 %v2821, %v2970
    %v2984 = vadd.f32 %v2823, %v2974
    %v2985 = vadd.f32 %v2827, %v2970
    %v2986 = vadd.f32 %v2829, %v2974
    %v2987 = vadd.f32 %v2831, %v2970
    %v2988 = vadd.f32 %v2833, %v2974
    %v2989 = vadd.f32 %v2837, %v2970
    %v2990 = vadd.f32 %v2839, %v2974
    %v2991 = vadd.f32 %v2841, %v2970
    %v2992 = vadd.f32 %v2843, %v2974
    %v2993 = vadd.f32 %v2847, %v2970
    %v2994 = vadd.f32 %v2849, %v2974
    %v2995 = vadd.f32 %v2851, %v2970
    %v2996 = vadd.f32 %v2853, %v2974
    %v2997 = vadd.f32 %v2857, %v2970
    %v2998 = vadd.f32 %v2859, %v2974
    %v2999 = vadd.f32 %v2861, %v2970
    %v3000 = vadd.f32 %v2863, %v2974
    %v3001 = vadd.f32 %v2867, %v2970
    %v3002 = vadd.f32 %v2869, %v2974
    %v3003 = vadd.f32 %v2871, %v2970
    %v3004 = vadd.f32 %v2873, %v2974
    %v3005 = vadd.f32 %v2877, %v2970
    %v3006 = vadd.f32 %v2879, %v2974
    %v3007 = vadd.f32 %v2881, %v2970
    %v3008 = vadd.f32 %v2883, %v2974
    %v3009 = vadd.f32 %v2887, %v2970
    %v3010 = vadd.f32 %v2889, %v2974
    %v3011 = vadd.f32 %v2891, %v2970
    %v3012 = vadd.f32 %v2893, %v2974
    %v3013 = vadd.f32 %v2897, %v2970
    %v3014 = vadd.f32 %v2899, %v2974
    %v3015 = vadd.f32 %v2901, %v2970
    %v3016 = vadd.f32 %v2903, %v2974
    %v3017 = vadd.f32 %v2907, %v2970
    %v3018 = vadd.f32 %v2909, %v2974
    %v3019 = vadd.f32 %v2911, %v2970
    %v3020 = vadd.f32 %v2913, %v2974
    %v3021 = vadd.f32 %v2917, %v2970
    %v3022 = vadd.f32 %v2919, %v2974
    %v3023 = vadd.f32 %v2921, %v2970
    %v3024 = vadd.f32 %v2923, %v2974
    %v3025 = vadd.f32 %v2927, %v2970
    %v3026 = vadd.f32 %v2929, %v2974
    %v3027 = vadd.f32 %v2931, %v2970
    %v3028 = vadd.f32 %v2933, %v2974
    %v3029 = vadd.f32 %v2937, %v2970
    %v3030 = vadd.f32 %v2939, %v2974
    %v3031 = vadd.f32 %v2941, %v2970
    %v3032 = vadd.f32 %v2943, %v2974
    %v3033 = vadd.f32 %v2947, %v2970
    %v3034 = vadd.f32 %v2949, %v2974
    %v3035 = vadd.f32 %v2951, %v2970
    %v3036 = vadd.f32 %v2953, %v2974
    %v3037 = vadd.f32 %v2957, %v2970
    %v3038 = vadd.f32 %v2959, %v2974
    %v3039 = vadd.f32 %v2961, %v2970
    %v3040 = vadd.f32 %v2963, %v2974
    %v3041 = vmul.f32 %v1273, %v2977
    %v3042 = vmul.f32 %v1278, %v2979
    %v3043 = vmul.f32 %v1283, %v2981
    %v3044 = vmul.f32 %v1288, %v2983
    %v3045 = vmul.f32 %v1293, %v2985
    %v3046 = vmul.f32 %v1298, %v2987
    %v3047 = vmul.f32 %v1303, %v2989
    %v3048 = vmul.f32 %v1308, %v2991
    %v3049 = vmul.f32 %v1313, %v2993
    %v3050 = vmul.f32 %v1318, %v2995
    %v3051 = vmul.f32 %v1323, %v2997
    %v3052 = vmul.f32 %v1328, %v2999
    %v3053 = vmul.f32 %v1333, %v3001
    %v3054 = vmul.f32 %v1338, %v3003
    %v3055 = vmul.f32 %v1343, %v3005
    %v3056 = vmul.f32 %v1348, %v3007
    %v3057 = vmul.f32 %v1353, %v3009
    %v3058 = vmul.f32 %v1358, %v3011
    %v3059 = vmul.f32 %v1363, %v3013
    %v3060 = vmul.f32 %v1368, %v3015
    %v3061 = vmul.f32 %v1373, %v3017
    %v3062 = vmul.f32 %v1378, %v3019
    %v3063 = vmul.f32 %v1383, %v3021
    %v3064 = vmul.f32 %v1388, %v3023
    %v3065 = vmul.f32 %v1393, %v3025
    %v3066 = vmul.f32 %v1398, %v3027
    %v3067 = vmul.f32 %v1403, %v3029
    %v3068 = vmul.f32 %v1408, %v3031
    %v3069 = vmul.f32 %v1413, %v3033
    %v3070 = vmul.f32 %v1418, %v3035
    %v3071 = vmul.f32 %v1423, %v3037
    %v3072 = vmul.f32 %v1428, %v3039
    %v3073 = vmul.f32 %v1465, %v2978
    %v3074 = vmul.f32 %v1470, %v2980
    %v3075 = vmul.f32 %v1475, %v2982
    %v3076 = vmul.f32 %v1480, %v2984
    %v3077 = vmul.f32 %v1485, %v2986
    %v3078 = vmul.f32 %v1490, %v2988
    %v3079 = vmul.f32 %v1495, %v2990
    %v3080 = vmul.f32 %v1500, %v2992
    %v3081 = vmul.f32 %v1505, %v2994
    %v3082 = vmul.f32 %v1510, %v2996
    %v3083 = vmul.f32 %v1515, %v2998
    %v3084 = vmul.f32 %v1520, %v3000
    %v3085 = vmul.f32 %v1525, %v3002
    %v3086 = vmul.f32 %v1530, %v3004
    %v3087 = vmul.f32 %v1535, %v3006
    %v3088 = vmul.f32 %v1540, %v3008
    %v3089 = vmul.f32 %v1545, %v3010
    %v3090 = vmul.f32 %v1550, %v3012
    %v3091 = vmul.f32 %v1555, %v3014
    %v3092 = vmul.f32 %v1560, %v3016
    %v3093 = vmul.f32 %v1565, %v3018
    %v3094 = vmul.f32 %v1570, %v3020
    %v3095 = vmul.f32 %v1575, %v3022
    %v3096 = vmul.f32 %v1580, %v3024
    %v3097 = vmul.f32 %v1585, %v3026
    %v3098 = vmul.f32 %v1590, %v3028
    %v3099 = vmul.f32 %v1595, %v3030
    %v3100 = vmul.f32 %v1600, %v3032
    %v3101 = vmul.f32 %v1605, %v3034
    %v3102 = vmul.f32 %v1610, %v3036
    %v3103 = vmul.f32 %v1615, %v3038
    %v3104 = vmul.f32 %v1620, %v3040
    %v3105 = vadd.f32 %v3041, %v3073
    %v3106 = vadd.f32 %v3042, %v3074
    %v3107 = vadd.f32 %v3043, %v3075
    %v3108 = vadd.f32 %v3044, %v3076
    %v3109 = vadd.f32 %v3045, %v3077
    %v3110 = vadd.f32 %v3046, %v3078
    %v3111 = vadd.f32 %v3047, %v3079
    %v3112 = vadd.f32 %v3048, %v3080
    %v3113 = vadd.f32 %v3049, %v3081
    %v3114 = vadd.f32 %v3050, %v3082
    %v3115 = vadd.f32 %v3051, %v3083
    %v3116 = vadd.f32 %v3052, %v3084
    %v3117 = vadd.f32 %v3053, %v3085
    %v3118 = vadd.f32 %v3054, %v3086
    %v3119 = vadd.f32 %v3055, %v3087
    %v3120 = vadd.f32 %v3056, %v3088
    %v3121 = vadd.f32 %v3057, %v3089
    %v3122 = vadd.f32 %v3058, %v3090
    %v3123 = vadd.f32 %v3059, %v3091
    %v3124 = vadd.f32 %v3060, %v3092
    %v3125 = vadd.f32 %v3061, %v3093
    %v3126 = vadd.f32 %v3062, %v3094
    %v3127 = vadd.f32 %v3063, %v3095
    %v3128 = vadd.f32 %v3064, %v3096
    %v3129 = vadd.f32 %v3065, %v3097
    %v3130 = vadd.f32 %v3066, %v3098
    %v3131 = vadd.f32 %v3067, %v3099
    %v3132 = vadd.f32 %v3068, %v3100
    %v3133 = vadd.f32 %v3069, %v3101
    %v3134 = vadd.f32 %v3070, %v3102
    %v3135 = vadd.f32 %v3071, %v3103
    %v3136 = vadd.f32 %v3072, %v3104
    %v3137 = vld [vmem:[%s13] sm:$0x1]
    %v3138 = vld [vmem:[%s14] sm:$0x1]
    %v3139 = vmul.f32 %v3105, %v269
    %v3140 = vmul.f32 %v3106, %v270
    %v3141 = vmul.f32 %v3107, %v271
    %v3142 = vmul.f32 %v3108, %v272
    %v3143 = vmul.f32 %v3109, %v273
    %v3144 = vmul.f32 %v3110, %v274
    %v3145 = vmul.f32 %v3111, %v275
    %v3146 = vmul.f32 %v3112, %v276
    %v3147 = vmul.f32 %v3113, %v277
    %v3148 = vmul.f32 %v3114, %v278
    %v3149 = vmul.f32 %v3115, %v279
    %v3150 = vmul.f32 %v3116, %v280
    %v3151 = vmul.f32 %v3117, %v281
    %v3152 = vmul.f32 %v3118, %v282
    %v3153 = vmul.f32 %v3119, %v283
    %v3154 = vmul.f32 %v3120, %v284
    %v3155 = vmul.f32 %v3121, %v285
    %v3156 = vmul.f32 %v3122, %v286
    %v3157 = vmul.f32 %v3123, %v287
    %v3158 = vmul.f32 %v3124, %v288
    %v3159 = vmul.f32 %v3125, %v289
    %v3160 = vmul.f32 %v3126, %v290
    %v3161 = vmul.f32 %v3127, %v291
    %v3162 = vmul.f32 %v3128, %v292
    %v3163 = vmul.f32 %v3129, %v293
    %v3164 = vmul.f32 %v3130, %v294
    %v3165 = vmul.f32 %v3131, %v295
    %v3166 = vmul.f32 %v3132, %v296
    %v3167 = vmul.f32 %v3133, %v297
    %v3168 = vmul.f32 %v3134, %v298
    %v3169 = vmul.f32 %v3135, %v299
    %v3170 = vmul.f32 %v3136, %v300
    %v3171 = vadd.f32 %v3139, %v3140
    %v3172 = vadd.f32 %v3171, %v3141
    %v3173 = vadd.f32 %v3172, %v3142
    %v3174 = vadd.f32 %v3173, %v3143
    %v3175 = vadd.f32 %v3174, %v3144
    %v3176 = vadd.f32 %v3175, %v3145
    %v3177 = vadd.f32 %v3176, %v3146
    %v3178 = vadd.f32 %v3177, %v3147
    %v3179 = vadd.f32 %v3178, %v3148
    %v3180 = vadd.f32 %v3179, %v3149
    %v3181 = vadd.f32 %v3180, %v3150
    %v3182 = vadd.f32 %v3181, %v3151
    %v3183 = vadd.f32 %v3182, %v3152
    %v3184 = vadd.f32 %v3183, %v3153
    %v3185 = vadd.f32 %v3184, %v3154
    %v3186 = vadd.f32 %v3185, %v3155
    %v3187 = vadd.f32 %v3186, %v3156
    %v3188 = vadd.f32 %v3187, %v3157
    %v3189 = vadd.f32 %v3188, %v3158
    %v3190 = vadd.f32 %v3189, %v3159
    %v3191 = vadd.f32 %v3190, %v3160
    %v3192 = vadd.f32 %v3191, %v3161
    %v3193 = vadd.f32 %v3192, %v3162
    %v3194 = vadd.f32 %v3193, %v3163
    %v3195 = vadd.f32 %v3194, %v3164
    %v3196 = vadd.f32 %v3195, %v3165
    %v3197 = vadd.f32 %v3196, %v3166
    %v3198 = vadd.f32 %v3197, %v3167
    %v3199 = vadd.f32 %v3198, %v3168
    %v3200 = vadd.f32 %v3199, %v3169
    %v3201 = vadd.f32 %v3200, %v3170
    %v3202 = vrot.slane %v3201, 4
    %v3203 = vadd.f32 %v3201, %v3202
    %v3204 = vrot.slane %v3203, 2
    %v3205 = vadd.f32 %v3203, %v3204
    %v3206 = vrot.slane %v3205, 1
    %v3207 = vadd.f32 %v3205, %v3206
    %v3208 = vmul.f32 %v3207, 0.00390625
    %v3209 = vsub.f32 %v3105, %v3208
    %v3210 = vsub.f32 %v3106, %v3208
    %v3211 = vsub.f32 %v3107, %v3208
    %v3212 = vsub.f32 %v3108, %v3208
    %v3213 = vsub.f32 %v3109, %v3208
    %v3214 = vsub.f32 %v3110, %v3208
    %v3215 = vsub.f32 %v3111, %v3208
    %v3216 = vsub.f32 %v3112, %v3208
    %v3217 = vsub.f32 %v3113, %v3208
    %v3218 = vsub.f32 %v3114, %v3208
    %v3219 = vsub.f32 %v3115, %v3208
    %v3220 = vsub.f32 %v3116, %v3208
    %v3221 = vsub.f32 %v3117, %v3208
    %v3222 = vsub.f32 %v3118, %v3208
    %v3223 = vsub.f32 %v3119, %v3208
    %v3224 = vsub.f32 %v3120, %v3208
    %v3225 = vsub.f32 %v3121, %v3208
    %v3226 = vsub.f32 %v3122, %v3208
    %v3227 = vsub.f32 %v3123, %v3208
    %v3228 = vsub.f32 %v3124, %v3208
    %v3229 = vsub.f32 %v3125, %v3208
    %v3230 = vsub.f32 %v3126, %v3208
    %v3231 = vsub.f32 %v3127, %v3208
    %v3232 = vsub.f32 %v3128, %v3208
    %v3233 = vsub.f32 %v3129, %v3208
    %v3234 = vsub.f32 %v3130, %v3208
    %v3235 = vsub.f32 %v3131, %v3208
    %v3236 = vsub.f32 %v3132, %v3208
    %v3237 = vsub.f32 %v3133, %v3208
    %v3238 = vsub.f32 %v3134, %v3208
    %v3239 = vsub.f32 %v3135, %v3208
    %v3240 = vsub.f32 %v3136, %v3208
    %v3241 = vmul.f32 %v269, %v3209
    %v3242 = vmul.f32 %v270, %v3210
    %v3243 = vmul.f32 %v271, %v3211
    %v3244 = vmul.f32 %v272, %v3212
    %v3245 = vmul.f32 %v273, %v3213
    %v3246 = vmul.f32 %v274, %v3214
    %v3247 = vmul.f32 %v275, %v3215
    %v3248 = vmul.f32 %v276, %v3216
    %v3249 = vmul.f32 %v277, %v3217
    %v3250 = vmul.f32 %v278, %v3218
    %v3251 = vmul.f32 %v279, %v3219
    %v3252 = vmul.f32 %v280, %v3220
    %v3253 = vmul.f32 %v281, %v3221
    %v3254 = vmul.f32 %v282, %v3222
    %v3255 = vmul.f32 %v283, %v3223
    %v3256 = vmul.f32 %v284, %v3224
    %v3257 = vmul.f32 %v285, %v3225
    %v3258 = vmul.f32 %v286, %v3226
    %v3259 = vmul.f32 %v287, %v3227
    %v3260 = vmul.f32 %v288, %v3228
    %v3261 = vmul.f32 %v289, %v3229
    %v3262 = vmul.f32 %v290, %v3230
    %v3263 = vmul.f32 %v291, %v3231
    %v3264 = vmul.f32 %v292, %v3232
    %v3265 = vmul.f32 %v293, %v3233
    %v3266 = vmul.f32 %v294, %v3234
    %v3267 = vmul.f32 %v295, %v3235
    %v3268 = vmul.f32 %v296, %v3236
    %v3269 = vmul.f32 %v297, %v3237
    %v3270 = vmul.f32 %v298, %v3238
    %v3271 = vmul.f32 %v299, %v3239
    %v3272 = vmul.f32 %v300, %v3240
    %v3273 = vmul.f32 %v3241, %v3209
    %v3274 = vmul.f32 %v3242, %v3210
    %v3275 = vmul.f32 %v3243, %v3211
    %v3276 = vmul.f32 %v3244, %v3212
    %v3277 = vmul.f32 %v3245, %v3213
    %v3278 = vmul.f32 %v3246, %v3214
    %v3279 = vmul.f32 %v3247, %v3215
    %v3280 = vmul.f32 %v3248, %v3216
    %v3281 = vmul.f32 %v3249, %v3217
    %v3282 = vmul.f32 %v3250, %v3218
    %v3283 = vmul.f32 %v3251, %v3219
    %v3284 = vmul.f32 %v3252, %v3220
    %v3285 = vmul.f32 %v3253, %v3221
    %v3286 = vmul.f32 %v3254, %v3222
    %v3287 = vmul.f32 %v3255, %v3223
    %v3288 = vmul.f32 %v3256, %v3224
    %v3289 = vmul.f32 %v3257, %v3225
    %v3290 = vmul.f32 %v3258, %v3226
    %v3291 = vmul.f32 %v3259, %v3227
    %v3292 = vmul.f32 %v3260, %v3228
    %v3293 = vmul.f32 %v3261, %v3229
    %v3294 = vmul.f32 %v3262, %v3230
    %v3295 = vmul.f32 %v3263, %v3231
    %v3296 = vmul.f32 %v3264, %v3232
    %v3297 = vmul.f32 %v3265, %v3233
    %v3298 = vmul.f32 %v3266, %v3234
    %v3299 = vmul.f32 %v3267, %v3235
    %v3300 = vmul.f32 %v3268, %v3236
    %v3301 = vmul.f32 %v3269, %v3237
    %v3302 = vmul.f32 %v3270, %v3238
    %v3303 = vmul.f32 %v3271, %v3239
    %v3304 = vmul.f32 %v3272, %v3240
    %v3305 = vadd.f32 %v3273, %v3274
    %v3306 = vadd.f32 %v3305, %v3275
    %v3307 = vadd.f32 %v3306, %v3276
    %v3308 = vadd.f32 %v3307, %v3277
    %v3309 = vadd.f32 %v3308, %v3278
    %v3310 = vadd.f32 %v3309, %v3279
    %v3311 = vadd.f32 %v3310, %v3280
    %v3312 = vadd.f32 %v3311, %v3281
    %v3313 = vadd.f32 %v3312, %v3282
    %v3314 = vadd.f32 %v3313, %v3283
    %v3315 = vadd.f32 %v3314, %v3284
    %v3316 = vadd.f32 %v3315, %v3285
    %v3317 = vadd.f32 %v3316, %v3286
    %v3318 = vadd.f32 %v3317, %v3287
    %v3319 = vadd.f32 %v3318, %v3288
    %v3320 = vadd.f32 %v3319, %v3289
    %v3321 = vadd.f32 %v3320, %v3290
    %v3322 = vadd.f32 %v3321, %v3291
    %v3323 = vadd.f32 %v3322, %v3292
    %v3324 = vadd.f32 %v3323, %v3293
    %v3325 = vadd.f32 %v3324, %v3294
    %v3326 = vadd.f32 %v3325, %v3295
    %v3327 = vadd.f32 %v3326, %v3296
    %v3328 = vadd.f32 %v3327, %v3297
    %v3329 = vadd.f32 %v3328, %v3298
    %v3330 = vadd.f32 %v3329, %v3299
    %v3331 = vadd.f32 %v3330, %v3300
    %v3332 = vadd.f32 %v3331, %v3301
    %v3333 = vadd.f32 %v3332, %v3302
    %v3334 = vadd.f32 %v3333, %v3303
    %v3335 = vadd.f32 %v3334, %v3304
    %v3336 = vrot.slane %v3335, 4
    %v3337 = vadd.f32 %v3335, %v3336
    %v3338 = vrot.slane %v3337, 2
    %v3339 = vadd.f32 %v3337, %v3338
    %v3340 = vrot.slane %v3339, 1
    %v3341 = vadd.f32 %v3339, %v3340
    %v3342 = vmul.f32 %v3341, 0.00390625
    %v3344 = vlaneseq
    %v3345 = vshrl.u32 %v3344, 7
    %v3346 = vsub.s32 0, %v3345
    %v3347 = vrot.slane %v3137, %v3346
    %v3349 = vmul.f32 %v3347, %v3209
    %v3350 = vmul.f32 %v3347, %v3210
    %v3351 = vmul.f32 %v3347, %v3211
    %v3352 = vmul.f32 %v3347, %v3212
    %v3353 = vmul.f32 %v3347, %v3213
    %v3354 = vmul.f32 %v3347, %v3214
    %v3355 = vmul.f32 %v3347, %v3215
    %v3356 = vmul.f32 %v3347, %v3216
    %v3357 = vmul.f32 %v3347, %v3217
    %v3358 = vmul.f32 %v3347, %v3218
    %v3359 = vmul.f32 %v3347, %v3219
    %v3360 = vmul.f32 %v3347, %v3220
    %v3361 = vmul.f32 %v3347, %v3221
    %v3362 = vmul.f32 %v3347, %v3222
    %v3363 = vmul.f32 %v3347, %v3223
    %v3364 = vmul.f32 %v3347, %v3224
    %v3365 = vmul.f32 %v3347, %v3225
    %v3366 = vmul.f32 %v3347, %v3226
    %v3367 = vmul.f32 %v3347, %v3227
    %v3368 = vmul.f32 %v3347, %v3228
    %v3369 = vmul.f32 %v3347, %v3229
    %v3370 = vmul.f32 %v3347, %v3230
    %v3371 = vmul.f32 %v3347, %v3231
    %v3372 = vmul.f32 %v3347, %v3232
    %v3373 = vmul.f32 %v3347, %v3233
    %v3374 = vmul.f32 %v3347, %v3234
    %v3375 = vmul.f32 %v3347, %v3235
    %v3376 = vmul.f32 %v3347, %v3236
    %v3377 = vmul.f32 %v3347, %v3237
    %v3378 = vmul.f32 %v3347, %v3238
    %v3379 = vmul.f32 %v3347, %v3239
    %v3380 = vmul.f32 %v3347, %v3240
    %v3381 = vadd.f32 %v3342, 1e-05
    %v3382 = vrsqrt.pop %v3381
    %v3383 = vmul.f32 %v3349, %v3382
    %v3384 = vmul.f32 %v3350, %v3382
    %v3385 = vmul.f32 %v3351, %v3382
    %v3386 = vmul.f32 %v3352, %v3382
    %v3387 = vmul.f32 %v3353, %v3382
    %v3388 = vmul.f32 %v3354, %v3382
    %v3389 = vmul.f32 %v3355, %v3382
    %v3390 = vmul.f32 %v3356, %v3382
    %v3391 = vmul.f32 %v3357, %v3382
    %v3392 = vmul.f32 %v3358, %v3382
    %v3393 = vmul.f32 %v3359, %v3382
    %v3394 = vmul.f32 %v3360, %v3382
    %v3395 = vmul.f32 %v3361, %v3382
    %v3396 = vmul.f32 %v3362, %v3382
    %v3397 = vmul.f32 %v3363, %v3382
    %v3398 = vmul.f32 %v3364, %v3382
    %v3399 = vmul.f32 %v3365, %v3382
    %v3400 = vmul.f32 %v3366, %v3382
    %v3401 = vmul.f32 %v3367, %v3382
    %v3402 = vmul.f32 %v3368, %v3382
    %v3403 = vmul.f32 %v3369, %v3382
    %v3404 = vmul.f32 %v3370, %v3382
    %v3405 = vmul.f32 %v3371, %v3382
    %v3406 = vmul.f32 %v3372, %v3382
    %v3407 = vmul.f32 %v3373, %v3382
    %v3408 = vmul.f32 %v3374, %v3382
    %v3409 = vmul.f32 %v3375, %v3382
    %v3410 = vmul.f32 %v3376, %v3382
    %v3411 = vmul.f32 %v3377, %v3382
    %v3412 = vmul.f32 %v3378, %v3382
    %v3413 = vmul.f32 %v3379, %v3382
    %v3414 = vmul.f32 %v3380, %v3382
    %v3416 = vlaneseq
    %v3417 = vshrl.u32 %v3416, 7
    %v3418 = vsub.s32 0, %v3417
    %v3419 = vrot.slane %v3138, %v3418
    %v3421 = vadd.f32 %v3383, %v3419
    %v3422 = vadd.f32 %v3384, %v3419
    %v3423 = vadd.f32 %v3385, %v3419
    %v3424 = vadd.f32 %v3386, %v3419
    %v3425 = vadd.f32 %v3387, %v3419
    %v3426 = vadd.f32 %v3388, %v3419
    %v3427 = vadd.f32 %v3389, %v3419
    %v3428 = vadd.f32 %v3390, %v3419
    %v3429 = vadd.f32 %v3391, %v3419
    %v3430 = vadd.f32 %v3392, %v3419
    %v3431 = vadd.f32 %v3393, %v3419
    %v3432 = vadd.f32 %v3394, %v3419
    %v3433 = vadd.f32 %v3395, %v3419
    %v3434 = vadd.f32 %v3396, %v3419
    %v3435 = vadd.f32 %v3397, %v3419
    %v3436 = vadd.f32 %v3398, %v3419
    %v3437 = vadd.f32 %v3399, %v3419
    %v3438 = vadd.f32 %v3400, %v3419
    %v3439 = vadd.f32 %v3401, %v3419
    %v3440 = vadd.f32 %v3402, %v3419
    %v3441 = vadd.f32 %v3403, %v3419
    %v3442 = vadd.f32 %v3404, %v3419
    %v3443 = vadd.f32 %v3405, %v3419
    %v3444 = vadd.f32 %v3406, %v3419
    %v3445 = vadd.f32 %v3407, %v3419
    %v3446 = vadd.f32 %v3408, %v3419
    %v3447 = vadd.f32 %v3409, %v3419
    %v3448 = vadd.f32 %v3410, %v3419
    %v3449 = vadd.f32 %v3411, %v3419
    %v3450 = vadd.f32 %v3412, %v3419
    %v3451 = vadd.f32 %v3413, %v3419
    %v3452 = vadd.f32 %v3414, %v3419
    %v3453 = vmax.f32 %v3421, 0.0
    %v3454 = vmax.f32 %v3422, 0.0
    %v3455 = vmax.f32 %v3423, 0.0
    %v3456 = vmax.f32 %v3424, 0.0
    %v3457 = vmax.f32 %v3425, 0.0
    %v3458 = vmax.f32 %v3426, 0.0
    %v3459 = vmax.f32 %v3427, 0.0
    %v3460 = vmax.f32 %v3428, 0.0
    %v3461 = vmax.f32 %v3429, 0.0
    %v3462 = vmax.f32 %v3430, 0.0
    %v3463 = vmax.f32 %v3431, 0.0
    %v3464 = vmax.f32 %v3432, 0.0
    %v3465 = vmax.f32 %v3433, 0.0
    %v3466 = vmax.f32 %v3434, 0.0
    %v3467 = vmax.f32 %v3435, 0.0
    %v3468 = vmax.f32 %v3436, 0.0
    %v3469 = vmax.f32 %v3437, 0.0
    %v3470 = vmax.f32 %v3438, 0.0
    %v3471 = vmax.f32 %v3439, 0.0
    %v3472 = vmax.f32 %v3440, 0.0
    %v3473 = vmax.f32 %v3441, 0.0
    %v3474 = vmax.f32 %v3442, 0.0
    %v3475 = vmax.f32 %v3443, 0.0
    %v3476 = vmax.f32 %v3444, 0.0
    %v3477 = vmax.f32 %v3445, 0.0
    %v3478 = vmax.f32 %v3446, 0.0
    %v3479 = vmax.f32 %v3447, 0.0
    %v3480 = vmax.f32 %v3448, 0.0
    %v3481 = vmax.f32 %v3449, 0.0
    %v3482 = vmax.f32 %v3450, 0.0
    %v3483 = vmax.f32 %v3451, 0.0
    %v3484 = vmax.f32 %v3452, 0.0
    %v3485 = vpack.c.bf16 %v3454, %v3453
    %v3486 = vpack.c.bf16 %v3456, %v3455
    %v3487 = vpack.c.bf16 %v3458, %v3457
    %v3488 = vpack.c.bf16 %v3460, %v3459
    %v3489 = vpack.c.bf16 %v3462, %v3461
    %v3490 = vpack.c.bf16 %v3464, %v3463
    %v3491 = vpack.c.bf16 %v3466, %v3465
    %v3492 = vpack.c.bf16 %v3468, %v3467
    %v3493 = vpack.c.bf16 %v3470, %v3469
    %v3494 = vpack.c.bf16 %v3472, %v3471
    %v3495 = vpack.c.bf16 %v3474, %v3473
    %v3496 = vpack.c.bf16 %v3476, %v3475
    %v3497 = vpack.c.bf16 %v3478, %v3477
    %v3498 = vpack.c.bf16 %v3480, %v3479
    %v3499 = vpack.c.bf16 %v3482, %v3481
    %v3500 = vpack.c.bf16 %v3484, %v3483
    %v3501 = vld [vmem:[#allocation10] sm:$0xff]
    %v3502 = vld [vmem:[#allocation10 + $0x8] sm:$0xff]
    %v3503 = vld [vmem:[#allocation10 + $0x10] sm:$0xff]
    %v3504 = vld [vmem:[#allocation10 + $0x18] sm:$0xff]
    %v3505 = vld [vmem:[#allocation10 + $0x20] sm:$0xff]
    %v3506 = vld [vmem:[#allocation10 + $0x28] sm:$0xff]
    %v3507 = vld [vmem:[#allocation10 + $0x30] sm:$0xff]
    %v3508 = vld [vmem:[#allocation10 + $0x38] sm:$0xff]
    %v3509 = vld [vmem:[#allocation10 + $0x40] sm:$0xff]
    %v3510 = vld [vmem:[#allocation10 + $0x48] sm:$0xff]
    %v3511 = vld [vmem:[#allocation10 + $0x50] sm:$0xff]
    %v3512 = vld [vmem:[#allocation10 + $0x58] sm:$0xff]
    %v3513 = vld [vmem:[#allocation10 + $0x60] sm:$0xff]
    %v3514 = vld [vmem:[#allocation10 + $0x68] sm:$0xff]
    %v3515 = vld [vmem:[#allocation10 + $0x70] sm:$0xff]
    %v3516 = vld [vmem:[#allocation10 + $0x78] sm:$0xff]
    %v3517 = vld [vmem:[%s16] sm:$0x3]
    %v3519 = vlaneseq
    %v3520 = vshrl.u32 %v3519, 7
    %v3521 = vsub.s32 0, %v3520
    %v3522 = vrot.slane %v3517, %v3521
    %v3523 = vlaneseq
    %v3524 = vshrl.u32 %v3523, 7
    %v3525 = vsub.s32 1, %v3524
    %v3526 = vrot.slane %v3517, %v3525
    %v3545 = vunpack.c.l.b16 %v3501
    %v3546 = vunpack.c.h.b16 %v3501
    %v3547 = vunpack.c.l.b16 %v3502
    %v3548 = vunpack.c.h.b16 %v3502
    %v3549 = vunpack.c.l.b16 %v3503
    %v3550 = vunpack.c.h.b16 %v3503
    %v3551 = vunpack.c.l.b16 %v3504
    %v3552 = vunpack.c.h.b16 %v3504
    %v3553 = vunpack.c.l.b16 %v3505
    %v3554 = vunpack.c.h.b16 %v3505
    %v3555 = vunpack.c.l.b16 %v3506
    %v3556 = vunpack.c.h.b16 %v3506
    %v3557 = vunpack.c.l.b16 %v3507
    %v3558 = vunpack.c.h.b16 %v3507
    %v3559 = vunpack.c.l.b16 %v3508
    %v3560 = vunpack.c.h.b16 %v3508
    %v3561 = vunpack.c.l.b16 %v3509
    %v3562 = vunpack.c.h.b16 %v3509
    %v3563 = vunpack.c.l.b16 %v3510
    %v3564 = vunpack.c.h.b16 %v3510
    %v3565 = vunpack.c.l.b16 %v3511
    %v3566 = vunpack.c.h.b16 %v3511
    %v3567 = vunpack.c.l.b16 %v3512
    %v3568 = vunpack.c.h.b16 %v3512
    %v3569 = vunpack.c.l.b16 %v3513
    %v3570 = vunpack.c.h.b16 %v3513
    %v3571 = vunpack.c.l.b16 %v3514
    %v3572 = vunpack.c.h.b16 %v3514
    %v3573 = vunpack.c.l.b16 %v3515
    %v3574 = vunpack.c.h.b16 %v3515
    %v3575 = vunpack.c.l.b16 %v3516
    %v3576 = vunpack.c.h.b16 %v3516
    %v3577 = vpack.c.b16 %v3547, %v3545
    %v3578 = vpack.c.b16 %v3548, %v3546
    %v3579 = vpack.c.b16 %v3551, %v3549
    %v3580 = vpack.c.b16 %v3552, %v3550
    %v3581 = vpack.c.b16 %v3555, %v3553
    %v3582 = vpack.c.b16 %v3556, %v3554
    %v3583 = vpack.c.b16 %v3559, %v3557
    %v3584 = vpack.c.b16 %v3560, %v3558
    %v3585 = vpack.c.b16 %v3563, %v3561
    %v3586 = vpack.c.b16 %v3564, %v3562
    %v3587 = vpack.c.b16 %v3567, %v3565
    %v3588 = vpack.c.b16 %v3568, %v3566
    %v3589 = vpack.c.b16 %v3571, %v3569
    %v3590 = vpack.c.b16 %v3572, %v3570
    %v3591 = vpack.c.b16 %v3575, %v3573
    %v3592 = vpack.c.b16 %v3576, %v3574
    %3609 = vmatprep.subr.bf16.mxu0 %v3592
    %3610 = vmatpush1.bf16.msra.mxu0 %v3591
    %3611 = vmatprep.subr.bf16.mxu0 %v3590
    %3612 = vmatpush1.bf16.msra.mxu0 %v3589
    %3613 = vmatprep.subr.bf16.mxu0 %v3588
    %3614 = vmatpush1.bf16.msra.mxu0 %v3587
    %3615 = vmatprep.subr.bf16.mxu0 %v3586
    %3616 = vmatpush1.bf16.msra.mxu0 %v3585
    %3617 = vmatprep.subr.bf16.mxu0 %v3584
    %3618 = vmatpush1.bf16.msra.mxu0 %v3583
    %3619 = vmatprep.subr.bf16.mxu0 %v3582
    %3620 = vmatpush1.bf16.msra.mxu0 %v3581
    %3621 = vmatprep.subr.bf16.mxu0 %v3580
    %3622 = vmatpush1.bf16.msra.mxu0 %v3579
    %3623 = vmatprep.subr.bf16.mxu0 %v3578
    %3624 = vmatpush1.bf16.msra.mxu0 %v3577
    %3625 = vmatprep.subr.bf16.mxu0 0
    %3626 = vmatpush2.bf16.msra.mxu0 0
    %3627 = vmatprep.subr.bf16.mxu0 0
    %3628 = vmatpush2.bf16.msra.mxu0 0
    %3629 = vmatprep.subr.bf16.mxu0 0
    %3630 = vmatpush2.bf16.msra.mxu0 0
    %3631 = vmatprep.subr.bf16.mxu0 0
    %3632 = vmatpush2.bf16.msra.mxu0 0
    %3633 = vmatprep.subr.bf16.mxu0 0
    %3634 = vmatpush2.bf16.msra.mxu0 0
    %3635 = vmatprep.subr.bf16.mxu0 0
    %3636 = vmatpush2.bf16.msra.mxu0 0
    %3637 = vmatprep.subr.bf16.mxu0 0
    %3638 = vmatpush2.bf16.msra.mxu0 0
    %3639 = vmatprep.subr.bf16.mxu0 0
    %3640 = vmatpush2.bf16.msra.mxu0 0
    %3641 = vmatprep.mubr.bf16.mxu0 0
    %3642 = vmatmul.mubr.bf16.gmra.mxu0 %v3485
    %v3643 = vpop.f32.mrf.mxu0
    %v3644 = vadd.f32 %v3522, %v3643
    %v3645 = vpop.f32.mrf.mxu0
    %v3646 = vadd.f32 %v3526, %v3645
    %v3647 = vpop.f32.mrf.mxu0
    %v3648 = vadd.f32 %v3522, %v3647
    %v3649 = vpop.f32.mrf.mxu0
    %v3650 = vadd.f32 %v3526, %v3649
    %3651 = vmatprep.mubr.bf16.mxu0 0
    %3652 = vmatmul.mubr.bf16.gmra.mxu0 %v3486
    %v3653 = vpop.f32.mrf.mxu0
    %v3654 = vadd.f32 %v3522, %v3653
    %v3655 = vpop.f32.mrf.mxu0
    %v3656 = vadd.f32 %v3526, %v3655
    %v3657 = vpop.f32.mrf.mxu0
    %v3658 = vadd.f32 %v3522, %v3657
    %v3659 = vpop.f32.mrf.mxu0
    %v3660 = vadd.f32 %v3526, %v3659
    %3661 = vmatprep.mubr.bf16.mxu0 0
    %3662 = vmatmul.mubr.bf16.gmra.mxu0 %v3487
    %v3663 = vpop.f32.mrf.mxu0
    %v3664 = vadd.f32 %v3522, %v3663
    %v3665 = vpop.f32.mrf.mxu0
    %v3666 = vadd.f32 %v3526, %v3665
    %v3667 = vpop.f32.mrf.mxu0
    %v3668 = vadd.f32 %v3522, %v3667
    %v3669 = vpop.f32.mrf.mxu0
    %v3670 = vadd.f32 %v3526, %v3669
    %3671 = vmatprep.mubr.bf16.mxu0 0
    %3672 = vmatmul.mubr.bf16.gmra.mxu0 %v3488
    %v3673 = vpop.f32.mrf.mxu0
    %v3674 = vadd.f32 %v3522, %v3673
    %v3675 = vpop.f32.mrf.mxu0
    %v3676 = vadd.f32 %v3526, %v3675
    %v3677 = vpop.f32.mrf.mxu0
    %v3678 = vadd.f32 %v3522, %v3677
    %v3679 = vpop.f32.mrf.mxu0
    %v3680 = vadd.f32 %v3526, %v3679
    %3681 = vmatprep.mubr.bf16.mxu0 0
    %3682 = vmatmul.mubr.bf16.gmra.mxu0 %v3489
    %v3683 = vpop.f32.mrf.mxu0
    %v3684 = vadd.f32 %v3522, %v3683
    %v3685 = vpop.f32.mrf.mxu0
    %v3686 = vadd.f32 %v3526, %v3685
    %v3687 = vpop.f32.mrf.mxu0
    %v3688 = vadd.f32 %v3522, %v3687
    %v3689 = vpop.f32.mrf.mxu0
    %v3690 = vadd.f32 %v3526, %v3689
    %3691 = vmatprep.mubr.bf16.mxu0 0
    %3692 = vmatmul.mubr.bf16.gmra.mxu0 %v3490
    %v3693 = vpop.f32.mrf.mxu0
    %v3694 = vadd.f32 %v3522, %v3693
    %v3695 = vpop.f32.mrf.mxu0
    %v3696 = vadd.f32 %v3526, %v3695
    %v3697 = vpop.f32.mrf.mxu0
    %v3698 = vadd.f32 %v3522, %v3697
    %v3699 = vpop.f32.mrf.mxu0
    %v3700 = vadd.f32 %v3526, %v3699
    %3701 = vmatprep.mubr.bf16.mxu0 0
    %3702 = vmatmul.mubr.bf16.gmra.mxu0 %v3491
    %v3703 = vpop.f32.mrf.mxu0
    %v3704 = vadd.f32 %v3522, %v3703
    %v3705 = vpop.f32.mrf.mxu0
    %v3706 = vadd.f32 %v3526, %v3705
    %v3707 = vpop.f32.mrf.mxu0
    %v3708 = vadd.f32 %v3522, %v3707
    %v3709 = vpop.f32.mrf.mxu0
    %v3710 = vadd.f32 %v3526, %v3709
    %3711 = vmatprep.mubr.bf16.mxu0 0
    %3712 = vmatmul.mubr.bf16.gmra.mxu0 %v3492
    %v3713 = vpop.f32.mrf.mxu0
    %v3714 = vadd.f32 %v3522, %v3713
    %v3715 = vpop.f32.mrf.mxu0
    %v3716 = vadd.f32 %v3526, %v3715
    %v3717 = vpop.f32.mrf.mxu0
    %v3718 = vadd.f32 %v3522, %v3717
    %v3719 = vpop.f32.mrf.mxu0
    %v3720 = vadd.f32 %v3526, %v3719
    %3721 = vmatprep.mubr.bf16.mxu0 0
    %3722 = vmatmul.mubr.bf16.gmra.mxu0 %v3493
    %v3723 = vpop.f32.mrf.mxu0
    %v3724 = vadd.f32 %v3522, %v3723
    %v3725 = vpop.f32.mrf.mxu0
    %v3726 = vadd.f32 %v3526, %v3725
    %v3727 = vpop.f32.mrf.mxu0
    %v3728 = vadd.f32 %v3522, %v3727
    %v3729 = vpop.f32.mrf.mxu0
    %v3730 = vadd.f32 %v3526, %v3729
    %3731 = vmatprep.mubr.bf16.mxu0 0
    %3732 = vmatmul.mubr.bf16.gmra.mxu0 %v3494
    %v3733 = vpop.f32.mrf.mxu0
    %v3734 = vadd.f32 %v3522, %v3733
    %v3735 = vpop.f32.mrf.mxu0
    %v3736 = vadd.f32 %v3526, %v3735
    %v3737 = vpop.f32.mrf.mxu0
    %v3738 = vadd.f32 %v3522, %v3737
    %v3739 = vpop.f32.mrf.mxu0
    %v3740 = vadd.f32 %v3526, %v3739
    %3741 = vmatprep.mubr.bf16.mxu0 0
    %3742 = vmatmul.mubr.bf16.gmra.mxu0 %v3495
    %v3743 = vpop.f32.mrf.mxu0
    %v3744 = vadd.f32 %v3522, %v3743
    %v3745 = vpop.f32.mrf.mxu0
    %v3746 = vadd.f32 %v3526, %v3745
    %v3747 = vpop.f32.mrf.mxu0
    %v3748 = vadd.f32 %v3522, %v3747
    %v3749 = vpop.f32.mrf.mxu0
    %v3750 = vadd.f32 %v3526, %v3749
    %3751 = vmatprep.mubr.bf16.mxu0 0
    %3752 = vmatmul.mubr.bf16.gmra.mxu0 %v3496
    %v3753 = vpop.f32.mrf.mxu0
    %v3754 = vadd.f32 %v3522, %v3753
    %v3755 = vpop.f32.mrf.mxu0
    %v3756 = vadd.f32 %v3526, %v3755
    %v3757 = vpop.f32.mrf.mxu0
    %v3758 = vadd.f32 %v3522, %v3757
    %v3759 = vpop.f32.mrf.mxu0
    %v3760 = vadd.f32 %v3526, %v3759
    %3761 = vmatprep.mubr.bf16.mxu0 0
    %3762 = vmatmul.mubr.bf16.gmra.mxu0 %v3497
    %v3763 = vpop.f32.mrf.mxu0
    %v3764 = vadd.f32 %v3522, %v3763
    %v3765 = vpop.f32.mrf.mxu0
    %v3766 = vadd.f32 %v3526, %v3765
    %v3767 = vpop.f32.mrf.mxu0
    %v3768 = vadd.f32 %v3522, %v3767
    %v3769 = vpop.f32.mrf.mxu0
    %v3770 = vadd.f32 %v3526, %v3769
    %3771 = vmatprep.mubr.bf16.mxu0 0
    %3772 = vmatmul.mubr.bf16.gmra.mxu0 %v3498
    %v3773 = vpop.f32.mrf.mxu0
    %v3774 = vadd.f32 %v3522, %v3773
    %v3775 = vpop.f32.mrf.mxu0
    %v3776 = vadd.f32 %v3526, %v3775
    %v3777 = vpop.f32.mrf.mxu0
    %v3778 = vadd.f32 %v3522, %v3777
    %v3779 = vpop.f32.mrf.mxu0
    %v3780 = vadd.f32 %v3526, %v3779
    %3781 = vmatprep.mubr.bf16.mxu0 0
    %3782 = vmatmul.mubr.bf16.gmra.mxu0 %v3499
    %v3783 = vpop.f32.mrf.mxu0
    %v3784 = vadd.f32 %v3522, %v3783
    %v3785 = vpop.f32.mrf.mxu0
    %v3786 = vadd.f32 %v3526, %v3785
    %v3787 = vpop.f32.mrf.mxu0
    %v3788 = vadd.f32 %v3522, %v3787
    %v3789 = vpop.f32.mrf.mxu0
    %v3790 = vadd.f32 %v3526, %v3789
    %3791 = vmatprep.mubr.bf16.mxu0 0
    %3792 = vmatmul.mubr.bf16.gmra.mxu0 %v3500
    %v3793 = vpop.f32.mrf.mxu0
    %v3794 = vadd.f32 %v3522, %v3793
    %v3795 = vpop.f32.mrf.mxu0
    %v3796 = vadd.f32 %v3526, %v3795
    %v3797 = vpop.f32.mrf.mxu0
    %v3798 = vadd.f32 %v3522, %v3797
    %v3799 = vpop.f32.mrf.mxu0
    %v3800 = vadd.f32 %v3526, %v3799
    %3801 = vdwg.mxu0
    %v3802 = vmax.f32 %v3644, 0.0
    %v3803 = vmax.f32 %v3646, 0.0
    %v3804 = vmax.f32 %v3648, 0.0
    %v3805 = vmax.f32 %v3650, 0.0
    %v3806 = vmax.f32 %v3654, 0.0
    %v3807 = vmax.f32 %v3656, 0.0
    %v3808 = vmax.f32 %v3658, 0.0
    %v3809 = vmax.f32 %v3660, 0.0
    %v3810 = vmax.f32 %v3664, 0.0
    %v3811 = vmax.f32 %v3666, 0.0
    %v3812 = vmax.f32 %v3668, 0.0
    %v3813 = vmax.f32 %v3670, 0.0
    %v3814 = vmax.f32 %v3674, 0.0
    %v3815 = vmax.f32 %v3676, 0.0
    %v3816 = vmax.f32 %v3678, 0.0
    %v3817 = vmax.f32 %v3680, 0.0
    %v3818 = vmax.f32 %v3684, 0.0
    %v3819 = vmax.f32 %v3686, 0.0
    %v3820 = vmax.f32 %v3688, 0.0
    %v3821 = vmax.f32 %v3690, 0.0
    %v3822 = vmax.f32 %v3694, 0.0
    %v3823 = vmax.f32 %v3696, 0.0
    %v3824 = vmax.f32 %v3698, 0.0
    %v3825 = vmax.f32 %v3700, 0.0
    %v3826 = vmax.f32 %v3704, 0.0
    %v3827 = vmax.f32 %v3706, 0.0
    %v3828 = vmax.f32 %v3708, 0.0
    %v3829 = vmax.f32 %v3710, 0.0
    %v3830 = vmax.f32 %v3714, 0.0
    %v3831 = vmax.f32 %v3716, 0.0
    %v3832 = vmax.f32 %v3718, 0.0
    %v3833 = vmax.f32 %v3720, 0.0
    %v3834 = vmax.f32 %v3724, 0.0
    %v3835 = vmax.f32 %v3726, 0.0
    %v3836 = vmax.f32 %v3728, 0.0
    %v3837 = vmax.f32 %v3730, 0.0
    %v3838 = vmax.f32 %v3734, 0.0
    %v3839 = vmax.f32 %v3736, 0.0
    %v3840 = vmax.f32 %v3738, 0.0
    %v3841 = vmax.f32 %v3740, 0.0
    %v3842 = vmax.f32 %v3744, 0.0
    %v3843 = vmax.f32 %v3746, 0.0
    %v3844 = vmax.f32 %v3748, 0.0
    %v3845 = vmax.f32 %v3750, 0.0
    %v3846 = vmax.f32 %v3754, 0.0
    %v3847 = vmax.f32 %v3756, 0.0
    %v3848 = vmax.f32 %v3758, 0.0
    %v3849 = vmax.f32 %v3760, 0.0
    %v3850 = vmax.f32 %v3764, 0.0
    %v3851 = vmax.f32 %v3766, 0.0
    %v3852 = vmax.f32 %v3768, 0.0
    %v3853 = vmax.f32 %v3770, 0.0
    %v3854 = vmax.f32 %v3774, 0.0
    %v3855 = vmax.f32 %v3776, 0.0
    %v3856 = vmax.f32 %v3778, 0.0
    %v3857 = vmax.f32 %v3780, 0.0
    %v3858 = vmax.f32 %v3784, 0.0
    %v3859 = vmax.f32 %v3786, 0.0
    %v3860 = vmax.f32 %v3788, 0.0
    %v3861 = vmax.f32 %v3790, 0.0
    %v3862 = vmax.f32 %v3794, 0.0
    %v3863 = vmax.f32 %v3796, 0.0
    %v3864 = vmax.f32 %v3798, 0.0
    %v3865 = vmax.f32 %v3800, 0.0
    %v3866 = vmul.f32 %v1273, %v3802
    %v3867 = vmul.f32 %v1278, %v3804
    %v3868 = vmul.f32 %v1283, %v3806
    %v3869 = vmul.f32 %v1288, %v3808
    %v3870 = vmul.f32 %v1293, %v3810
    %v3871 = vmul.f32 %v1298, %v3812
    %v3872 = vmul.f32 %v1303, %v3814
    %v3873 = vmul.f32 %v1308, %v3816
    %v3874 = vmul.f32 %v1313, %v3818
    %v3875 = vmul.f32 %v1318, %v3820
    %v3876 = vmul.f32 %v1323, %v3822
    %v3877 = vmul.f32 %v1328, %v3824
    %v3878 = vmul.f32 %v1333, %v3826
    %v3879 = vmul.f32 %v1338, %v3828
    %v3880 = vmul.f32 %v1343, %v3830
    %v3881 = vmul.f32 %v1348, %v3832
    %v3882 = vmul.f32 %v1353, %v3834
    %v3883 = vmul.f32 %v1358, %v3836
    %v3884 = vmul.f32 %v1363, %v3838
    %v3885 = vmul.f32 %v1368, %v3840
    %v3886 = vmul.f32 %v1373, %v3842
    %v3887 = vmul.f32 %v1378, %v3844
    %v3888 = vmul.f32 %v1383, %v3846
    %v3889 = vmul.f32 %v1388, %v3848
    %v3890 = vmul.f32 %v1393, %v3850
    %v3891 = vmul.f32 %v1398, %v3852
    %v3892 = vmul.f32 %v1403, %v3854
    %v3893 = vmul.f32 %v1408, %v3856
    %v3894 = vmul.f32 %v1413, %v3858
    %v3895 = vmul.f32 %v1418, %v3860
    %v3896 = vmul.f32 %v1423, %v3862
    %v3897 = vmul.f32 %v1428, %v3864
    %v3898 = vmul.f32 %v1465, %v3803
    %v3899 = vmul.f32 %v1470, %v3805
    %v3900 = vmul.f32 %v1475, %v3807
    %v3901 = vmul.f32 %v1480, %v3809
    %v3902 = vmul.f32 %v1485, %v3811
    %v3903 = vmul.f32 %v1490, %v3813
    %v3904 = vmul.f32 %v1495, %v3815
    %v3905 = vmul.f32 %v1500, %v3817
    %v3906 = vmul.f32 %v1505, %v3819
    %v3907 = vmul.f32 %v1510, %v3821
    %v3908 = vmul.f32 %v1515, %v3823
    %v3909 = vmul.f32 %v1520, %v3825
    %v3910 = vmul.f32 %v1525, %v3827
    %v3911 = vmul.f32 %v1530, %v3829
    %v3912 = vmul.f32 %v1535, %v3831
    %v3913 = vmul.f32 %v1540, %v3833
    %v3914 = vmul.f32 %v1545, %v3835
    %v3915 = vmul.f32 %v1550, %v3837
    %v3916 = vmul.f32 %v1555, %v3839
    %v3917 = vmul.f32 %v1560, %v3841
    %v3918 = vmul.f32 %v1565, %v3843
    %v3919 = vmul.f32 %v1570, %v3845
    %v3920 = vmul.f32 %v1575, %v3847
    %v3921 = vmul.f32 %v1580, %v3849
    %v3922 = vmul.f32 %v1585, %v3851
    %v3923 = vmul.f32 %v1590, %v3853
    %v3924 = vmul.f32 %v1595, %v3855
    %v3925 = vmul.f32 %v1600, %v3857
    %v3926 = vmul.f32 %v1605, %v3859
    %v3927 = vmul.f32 %v1610, %v3861
    %v3928 = vmul.f32 %v1615, %v3863
    %v3929 = vmul.f32 %v1620, %v3865
    %v3930 = vadd.f32 %v3866, %v3898
    %v3931 = vadd.f32 %v3867, %v3899
    %v3932 = vadd.f32 %v3868, %v3900
    %v3933 = vadd.f32 %v3869, %v3901
    %v3934 = vadd.f32 %v3870, %v3902
    %v3935 = vadd.f32 %v3871, %v3903
    %v3936 = vadd.f32 %v3872, %v3904
    %v3937 = vadd.f32 %v3873, %v3905
    %v3938 = vadd.f32 %v3874, %v3906
    %v3939 = vadd.f32 %v3875, %v3907
    %v3940 = vadd.f32 %v3876, %v3908
    %v3941 = vadd.f32 %v3877, %v3909
    %v3942 = vadd.f32 %v3878, %v3910
    %v3943 = vadd.f32 %v3879, %v3911
    %v3944 = vadd.f32 %v3880, %v3912
    %v3945 = vadd.f32 %v3881, %v3913
    %v3946 = vadd.f32 %v3882, %v3914
    %v3947 = vadd.f32 %v3883, %v3915
    %v3948 = vadd.f32 %v3884, %v3916
    %v3949 = vadd.f32 %v3885, %v3917
    %v3950 = vadd.f32 %v3886, %v3918
    %v3951 = vadd.f32 %v3887, %v3919
    %v3952 = vadd.f32 %v3888, %v3920
    %v3953 = vadd.f32 %v3889, %v3921
    %v3954 = vadd.f32 %v3890, %v3922
    %v3955 = vadd.f32 %v3891, %v3923
    %v3956 = vadd.f32 %v3892, %v3924
    %v3957 = vadd.f32 %v3893, %v3925
    %v3958 = vadd.f32 %v3894, %v3926
    %v3959 = vadd.f32 %v3895, %v3927
    %v3960 = vadd.f32 %v3896, %v3928
    %v3961 = vadd.f32 %v3897, %v3929
    %v3962 = vpack.c.bf16 %v3931, %v3930
    %v3963 = vpack.c.bf16 %v3933, %v3932
    %v3964 = vpack.c.bf16 %v3935, %v3934
    %v3965 = vpack.c.bf16 %v3937, %v3936
    %v3966 = vpack.c.bf16 %v3939, %v3938
    %v3967 = vpack.c.bf16 %v3941, %v3940
    %v3968 = vpack.c.bf16 %v3943, %v3942
    %v3969 = vpack.c.bf16 %v3945, %v3944
    %v3970 = vpack.c.bf16 %v3947, %v3946
    %v3971 = vpack.c.bf16 %v3949, %v3948
    %v3972 = vpack.c.bf16 %v3951, %v3950
    %v3973 = vpack.c.bf16 %v3953, %v3952
    %v3974 = vpack.c.bf16 %v3955, %v3954
    %v3975 = vpack.c.bf16 %v3957, %v3956
    %v3976 = vpack.c.bf16 %v3959, %v3958
    %v3977 = vpack.c.bf16 %v3961, %v3960
    %3978 = vmatprep.subr.bf16.mxu0 0
    %3979 = vmatpush1.bf16.msra.mxu0 %v3969
    %3980 = vmatprep.subr.bf16.mxu0 0
    %3981 = vmatpush1.bf16.msra.mxu0 %v3968
    %3982 = vmatprep.subr.bf16.mxu0 0
    %3983 = vmatpush1.bf16.msra.mxu0 %v3967
    %3984 = vmatprep.subr.bf16.mxu0 0
    %3985 = vmatpush1.bf16.msra.mxu0 %v3966
    %3986 = vmatprep.subr.bf16.mxu0 0
    %3987 = vmatpush1.bf16.msra.mxu0 %v3965
    %3988 = vmatprep.subr.bf16.mxu0 0
    %3989 = vmatpush1.bf16.msra.mxu0 %v3964
    %3990 = vmatprep.subr.bf16.mxu0 0
    %3991 = vmatpush1.bf16.msra.mxu0 %v3963
    %3992 = vmatprep.subr.bf16.mxu0 0
    %3993 = vmatpush1.bf16.msra.mxu0 %v3962
    %3994 = vmatprep.subr.bf16.mxu0 0
    %3995 = vmatpush2.bf16.msra.mxu0 %v3977
    %3996 = vmatprep.subr.bf16.mxu0 0
    %3997 = vmatpush2.bf16.msra.mxu0 %v3976
    %3998 = vmatprep.subr.bf16.mxu0 0
    %3999 = vmatpush2.bf16.msra.mxu0 %v3975
    %4000 = vmatprep.subr.bf16.mxu0 0
    %4001 = vmatpush2.bf16.msra.mxu0 %v3974
    %4002 = vmatprep.subr.bf16.mxu0 0
    %4003 = vmatpush2.bf16.msra.mxu0 %v3973
    %4004 = vmatprep.subr.bf16.mxu0 0
    %4005 = vmatpush2.bf16.msra.mxu0 %v3972
    %4006 = vmatprep.subr.bf16.mxu0 0
    %4007 = vmatpush2.bf16.msra.mxu0 %v3971
    %4008 = vmatprep.subr.bf16.mxu0 0
    %4009 = vmatpush2.bf16.msra.mxu0 %v3970
    %4010 = vmatprep.mubr.bf16.mxu0 %v842
    %4011 = vmatmul.mubr.bf16.gmra.mxu0 %v841
    %v4012 = vpop.f32.mrf.mxu0
    %v4013 = vadd.f32 0.0, %v4012
    %v4014 = vpop.f32.mrf.mxu0
    %v4015 = vpop.f32.mrf.mxu0
    %v4016 = vadd.f32 0.0, %v4015
    %v4017 = vpop.f32.mrf.mxu0
    %4018 = vmatprep.mubr.bf16.mxu0 %v844
    %4019 = vmatmul.mubr.bf16.gmra.mxu0 %v843
    %v4020 = vpop.f32.mrf.mxu0
    %v4021 = vadd.f32 0.0, %v4020
    %v4022 = vpop.f32.mrf.mxu0
    %v4023 = vpop.f32.mrf.mxu0
    %v4024 = vadd.f32 0.0, %v4023
    %v4025 = vpop.f32.mrf.mxu0
    %4026 = vmatprep.mubr.bf16.mxu0 %v846
    %4027 = vmatmul.mubr.bf16.gmra.mxu0 %v845
    %v4028 = vpop.f32.mrf.mxu0
    %v4029 = vadd.f32 0.0, %v4028
    %v4030 = vpop.f32.mrf.mxu0
    %v4031 = vpop.f32.mrf.mxu0
    %v4032 = vadd.f32 0.0, %v4031
    %v4033 = vpop.f32.mrf.mxu0
    %4034 = vmatprep.mubr.bf16.mxu0 %v848
    %4035 = vmatmul.mubr.bf16.gmra.mxu0 %v847
    %v4036 = vpop.f32.mrf.mxu0
    %v4037 = vadd.f32 0.0, %v4036
    %v4038 = vpop.f32.mrf.mxu0
    %v4039 = vpop.f32.mrf.mxu0
    %v4040 = vadd.f32 0.0, %v4039
    %v4041 = vpop.f32.mrf.mxu0
    %4042 = vmatprep.mubr.bf16.mxu0 %v850
    %4043 = vmatmul.mubr.bf16.gmra.mxu0 %v849
    %v4044 = vpop.f32.mrf.mxu0
    %v4045 = vadd.f32 0.0, %v4044
    %v4046 = vpop.f32.mrf.mxu0
    %v4047 = vpop.f32.mrf.mxu0
    %v4048 = vadd.f32 0.0, %v4047
    %v4049 = vpop.f32.mrf.mxu0
    %4050 = vmatprep.mubr.bf16.mxu0 %v852
    %4051 = vmatmul.mubr.bf16.gmra.mxu0 %v851
    %v4052 = vpop.f32.mrf.mxu0
    %v4053 = vadd.f32 0.0, %v4052
    %v4054 = vpop.f32.mrf.mxu0
    %v4055 = vpop.f32.mrf.mxu0
    %v4056 = vadd.f32 0.0, %v4055
    %v4057 = vpop.f32.mrf.mxu0
    %4058 = vmatprep.mubr.bf16.mxu0 %v854
    %4059 = vmatmul.mubr.bf16.gmra.mxu0 %v853
    %v4060 = vpop.f32.mrf.mxu0
    %v4061 = vadd.f32 0.0, %v4060
    %v4062 = vpop.f32.mrf.mxu0
    %v4063 = vpop.f32.mrf.mxu0
    %v4064 = vadd.f32 0.0, %v4063
    %v4065 = vpop.f32.mrf.mxu0
    %4066 = vmatprep.mubr.bf16.mxu0 %v856
    %4067 = vmatmul.mubr.bf16.gmra.mxu0 %v855
    %v4068 = vpop.f32.mrf.mxu0
    %v4069 = vadd.f32 0.0, %v4068
    %v4070 = vpop.f32.mrf.mxu0
    %v4071 = vpop.f32.mrf.mxu0
    %v4072 = vadd.f32 0.0, %v4071
    %v4073 = vpop.f32.mrf.mxu0
    %4074 = vmatprep.mubr.bf16.mxu0 %v858
    %4075 = vmatmul.mubr.bf16.gmra.mxu0 %v857
    %v4076 = vpop.f32.mrf.mxu0
    %v4077 = vadd.f32 0.0, %v4076
    %v4078 = vpop.f32.mrf.mxu0
    %v4079 = vpop.f32.mrf.mxu0
    %v4080 = vadd.f32 0.0, %v4079
    %v4081 = vpop.f32.mrf.mxu0
    %4082 = vmatprep.mubr.bf16.mxu0 %v860
    %4083 = vmatmul.mubr.bf16.gmra.mxu0 %v859
    %v4084 = vpop.f32.mrf.mxu0
    %v4085 = vadd.f32 0.0, %v4084
    %v4086 = vpop.f32.mrf.mxu0
    %v4087 = vpop.f32.mrf.mxu0
    %v4088 = vadd.f32 0.0, %v4087
    %v4089 = vpop.f32.mrf.mxu0
    %4090 = vmatprep.mubr.bf16.mxu0 %v862
    %4091 = vmatmul.mubr.bf16.gmra.mxu0 %v861
    %v4092 = vpop.f32.mrf.mxu0
    %v4093 = vadd.f32 0.0, %v4092
    %v4094 = vpop.f32.mrf.mxu0
    %v4095 = vpop.f32.mrf.mxu0
    %v4096 = vadd.f32 0.0, %v4095
    %v4097 = vpop.f32.mrf.mxu0
    %4098 = vmatprep.mubr.bf16.mxu0 %v864
    %4099 = vmatmul.mubr.bf16.gmra.mxu0 %v863
    %v4100 = vpop.f32.mrf.mxu0
    %v4101 = vadd.f32 0.0, %v4100
    %v4102 = vpop.f32.mrf.mxu0
    %v4103 = vpop.f32.mrf.mxu0
    %v4104 = vadd.f32 0.0, %v4103
    %v4105 = vpop.f32.mrf.mxu0
    %4106 = vmatprep.mubr.bf16.mxu0 %v866
    %4107 = vmatmul.mubr.bf16.gmra.mxu0 %v865
    %v4108 = vpop.f32.mrf.mxu0
    %v4109 = vadd.f32 0.0, %v4108
    %v4110 = vpop.f32.mrf.mxu0
    %v4111 = vpop.f32.mrf.mxu0
    %v4112 = vadd.f32 0.0, %v4111
    %v4113 = vpop.f32.mrf.mxu0
    %4114 = vmatprep.mubr.bf16.mxu0 %v868
    %4115 = vmatmul.mubr.bf16.gmra.mxu0 %v867
    %v4116 = vpop.f32.mrf.mxu0
    %v4117 = vadd.f32 0.0, %v4116
    %v4118 = vpop.f32.mrf.mxu0
    %v4119 = vpop.f32.mrf.mxu0
    %v4120 = vadd.f32 0.0, %v4119
    %v4121 = vpop.f32.mrf.mxu0
    %4122 = vmatprep.mubr.bf16.mxu0 %v870
    %4123 = vmatmul.mubr.bf16.gmra.mxu0 %v869
    %v4124 = vpop.f32.mrf.mxu0
    %v4125 = vadd.f32 0.0, %v4124
    %v4126 = vpop.f32.mrf.mxu0
    %v4127 = vpop.f32.mrf.mxu0
    %v4128 = vadd.f32 0.0, %v4127
    %v4129 = vpop.f32.mrf.mxu0
    %4130 = vmatprep.mubr.bf16.mxu0 %v872
    %4131 = vmatmul.mubr.bf16.gmra.mxu0 %v871
    %v4132 = vpop.f32.mrf.mxu0
    %v4133 = vadd.f32 0.0, %v4132
    %v4134 = vpop.f32.mrf.mxu0
    %v4135 = vpop.f32.mrf.mxu0
    %v4136 = vadd.f32 0.0, %v4135
    %v4137 = vpop.f32.mrf.mxu0
    %4138 = vdwg.mxu0
    %v4139 = vmul.f32 %v4013, %v1866
    %v4140 = vmul.f32 %v4016, %v1871
    %v4141 = vmul.f32 %v4021, %v1876
    %v4142 = vmul.f32 %v4024, %v1881
    %v4143 = vmul.f32 %v4029, %v1886
    %v4144 = vmul.f32 %v4032, %v1891
    %v4145 = vmul.f32 %v4037, %v1896
    %v4146 = vmul.f32 %v4040, %v1901
    %v4147 = vmul.f32 %v4045, %v1906
    %v4148 = vmul.f32 %v4048, %v1911
    %v4149 = vmul.f32 %v4053, %v1916
    %v4150 = vmul.f32 %v4056, %v1921
    %v4151 = vmul.f32 %v4061, %v1926
    %v4152 = vmul.f32 %v4064, %v1931
    %v4153 = vmul.f32 %v4069, %v1936
    %v4154 = vmul.f32 %v4072, %v1941
    %v4155 = vmul.f32 %v4077, %v1946
    %v4156 = vmul.f32 %v4080, %v1951
    %v4157 = vmul.f32 %v4085, %v1956
    %v4158 = vmul.f32 %v4088, %v1961
    %v4159 = vmul.f32 %v4093, %v1966
    %v4160 = vmul.f32 %v4096, %v1971
    %v4161 = vmul.f32 %v4101, %v1976
    %v4162 = vmul.f32 %v4104, %v1981
    %v4163 = vmul.f32 %v4109, %v1986
    %v4164 = vmul.f32 %v4112, %v1991
    %v4165 = vmul.f32 %v4117, %v1996
    %v4166 = vmul.f32 %v4120, %v2001
    %v4167 = vmul.f32 %v4125, %v2006
    %v4168 = vmul.f32 %v4128, %v2011
    %v4169 = vmul.f32 %v4133, %v2016
    %v4170 = vmul.f32 %v4136, %v2021
    %v4171 = vld [vmem:[%s20] sm:$0x1]
    %v4172 = vld [vmem:[%s21] sm:$0x1]
    %v4173 = vmul.f32 %v4139, %v269
    %v4174 = vmul.f32 %v4140, %v270
    %v4175 = vmul.f32 %v4141, %v271
    %v4176 = vmul.f32 %v4142, %v272
    %v4177 = vmul.f32 %v4143, %v273
    %v4178 = vmul.f32 %v4144, %v274
    %v4179 = vmul.f32 %v4145, %v275
    %v4180 = vmul.f32 %v4146, %v276
    %v4181 = vmul.f32 %v4147, %v277
    %v4182 = vmul.f32 %v4148, %v278
    %v4183 = vmul.f32 %v4149, %v279
    %v4184 = vmul.f32 %v4150, %v280
    %v4185 = vmul.f32 %v4151, %v281
    %v4186 = vmul.f32 %v4152, %v282
    %v4187 = vmul.f32 %v4153, %v283
    %v4188 = vmul.f32 %v4154, %v284
    %v4189 = vmul.f32 %v4155, %v285
    %v4190 = vmul.f32 %v4156, %v286
    %v4191 = vmul.f32 %v4157, %v287
    %v4192 = vmul.f32 %v4158, %v288
    %v4193 = vmul.f32 %v4159, %v289
    %v4194 = vmul.f32 %v4160, %v290
    %v4195 = vmul.f32 %v4161, %v291
    %v4196 = vmul.f32 %v4162, %v292
    %v4197 = vmul.f32 %v4163, %v293
    %v4198 = vmul.f32 %v4164, %v294
    %v4199 = vmul.f32 %v4165, %v295
    %v4200 = vmul.f32 %v4166, %v296
    %v4201 = vmul.f32 %v4167, %v297
    %v4202 = vmul.f32 %v4168, %v298
    %v4203 = vmul.f32 %v4169, %v299
    %v4204 = vmul.f32 %v4170, %v300
    %v4205 = vadd.f32 %v4173, %v4174
    %v4206 = vadd.f32 %v4205, %v4175
    %v4207 = vadd.f32 %v4206, %v4176
    %v4208 = vadd.f32 %v4207, %v4177
    %v4209 = vadd.f32 %v4208, %v4178
    %v4210 = vadd.f32 %v4209, %v4179
    %v4211 = vadd.f32 %v4210, %v4180
    %v4212 = vadd.f32 %v4211, %v4181
    %v4213 = vadd.f32 %v4212, %v4182
    %v4214 = vadd.f32 %v4213, %v4183
    %v4215 = vadd.f32 %v4214, %v4184
    %v4216 = vadd.f32 %v4215, %v4185
    %v4217 = vadd.f32 %v4216, %v4186
    %v4218 = vadd.f32 %v4217, %v4187
    %v4219 = vadd.f32 %v4218, %v4188
    %v4220 = vadd.f32 %v4219, %v4189
    %v4221 = vadd.f32 %v4220, %v4190
    %v4222 = vadd.f32 %v4221, %v4191
    %v4223 = vadd.f32 %v4222, %v4192
    %v4224 = vadd.f32 %v4223, %v4193
    %v4225 = vadd.f32 %v4224, %v4194
    %v4226 = vadd.f32 %v4225, %v4195
    %v4227 = vadd.f32 %v4226, %v4196
    %v4228 = vadd.f32 %v4227, %v4197
    %v4229 = vadd.f32 %v4228, %v4198
    %v4230 = vadd.f32 %v4229, %v4199
    %v4231 = vadd.f32 %v4230, %v4200
    %v4232 = vadd.f32 %v4231, %v4201
    %v4233 = vadd.f32 %v4232, %v4202
    %v4234 = vadd.f32 %v4233, %v4203
    %v4235 = vadd.f32 %v4234, %v4204
    %v4236 = vrot.slane %v4235, 4
    %v4237 = vadd.f32 %v4235, %v4236
    %v4238 = vrot.slane %v4237, 2
    %v4239 = vadd.f32 %v4237, %v4238
    %v4240 = vrot.slane %v4239, 1
    %v4241 = vadd.f32 %v4239, %v4240
    %v4242 = vmul.f32 %v4241, 0.00390625
    %v4243 = vsub.f32 %v4139, %v4242
    %v4244 = vsub.f32 %v4140, %v4242
    %v4245 = vsub.f32 %v4141, %v4242
    %v4246 = vsub.f32 %v4142, %v4242
    %v4247 = vsub.f32 %v4143, %v4242
    %v4248 = vsub.f32 %v4144, %v4242
    %v4249 = vsub.f32 %v4145, %v4242
    %v4250 = vsub.f32 %v4146, %v4242
    %v4251 = vsub.f32 %v4147, %v4242
    %v4252 = vsub.f32 %v4148, %v4242
    %v4253 = vsub.f32 %v4149, %v4242
    %v4254 = vsub.f32 %v4150, %v4242
    %v4255 = vsub.f32 %v4151, %v4242
    %v4256 = vsub.f32 %v4152, %v4242
    %v4257 = vsub.f32 %v4153, %v4242
    %v4258 = vsub.f32 %v4154, %v4242
    %v4259 = vsub.f32 %v4155, %v4242
    %v4260 = vsub.f32 %v4156, %v4242
    %v4261 = vsub.f32 %v4157, %v4242
    %v4262 = vsub.f32 %v4158, %v4242
    %v4263 = vsub.f32 %v4159, %v4242
    %v4264 = vsub.f32 %v4160, %v4242
    %v4265 = vsub.f32 %v4161, %v4242
    %v4266 = vsub.f32 %v4162, %v4242
    %v4267 = vsub.f32 %v4163, %v4242
    %v4268 = vsub.f32 %v4164, %v4242
    %v4269 = vsub.f32 %v4165, %v4242
    %v4270 = vsub.f32 %v4166, %v4242
    %v4271 = vsub.f32 %v4167, %v4242
    %v4272 = vsub.f32 %v4168, %v4242
    %v4273 = vsub.f32 %v4169, %v4242
    %v4274 = vsub.f32 %v4170, %v4242
    %v4275 = vmul.f32 %v269, %v4243
    %v4276 = vmul.f32 %v270, %v4244
    %v4277 = vmul.f32 %v271, %v4245
    %v4278 = vmul.f32 %v272, %v4246
    %v4279 = vmul.f32 %v273, %v4247
    %v4280 = vmul.f32 %v274, %v4248
    %v4281 = vmul.f32 %v275, %v4249
    %v4282 = vmul.f32 %v276, %v4250
    %v4283 = vmul.f32 %v277, %v4251
    %v4284 = vmul.f32 %v278, %v4252
    %v4285 = vmul.f32 %v279, %v4253
    %v4286 = vmul.f32 %v280, %v4254
    %v4287 = vmul.f32 %v281, %v4255
    %v4288 = vmul.f32 %v282, %v4256
    %v4289 = vmul.f32 %v283, %v4257
    %v4290 = vmul.f32 %v284, %v4258
    %v4291 = vmul.f32 %v285, %v4259
    %v4292 = vmul.f32 %v286, %v4260
    %v4293 = vmul.f32 %v287, %v4261
    %v4294 = vmul.f32 %v288, %v4262
    %v4295 = vmul.f32 %v289, %v4263
    %v4296 = vmul.f32 %v290, %v4264
    %v4297 = vmul.f32 %v291, %v4265
    %v4298 = vmul.f32 %v292, %v4266
    %v4299 = vmul.f32 %v293, %v4267
    %v4300 = vmul.f32 %v294, %v4268
    %v4301 = vmul.f32 %v295, %v4269
    %v4302 = vmul.f32 %v296, %v4270
    %v4303 = vmul.f32 %v297, %v4271
    %v4304 = vmul.f32 %v298, %v4272
    %v4305 = vmul.f32 %v299, %v4273
    %v4306 = vmul.f32 %v300, %v4274
    %v4307 = vmul.f32 %v4275, %v4243
    %v4308 = vmul.f32 %v4276, %v4244
    %v4309 = vmul.f32 %v4277, %v4245
    %v4310 = vmul.f32 %v4278, %v4246
    %v4311 = vmul.f32 %v4279, %v4247
    %v4312 = vmul.f32 %v4280, %v4248
    %v4313 = vmul.f32 %v4281, %v4249
    %v4314 = vmul.f32 %v4282, %v4250
    %v4315 = vmul.f32 %v4283, %v4251
    %v4316 = vmul.f32 %v4284, %v4252
    %v4317 = vmul.f32 %v4285, %v4253
    %v4318 = vmul.f32 %v4286, %v4254
    %v4319 = vmul.f32 %v4287, %v4255
    %v4320 = vmul.f32 %v4288, %v4256
    %v4321 = vmul.f32 %v4289, %v4257
    %v4322 = vmul.f32 %v4290, %v4258
    %v4323 = vmul.f32 %v4291, %v4259
    %v4324 = vmul.f32 %v4292, %v4260
    %v4325 = vmul.f32 %v4293, %v4261
    %v4326 = vmul.f32 %v4294, %v4262
    %v4327 = vmul.f32 %v4295, %v4263
    %v4328 = vmul.f32 %v4296, %v4264
    %v4329 = vmul.f32 %v4297, %v4265
    %v4330 = vmul.f32 %v4298, %v4266
    %v4331 = vmul.f32 %v4299, %v4267
    %v4332 = vmul.f32 %v4300, %v4268
    %v4333 = vmul.f32 %v4301, %v4269
    %v4334 = vmul.f32 %v4302, %v4270
    %v4335 = vmul.f32 %v4303, %v4271
    %v4336 = vmul.f32 %v4304, %v4272
    %v4337 = vmul.f32 %v4305, %v4273
    %v4338 = vmul.f32 %v4306, %v4274
    %v4339 = vadd.f32 %v4307, %v4308
    %v4340 = vadd.f32 %v4339, %v4309
    %v4341 = vadd.f32 %v4340, %v4310
    %v4342 = vadd.f32 %v4341, %v4311
    %v4343 = vadd.f32 %v4342, %v4312
    %v4344 = vadd.f32 %v4343, %v4313
    %v4345 = vadd.f32 %v4344, %v4314
    %v4346 = vadd.f32 %v4345, %v4315
    %v4347 = vadd.f32 %v4346, %v4316
    %v4348 = vadd.f32 %v4347, %v4317
    %v4349 = vadd.f32 %v4348, %v4318
    %v4350 = vadd.f32 %v4349, %v4319
    %v4351 = vadd.f32 %v4350, %v4320
    %v4352 = vadd.f32 %v4351, %v4321
    %v4353 = vadd.f32 %v4352, %v4322
    %v4354 = vadd.f32 %v4353, %v4323
    %v4355 = vadd.f32 %v4354, %v4324
    %v4356 = vadd.f32 %v4355, %v4325
    %v4357 = vadd.f32 %v4356, %v4326
    %v4358 = vadd.f32 %v4357, %v4327
    %v4359 = vadd.f32 %v4358, %v4328
    %v4360 = vadd.f32 %v4359, %v4329
    %v4361 = vadd.f32 %v4360, %v4330
    %v4362 = vadd.f32 %v4361, %v4331
    %v4363 = vadd.f32 %v4362, %v4332
    %v4364 = vadd.f32 %v4363, %v4333
    %v4365 = vadd.f32 %v4364, %v4334
    %v4366 = vadd.f32 %v4365, %v4335
    %v4367 = vadd.f32 %v4366, %v4336
    %v4368 = vadd.f32 %v4367, %v4337
    %v4369 = vadd.f32 %v4368, %v4338
    %v4370 = vrot.slane %v4369, 4
    %v4371 = vadd.f32 %v4369, %v4370
    %v4372 = vrot.slane %v4371, 2
    %v4373 = vadd.f32 %v4371, %v4372
    %v4374 = vrot.slane %v4373, 1
    %v4375 = vadd.f32 %v4373, %v4374
    %v4376 = vmul.f32 %v4375, 0.00390625
    %v4378 = vlaneseq
    %v4379 = vshrl.u32 %v4378, 7
    %v4380 = vsub.s32 0, %v4379
    %v4381 = vrot.slane %v4171, %v4380
    %v4383 = vmul.f32 %v4381, %v4243
    %v4384 = vmul.f32 %v4381, %v4244
    %v4385 = vmul.f32 %v4381, %v4245
    %v4386 = vmul.f32 %v4381, %v4246
    %v4387 = vmul.f32 %v4381, %v4247
    %v4388 = vmul.f32 %v4381, %v4248
    %v4389 = vmul.f32 %v4381, %v4249
    %v4390 = vmul.f32 %v4381, %v4250
    %v4391 = vmul.f32 %v4381, %v4251
    %v4392 = vmul.f32 %v4381, %v4252
    %v4393 = vmul.f32 %v4381, %v4253
    %v4394 = vmul.f32 %v4381, %v4254
    %v4395 = vmul.f32 %v4381, %v4255
    %v4396 = vmul.f32 %v4381, %v4256
    %v4397 = vmul.f32 %v4381, %v4257
    %v4398 = vmul.f32 %v4381, %v4258
    %v4399 = vmul.f32 %v4381, %v4259
    %v4400 = vmul.f32 %v4381, %v4260
    %v4401 = vmul.f32 %v4381, %v4261
    %v4402 = vmul.f32 %v4381, %v4262
    %v4403 = vmul.f32 %v4381, %v4263
    %v4404 = vmul.f32 %v4381, %v4264
    %v4405 = vmul.f32 %v4381, %v4265
    %v4406 = vmul.f32 %v4381, %v4266
    %v4407 = vmul.f32 %v4381, %v4267
    %v4408 = vmul.f32 %v4381, %v4268
    %v4409 = vmul.f32 %v4381, %v4269
    %v4410 = vmul.f32 %v4381, %v4270
    %v4411 = vmul.f32 %v4381, %v4271
    %v4412 = vmul.f32 %v4381, %v4272
    %v4413 = vmul.f32 %v4381, %v4273
    %v4414 = vmul.f32 %v4381, %v4274
    %v4415 = vadd.f32 %v4376, 1e-05
    %v4416 = vrsqrt.pop %v4415
    %v4417 = vmul.f32 %v4383, %v4416
    %v4418 = vmul.f32 %v4384, %v4416
    %v4419 = vmul.f32 %v4385, %v4416
    %v4420 = vmul.f32 %v4386, %v4416
    %v4421 = vmul.f32 %v4387, %v4416
    %v4422 = vmul.f32 %v4388, %v4416
    %v4423 = vmul.f32 %v4389, %v4416
    %v4424 = vmul.f32 %v4390, %v4416
    %v4425 = vmul.f32 %v4391, %v4416
    %v4426 = vmul.f32 %v4392, %v4416
    %v4427 = vmul.f32 %v4393, %v4416
    %v4428 = vmul.f32 %v4394, %v4416
    %v4429 = vmul.f32 %v4395, %v4416
    %v4430 = vmul.f32 %v4396, %v4416
    %v4431 = vmul.f32 %v4397, %v4416
    %v4432 = vmul.f32 %v4398, %v4416
    %v4433 = vmul.f32 %v4399, %v4416
    %v4434 = vmul.f32 %v4400, %v4416
    %v4435 = vmul.f32 %v4401, %v4416
    %v4436 = vmul.f32 %v4402, %v4416
    %v4437 = vmul.f32 %v4403, %v4416
    %v4438 = vmul.f32 %v4404, %v4416
    %v4439 = vmul.f32 %v4405, %v4416
    %v4440 = vmul.f32 %v4406, %v4416
    %v4441 = vmul.f32 %v4407, %v4416
    %v4442 = vmul.f32 %v4408, %v4416
    %v4443 = vmul.f32 %v4409, %v4416
    %v4444 = vmul.f32 %v4410, %v4416
    %v4445 = vmul.f32 %v4411, %v4416
    %v4446 = vmul.f32 %v4412, %v4416
    %v4447 = vmul.f32 %v4413, %v4416
    %v4448 = vmul.f32 %v4414, %v4416
    %v4450 = vlaneseq
    %v4451 = vshrl.u32 %v4450, 7
    %v4452 = vsub.s32 0, %v4451
    %v4453 = vrot.slane %v4172, %v4452
    %v4455 = vadd.f32 %v4417, %v4453
    %v4456 = vadd.f32 %v4418, %v4453
    %v4457 = vadd.f32 %v4419, %v4453
    %v4458 = vadd.f32 %v4420, %v4453
    %v4459 = vadd.f32 %v4421, %v4453
    %v4460 = vadd.f32 %v4422, %v4453
    %v4461 = vadd.f32 %v4423, %v4453
    %v4462 = vadd.f32 %v4424, %v4453
    %v4463 = vadd.f32 %v4425, %v4453
    %v4464 = vadd.f32 %v4426, %v4453
    %v4465 = vadd.f32 %v4427, %v4453
    %v4466 = vadd.f32 %v4428, %v4453
    %v4467 = vadd.f32 %v4429, %v4453
    %v4468 = vadd.f32 %v4430, %v4453
    %v4469 = vadd.f32 %v4431, %v4453
    %v4470 = vadd.f32 %v4432, %v4453
    %v4471 = vadd.f32 %v4433, %v4453
    %v4472 = vadd.f32 %v4434, %v4453
    %v4473 = vadd.f32 %v4435, %v4453
    %v4474 = vadd.f32 %v4436, %v4453
    %v4475 = vadd.f32 %v4437, %v4453
    %v4476 = vadd.f32 %v4438, %v4453
    %v4477 = vadd.f32 %v4439, %v4453
    %v4478 = vadd.f32 %v4440, %v4453
    %v4479 = vadd.f32 %v4441, %v4453
    %v4480 = vadd.f32 %v4442, %v4453
    %v4481 = vadd.f32 %v4443, %v4453
    %v4482 = vadd.f32 %v4444, %v4453
    %v4483 = vadd.f32 %v4445, %v4453
    %v4484 = vadd.f32 %v4446, %v4453
    %v4485 = vadd.f32 %v4447, %v4453
    %v4486 = vadd.f32 %v4448, %v4453
    %v4487 = vpack.c.bf16 %v4456, %v4455
    %v4488 = vpack.c.bf16 %v4458, %v4457
    %v4489 = vpack.c.bf16 %v4460, %v4459
    %v4490 = vpack.c.bf16 %v4462, %v4461
    %v4491 = vpack.c.bf16 %v4464, %v4463
    %v4492 = vpack.c.bf16 %v4466, %v4465
    %v4493 = vpack.c.bf16 %v4468, %v4467
    %v4494 = vpack.c.bf16 %v4470, %v4469
    %v4495 = vpack.c.bf16 %v4472, %v4471
    %v4496 = vpack.c.bf16 %v4474, %v4473
    %v4497 = vpack.c.bf16 %v4476, %v4475
    %v4498 = vpack.c.bf16 %v4478, %v4477
    %v4499 = vpack.c.bf16 %v4480, %v4479
    %v4500 = vpack.c.bf16 %v4482, %v4481
    %v4501 = vpack.c.bf16 %v4484, %v4483
    %v4502 = vpack.c.bf16 %v4486, %v4485
    %v4503 = vld [vmem:[#allocation11] sm:$0xff]
    %v4504 = vld [vmem:[#allocation11 + $0x8] sm:$0xff]
    %v4505 = vld [vmem:[#allocation11 + $0x10] sm:$0xff]
    %v4506 = vld [vmem:[#allocation11 + $0x18] sm:$0xff]
    %v4507 = vld [vmem:[#allocation11 + $0x20] sm:$0xff]
    %v4508 = vld [vmem:[#allocation11 + $0x28] sm:$0xff]
    %v4509 = vld [vmem:[#allocation11 + $0x30] sm:$0xff]
    %v4510 = vld [vmem:[#allocation11 + $0x38] sm:$0xff]
    %v4511 = vld [vmem:[#allocation11 + $0x40] sm:$0xff]
    %v4512 = vld [vmem:[#allocation11 + $0x48] sm:$0xff]
    %v4513 = vld [vmem:[#allocation11 + $0x50] sm:$0xff]
    %v4514 = vld [vmem:[#allocation11 + $0x58] sm:$0xff]
    %v4515 = vld [vmem:[#allocation11 + $0x60] sm:$0xff]
    %v4516 = vld [vmem:[#allocation11 + $0x68] sm:$0xff]
    %v4517 = vld [vmem:[#allocation11 + $0x70] sm:$0xff]
    %v4518 = vld [vmem:[#allocation11 + $0x78] sm:$0xff]
    %v4519 = vld [vmem:[#allocation13] sm:$0xff]
    %v4520 = vld [vmem:[#allocation13 + $0x8] sm:$0xff]
    %v4521 = vld [vmem:[#allocation13 + $0x10] sm:$0xff]
    %v4522 = vld [vmem:[#allocation13 + $0x18] sm:$0xff]
    %v4523 = vld [vmem:[#allocation13 + $0x20] sm:$0xff]
    %v4524 = vld [vmem:[#allocation13 + $0x28] sm:$0xff]
    %v4525 = vld [vmem:[#allocation13 + $0x30] sm:$0xff]
    %v4526 = vld [vmem:[#allocation13 + $0x38] sm:$0xff]
    %v4527 = vld [vmem:[#allocation13 + $0x40] sm:$0xff]
    %v4528 = vld [vmem:[#allocation13 + $0x48] sm:$0xff]
    %v4529 = vld [vmem:[#allocation13 + $0x50] sm:$0xff]
    %v4530 = vld [vmem:[#allocation13 + $0x58] sm:$0xff]
    %v4531 = vld [vmem:[#allocation13 + $0x60] sm:$0xff]
    %v4532 = vld [vmem:[#allocation13 + $0x68] sm:$0xff]
    %v4533 = vld [vmem:[#allocation13 + $0x70] sm:$0xff]
    %v4534 = vld [vmem:[#allocation13 + $0x78] sm:$0xff]
    %v4551 = vunpack.c.l.b16 %v4519
    %v4552 = vunpack.c.h.b16 %v4519
    %v4553 = vunpack.c.l.b16 %v4520
    %v4554 = vunpack.c.h.b16 %v4520
    %v4555 = vunpack.c.l.b16 %v4521
    %v4556 = vunpack.c.h.b16 %v4521
    %v4557 = vunpack.c.l.b16 %v4522
    %v4558 = vunpack.c.h.b16 %v4522
    %v4559 = vunpack.c.l.b16 %v4523
    %v4560 = vunpack.c.h.b16 %v4523
    %v4561 = vunpack.c.l.b16 %v4524
    %v4562 = vunpack.c.h.b16 %v4524
    %v4563 = vunpack.c.l.b16 %v4525
    %v4564 = vunpack.c.h.b16 %v4525
    %v4565 = vunpack.c.l.b16 %v4526
    %v4566 = vunpack.c.h.b16 %v4526
    %v4567 = vunpack.c.l.b16 %v4527
    %v4568 = vunpack.c.h.b16 %v4527
    %v4569 = vunpack.c.l.b16 %v4528
    %v4570 = vunpack.c.h.b16 %v4528
    %v4571 = vunpack.c.l.b16 %v4529
    %v4572 = vunpack.c.h.b16 %v4529
    %v4573 = vunpack.c.l.b16 %v4530
    %v4574 = vunpack.c.h.b16 %v4530
    %v4575 = vunpack.c.l.b16 %v4531
    %v4576 = vunpack.c.h.b16 %v4531
    %v4577 = vunpack.c.l.b16 %v4532
    %v4578 = vunpack.c.h.b16 %v4532
    %v4579 = vunpack.c.l.b16 %v4533
    %v4580 = vunpack.c.h.b16 %v4533
    %v4581 = vunpack.c.l.b16 %v4534
    %v4582 = vunpack.c.h.b16 %v4534
    %v4583 = vpack.c.b16 %v4553, %v4551
    %v4584 = vpack.c.b16 %v4554, %v4552
    %v4585 = vpack.c.b16 %v4557, %v4555
    %v4586 = vpack.c.b16 %v4558, %v4556
    %v4587 = vpack.c.b16 %v4561, %v4559
    %v4588 = vpack.c.b16 %v4562, %v4560
    %v4589 = vpack.c.b16 %v4565, %v4563
    %v4590 = vpack.c.b16 %v4566, %v4564
    %v4591 = vpack.c.b16 %v4569, %v4567
    %v4592 = vpack.c.b16 %v4570, %v4568
    %v4593 = vpack.c.b16 %v4573, %v4571
    %v4594 = vpack.c.b16 %v4574, %v4572
    %v4595 = vpack.c.b16 %v4577, %v4575
    %v4596 = vpack.c.b16 %v4578, %v4576
    %v4597 = vpack.c.b16 %v4581, %v4579
    %v4598 = vpack.c.b16 %v4582, %v4580
    %4615 = vmatprep.subr.bf16.mxu0 %v4598
    %4616 = vmatpush1.bf16.msra.mxu0 %v4597
    %4617 = vmatprep.subr.bf16.mxu0 %v4596
    %4618 = vmatpush1.bf16.msra.mxu0 %v4595
    %4619 = vmatprep.subr.bf16.mxu0 %v4594
    %4620 = vmatpush1.bf16.msra.mxu0 %v4593
    %4621 = vmatprep.subr.bf16.mxu0 %v4592
    %4622 = vmatpush1.bf16.msra.mxu0 %v4591
    %4623 = vmatprep.subr.bf16.mxu0 %v4590
    %4624 = vmatpush1.bf16.msra.mxu0 %v4589
    %4625 = vmatprep.subr.bf16.mxu0 %v4588
    %4626 = vmatpush1.bf16.msra.mxu0 %v4587
    %4627 = vmatprep.subr.bf16.mxu0 %v4586
    %4628 = vmatpush1.bf16.msra.mxu0 %v4585
    %4629 = vmatprep.subr.bf16.mxu0 %v4584
    %4630 = vmatpush1.bf16.msra.mxu0 %v4583
    %4631 = vmatprep.subr.bf16.mxu0 0
    %4632 = vmatpush2.bf16.msra.mxu0 0
    %4633 = vmatprep.subr.bf16.mxu0 0
    %4634 = vmatpush2.bf16.msra.mxu0 0
    %4635 = vmatprep.subr.bf16.mxu0 0
    %4636 = vmatpush2.bf16.msra.mxu0 0
    %4637 = vmatprep.subr.bf16.mxu0 0
    %4638 = vmatpush2.bf16.msra.mxu0 0
    %4639 = vmatprep.subr.bf16.mxu0 0
    %4640 = vmatpush2.bf16.msra.mxu0 0
    %4641 = vmatprep.subr.bf16.mxu0 0
    %4642 = vmatpush2.bf16.msra.mxu0 0
    %4643 = vmatprep.subr.bf16.mxu0 0
    %4644 = vmatpush2.bf16.msra.mxu0 0
    %4645 = vmatprep.subr.bf16.mxu0 0
    %4646 = vmatpush2.bf16.msra.mxu0 0
    %4647 = vmatprep.mubr.bf16.mxu0 0
    %4648 = vmatmul.mubr.bf16.gmra.mxu0 %v3485
    %v4649 = vpop.f32.mrf.mxu0
    %v4650 = vadd.f32 0.0, %v4649
    %v4651 = vpop.f32.mrf.mxu0
    %v4652 = vadd.f32 0.0, %v4651
    %v4653 = vpop.f32.mrf.mxu0
    %v4654 = vadd.f32 0.0, %v4653
    %v4655 = vpop.f32.mrf.mxu0
    %v4656 = vadd.f32 0.0, %v4655
    %4657 = vmatprep.mubr.bf16.mxu0 0
    %4658 = vmatmul.mubr.bf16.gmra.mxu0 %v3486
    %v4659 = vpop.f32.mrf.mxu0
    %v4660 = vadd.f32 0.0, %v4659
    %v4661 = vpop.f32.mrf.mxu0
    %v4662 = vadd.f32 0.0, %v4661
    %v4663 = vpop.f32.mrf.mxu0
    %v4664 = vadd.f32 0.0, %v4663
    %v4665 = vpop.f32.mrf.mxu0
    %v4666 = vadd.f32 0.0, %v4665
    %4667 = vmatprep.mubr.bf16.mxu0 0
    %4668 = vmatmul.mubr.bf16.gmra.mxu0 %v3487
    %v4669 = vpop.f32.mrf.mxu0
    %v4670 = vadd.f32 0.0, %v4669
    %v4671 = vpop.f32.mrf.mxu0
    %v4672 = vadd.f32 0.0, %v4671
    %v4673 = vpop.f32.mrf.mxu0
    %v4674 = vadd.f32 0.0, %v4673
    %v4675 = vpop.f32.mrf.mxu0
    %v4676 = vadd.f32 0.0, %v4675
    %4677 = vmatprep.mubr.bf16.mxu0 0
    %4678 = vmatmul.mubr.bf16.gmra.mxu0 %v3488
    %v4679 = vpop.f32.mrf.mxu0
    %v4680 = vadd.f32 0.0, %v4679
    %v4681 = vpop.f32.mrf.mxu0
    %v4682 = vadd.f32 0.0, %v4681
    %v4683 = vpop.f32.mrf.mxu0
    %v4684 = vadd.f32 0.0, %v4683
    %v4685 = vpop.f32.mrf.mxu0
    %v4686 = vadd.f32 0.0, %v4685
    %4687 = vmatprep.mubr.bf16.mxu0 0
    %4688 = vmatmul.mubr.bf16.gmra.mxu0 %v3489
    %v4689 = vpop.f32.mrf.mxu0
    %v4690 = vadd.f32 0.0, %v4689
    %v4691 = vpop.f32.mrf.mxu0
    %v4692 = vadd.f32 0.0, %v4691
    %v4693 = vpop.f32.mrf.mxu0
    %v4694 = vadd.f32 0.0, %v4693
    %v4695 = vpop.f32.mrf.mxu0
    %v4696 = vadd.f32 0.0, %v4695
    %4697 = vmatprep.mubr.bf16.mxu0 0
    %4698 = vmatmul.mubr.bf16.gmra.mxu0 %v3490
    %v4699 = vpop.f32.mrf.mxu0
    %v4700 = vadd.f32 0.0, %v4699
    %v4701 = vpop.f32.mrf.mxu0
    %v4702 = vadd.f32 0.0, %v4701
    %v4703 = vpop.f32.mrf.mxu0
    %v4704 = vadd.f32 0.0, %v4703
    %v4705 = vpop.f32.mrf.mxu0
    %v4706 = vadd.f32 0.0, %v4705
    %4707 = vmatprep.mubr.bf16.mxu0 0
    %4708 = vmatmul.mubr.bf16.gmra.mxu0 %v3491
    %v4709 = vpop.f32.mrf.mxu0
    %v4710 = vadd.f32 0.0, %v4709
    %v4711 = vpop.f32.mrf.mxu0
    %v4712 = vadd.f32 0.0, %v4711
    %v4713 = vpop.f32.mrf.mxu0
    %v4714 = vadd.f32 0.0, %v4713
    %v4715 = vpop.f32.mrf.mxu0
    %v4716 = vadd.f32 0.0, %v4715
    %4717 = vmatprep.mubr.bf16.mxu0 0
    %4718 = vmatmul.mubr.bf16.gmra.mxu0 %v3492
    %v4719 = vpop.f32.mrf.mxu0
    %v4720 = vadd.f32 0.0, %v4719
    %v4721 = vpop.f32.mrf.mxu0
    %v4722 = vadd.f32 0.0, %v4721
    %v4723 = vpop.f32.mrf.mxu0
    %v4724 = vadd.f32 0.0, %v4723
    %v4725 = vpop.f32.mrf.mxu0
    %v4726 = vadd.f32 0.0, %v4725
    %4727 = vmatprep.mubr.bf16.mxu0 0
    %4728 = vmatmul.mubr.bf16.gmra.mxu0 %v3493
    %v4729 = vpop.f32.mrf.mxu0
    %v4730 = vadd.f32 0.0, %v4729
    %v4731 = vpop.f32.mrf.mxu0
    %v4732 = vadd.f32 0.0, %v4731
    %v4733 = vpop.f32.mrf.mxu0
    %v4734 = vadd.f32 0.0, %v4733
    %v4735 = vpop.f32.mrf.mxu0
    %v4736 = vadd.f32 0.0, %v4735
    %4737 = vmatprep.mubr.bf16.mxu0 0
    %4738 = vmatmul.mubr.bf16.gmra.mxu0 %v3494
    %v4739 = vpop.f32.mrf.mxu0
    %v4740 = vadd.f32 0.0, %v4739
    %v4741 = vpop.f32.mrf.mxu0
    %v4742 = vadd.f32 0.0, %v4741
    %v4743 = vpop.f32.mrf.mxu0
    %v4744 = vadd.f32 0.0, %v4743
    %v4745 = vpop.f32.mrf.mxu0
    %v4746 = vadd.f32 0.0, %v4745
    %4747 = vmatprep.mubr.bf16.mxu0 0
    %4748 = vmatmul.mubr.bf16.gmra.mxu0 %v3495
    %v4749 = vpop.f32.mrf.mxu0
    %v4750 = vadd.f32 0.0, %v4749
    %v4751 = vpop.f32.mrf.mxu0
    %v4752 = vadd.f32 0.0, %v4751
    %v4753 = vpop.f32.mrf.mxu0
    %v4754 = vadd.f32 0.0, %v4753
    %v4755 = vpop.f32.mrf.mxu0
    %v4756 = vadd.f32 0.0, %v4755
    %4757 = vmatprep.mubr.bf16.mxu0 0
    %4758 = vmatmul.mubr.bf16.gmra.mxu0 %v3496
    %v4759 = vpop.f32.mrf.mxu0
    %v4760 = vadd.f32 0.0, %v4759
    %v4761 = vpop.f32.mrf.mxu0
    %v4762 = vadd.f32 0.0, %v4761
    %v4763 = vpop.f32.mrf.mxu0
    %v4764 = vadd.f32 0.0, %v4763
    %v4765 = vpop.f32.mrf.mxu0
    %v4766 = vadd.f32 0.0, %v4765
    %4767 = vmatprep.mubr.bf16.mxu0 0
    %4768 = vmatmul.mubr.bf16.gmra.mxu0 %v3497
    %v4769 = vpop.f32.mrf.mxu0
    %v4770 = vadd.f32 0.0, %v4769
    %v4771 = vpop.f32.mrf.mxu0
    %v4772 = vadd.f32 0.0, %v4771
    %v4773 = vpop.f32.mrf.mxu0
    %v4774 = vadd.f32 0.0, %v4773
    %v4775 = vpop.f32.mrf.mxu0
    %v4776 = vadd.f32 0.0, %v4775
    %4777 = vmatprep.mubr.bf16.mxu0 0
    %4778 = vmatmul.mubr.bf16.gmra.mxu0 %v3498
    %v4779 = vpop.f32.mrf.mxu0
    %v4780 = vadd.f32 0.0, %v4779
    %v4781 = vpop.f32.mrf.mxu0
    %v4782 = vadd.f32 0.0, %v4781
    %v4783 = vpop.f32.mrf.mxu0
    %v4784 = vadd.f32 0.0, %v4783
    %v4785 = vpop.f32.mrf.mxu0
    %v4786 = vadd.f32 0.0, %v4785
    %4787 = vmatprep.mubr.bf16.mxu0 0
    %4788 = vmatmul.mubr.bf16.gmra.mxu0 %v3499
    %v4789 = vpop.f32.mrf.mxu0
    %v4790 = vadd.f32 0.0, %v4789
    %v4791 = vpop.f32.mrf.mxu0
    %v4792 = vadd.f32 0.0, %v4791
    %v4793 = vpop.f32.mrf.mxu0
    %v4794 = vadd.f32 0.0, %v4793
    %v4795 = vpop.f32.mrf.mxu0
    %v4796 = vadd.f32 0.0, %v4795
    %4797 = vmatprep.mubr.bf16.mxu0 0
    %4798 = vmatmul.mubr.bf16.gmra.mxu0 %v3500
    %v4799 = vpop.f32.mrf.mxu0
    %v4800 = vadd.f32 0.0, %v4799
    %v4801 = vpop.f32.mrf.mxu0
    %v4802 = vadd.f32 0.0, %v4801
    %v4803 = vpop.f32.mrf.mxu0
    %v4804 = vadd.f32 0.0, %v4803
    %v4805 = vpop.f32.mrf.mxu0
    %v4806 = vadd.f32 0.0, %v4805
    %4807 = vdwg.mxu0
    %v4824 = vunpack.c.l.b16 %v4503
    %v4825 = vunpack.c.h.b16 %v4503
    %v4826 = vunpack.c.l.b16 %v4504
    %v4827 = vunpack.c.h.b16 %v4504
    %v4828 = vunpack.c.l.b16 %v4505
    %v4829 = vunpack.c.h.b16 %v4505
    %v4830 = vunpack.c.l.b16 %v4506
    %v4831 = vunpack.c.h.b16 %v4506
    %v4832 = vunpack.c.l.b16 %v4507
    %v4833 = vunpack.c.h.b16 %v4507
    %v4834 = vunpack.c.l.b16 %v4508
    %v4835 = vunpack.c.h.b16 %v4508
    %v4836 = vunpack.c.l.b16 %v4509
    %v4837 = vunpack.c.h.b16 %v4509
    %v4838 = vunpack.c.l.b16 %v4510
    %v4839 = vunpack.c.h.b16 %v4510
    %v4840 = vunpack.c.l.b16 %v4511
    %v4841 = vunpack.c.h.b16 %v4511
    %v4842 = vunpack.c.l.b16 %v4512
    %v4843 = vunpack.c.h.b16 %v4512
    %v4844 = vunpack.c.l.b16 %v4513
    %v4845 = vunpack.c.h.b16 %v4513
    %v4846 = vunpack.c.l.b16 %v4514
    %v4847 = vunpack.c.h.b16 %v4514
    %v4848 = vunpack.c.l.b16 %v4515
    %v4849 = vunpack.c.h.b16 %v4515
    %v4850 = vunpack.c.l.b16 %v4516
    %v4851 = vunpack.c.h.b16 %v4516
    %v4852 = vunpack.c.l.b16 %v4517
    %v4853 = vunpack.c.h.b16 %v4517
    %v4854 = vunpack.c.l.b16 %v4518
    %v4855 = vunpack.c.h.b16 %v4518
    %v4856 = vpack.c.b16 %v4826, %v4824
    %v4857 = vpack.c.b16 %v4827, %v4825
    %v4858 = vpack.c.b16 %v4830, %v4828
    %v4859 = vpack.c.b16 %v4831, %v4829
    %v4860 = vpack.c.b16 %v4834, %v4832
    %v4861 = vpack.c.b16 %v4835, %v4833
    %v4862 = vpack.c.b16 %v4838, %v4836
    %v4863 = vpack.c.b16 %v4839, %v4837
    %v4864 = vpack.c.b16 %v4842, %v4840
    %v4865 = vpack.c.b16 %v4843, %v4841
    %v4866 = vpack.c.b16 %v4846, %v4844
    %v4867 = vpack.c.b16 %v4847, %v4845
    %v4868 = vpack.c.b16 %v4850, %v4848
    %v4869 = vpack.c.b16 %v4851, %v4849
    %v4870 = vpack.c.b16 %v4854, %v4852
    %v4871 = vpack.c.b16 %v4855, %v4853
    %4888 = vmatprep.subr.bf16.mxu0 %v4871
    %4889 = vmatpush1.bf16.msra.mxu0 %v4870
    %4890 = vmatprep.subr.bf16.mxu0 %v4869
    %4891 = vmatpush1.bf16.msra.mxu0 %v4868
    %4892 = vmatprep.subr.bf16.mxu0 %v4867
    %4893 = vmatpush1.bf16.msra.mxu0 %v4866
    %4894 = vmatprep.subr.bf16.mxu0 %v4865
    %4895 = vmatpush1.bf16.msra.mxu0 %v4864
    %4896 = vmatprep.subr.bf16.mxu0 %v4863
    %4897 = vmatpush1.bf16.msra.mxu0 %v4862
    %4898 = vmatprep.subr.bf16.mxu0 %v4861
    %4899 = vmatpush1.bf16.msra.mxu0 %v4860
    %4900 = vmatprep.subr.bf16.mxu0 %v4859
    %4901 = vmatpush1.bf16.msra.mxu0 %v4858
    %4902 = vmatprep.subr.bf16.mxu0 %v4857
    %4903 = vmatpush1.bf16.msra.mxu0 %v4856
    %4904 = vmatprep.subr.bf16.mxu0 0
    %4905 = vmatpush2.bf16.msra.mxu0 0
    %4906 = vmatprep.subr.bf16.mxu0 0
    %4907 = vmatpush2.bf16.msra.mxu0 0
    %4908 = vmatprep.subr.bf16.mxu0 0
    %4909 = vmatpush2.bf16.msra.mxu0 0
    %4910 = vmatprep.subr.bf16.mxu0 0
    %4911 = vmatpush2.bf16.msra.mxu0 0
    %4912 = vmatprep.subr.bf16.mxu0 0
    %4913 = vmatpush2.bf16.msra.mxu0 0
    %4914 = vmatprep.subr.bf16.mxu0 0
    %4915 = vmatpush2.bf16.msra.mxu0 0
    %4916 = vmatprep.subr.bf16.mxu0 0
    %4917 = vmatpush2.bf16.msra.mxu0 0
    %4918 = vmatprep.subr.bf16.mxu0 0
    %4919 = vmatpush2.bf16.msra.mxu0 0
    %4920 = vmatprep.mubr.bf16.mxu0 0
    %4921 = vmatmul.mubr.bf16.gmra.mxu0 %v4487
    %v4922 = vpop.f32.mrf.mxu0
    %v4923 = vadd.f32 %v4650, %v4922
    %v4924 = vpop.f32.mrf.mxu0
    %v4925 = vadd.f32 %v4652, %v4924
    %v4926 = vpop.f32.mrf.mxu0
    %v4927 = vadd.f32 %v4654, %v4926
    %v4928 = vpop.f32.mrf.mxu0
    %v4929 = vadd.f32 %v4656, %v4928
    %4930 = vmatprep.mubr.bf16.mxu0 0
    %4931 = vmatmul.mubr.bf16.gmra.mxu0 %v4488
    %v4932 = vpop.f32.mrf.mxu0
    %v4933 = vadd.f32 %v4660, %v4932
    %v4934 = vpop.f32.mrf.mxu0
    %v4935 = vadd.f32 %v4662, %v4934
    %v4936 = vpop.f32.mrf.mxu0
    %v4937 = vadd.f32 %v4664, %v4936
    %v4938 = vpop.f32.mrf.mxu0
    %v4939 = vadd.f32 %v4666, %v4938
    %4940 = vmatprep.mubr.bf16.mxu0 0
    %4941 = vmatmul.mubr.bf16.gmra.mxu0 %v4489
    %v4942 = vpop.f32.mrf.mxu0
    %v4943 = vadd.f32 %v4670, %v4942
    %v4944 = vpop.f32.mrf.mxu0
    %v4945 = vadd.f32 %v4672, %v4944
    %v4946 = vpop.f32.mrf.mxu0
    %v4947 = vadd.f32 %v4674, %v4946
    %v4948 = vpop.f32.mrf.mxu0
    %v4949 = vadd.f32 %v4676, %v4948
    %4950 = vmatprep.mubr.bf16.mxu0 0
    %4951 = vmatmul.mubr.bf16.gmra.mxu0 %v4490
    %v4952 = vpop.f32.mrf.mxu0
    %v4953 = vadd.f32 %v4680, %v4952
    %v4954 = vpop.f32.mrf.mxu0
    %v4955 = vadd.f32 %v4682, %v4954
    %v4956 = vpop.f32.mrf.mxu0
    %v4957 = vadd.f32 %v4684, %v4956
    %v4958 = vpop.f32.mrf.mxu0
    %v4959 = vadd.f32 %v4686, %v4958
    %4960 = vmatprep.mubr.bf16.mxu0 0
    %4961 = vmatmul.mubr.bf16.gmra.mxu0 %v4491
    %v4962 = vpop.f32.mrf.mxu0
    %v4963 = vadd.f32 %v4690, %v4962
    %v4964 = vpop.f32.mrf.mxu0
    %v4965 = vadd.f32 %v4692, %v4964
    %v4966 = vpop.f32.mrf.mxu0
    %v4967 = vadd.f32 %v4694, %v4966
    %v4968 = vpop.f32.mrf.mxu0
    %v4969 = vadd.f32 %v4696, %v4968
    %4970 = vmatprep.mubr.bf16.mxu0 0
    %4971 = vmatmul.mubr.bf16.gmra.mxu0 %v4492
    %v4972 = vpop.f32.mrf.mxu0
    %v4973 = vadd.f32 %v4700, %v4972
    %v4974 = vpop.f32.mrf.mxu0
    %v4975 = vadd.f32 %v4702, %v4974
    %v4976 = vpop.f32.mrf.mxu0
    %v4977 = vadd.f32 %v4704, %v4976
    %v4978 = vpop.f32.mrf.mxu0
    %v4979 = vadd.f32 %v4706, %v4978
    %4980 = vmatprep.mubr.bf16.mxu0 0
    %4981 = vmatmul.mubr.bf16.gmra.mxu0 %v4493
    %v4982 = vpop.f32.mrf.mxu0
    %v4983 = vadd.f32 %v4710, %v4982
    %v4984 = vpop.f32.mrf.mxu0
    %v4985 = vadd.f32 %v4712, %v4984
    %v4986 = vpop.f32.mrf.mxu0
    %v4987 = vadd.f32 %v4714, %v4986
    %v4988 = vpop.f32.mrf.mxu0
    %v4989 = vadd.f32 %v4716, %v4988
    %4990 = vmatprep.mubr.bf16.mxu0 0
    %4991 = vmatmul.mubr.bf16.gmra.mxu0 %v4494
    %v4992 = vpop.f32.mrf.mxu0
    %v4993 = vadd.f32 %v4720, %v4992
    %v4994 = vpop.f32.mrf.mxu0
    %v4995 = vadd.f32 %v4722, %v4994
    %v4996 = vpop.f32.mrf.mxu0
    %v4997 = vadd.f32 %v4724, %v4996
    %v4998 = vpop.f32.mrf.mxu0
    %v4999 = vadd.f32 %v4726, %v4998
    %5000 = vmatprep.mubr.bf16.mxu0 0
    %5001 = vmatmul.mubr.bf16.gmra.mxu0 %v4495
    %v5002 = vpop.f32.mrf.mxu0
    %v5003 = vadd.f32 %v4730, %v5002
    %v5004 = vpop.f32.mrf.mxu0
    %v5005 = vadd.f32 %v4732, %v5004
    %v5006 = vpop.f32.mrf.mxu0
    %v5007 = vadd.f32 %v4734, %v5006
    %v5008 = vpop.f32.mrf.mxu0
    %v5009 = vadd.f32 %v4736, %v5008
    %5010 = vmatprep.mubr.bf16.mxu0 0
    %5011 = vmatmul.mubr.bf16.gmra.mxu0 %v4496
    %v5012 = vpop.f32.mrf.mxu0
    %v5013 = vadd.f32 %v4740, %v5012
    %v5014 = vpop.f32.mrf.mxu0
    %v5015 = vadd.f32 %v4742, %v5014
    %v5016 = vpop.f32.mrf.mxu0
    %v5017 = vadd.f32 %v4744, %v5016
    %v5018 = vpop.f32.mrf.mxu0
    %v5019 = vadd.f32 %v4746, %v5018
    %5020 = vmatprep.mubr.bf16.mxu0 0
    %5021 = vmatmul.mubr.bf16.gmra.mxu0 %v4497
    %v5022 = vpop.f32.mrf.mxu0
    %v5023 = vadd.f32 %v4750, %v5022
    %v5024 = vpop.f32.mrf.mxu0
    %v5025 = vadd.f32 %v4752, %v5024
    %v5026 = vpop.f32.mrf.mxu0
    %v5027 = vadd.f32 %v4754, %v5026
    %v5028 = vpop.f32.mrf.mxu0
    %v5029 = vadd.f32 %v4756, %v5028
    %5030 = vmatprep.mubr.bf16.mxu0 0
    %5031 = vmatmul.mubr.bf16.gmra.mxu0 %v4498
    %v5032 = vpop.f32.mrf.mxu0
    %v5033 = vadd.f32 %v4760, %v5032
    %v5034 = vpop.f32.mrf.mxu0
    %v5035 = vadd.f32 %v4762, %v5034
    %v5036 = vpop.f32.mrf.mxu0
    %v5037 = vadd.f32 %v4764, %v5036
    %v5038 = vpop.f32.mrf.mxu0
    %v5039 = vadd.f32 %v4766, %v5038
    %5040 = vmatprep.mubr.bf16.mxu0 0
    %5041 = vmatmul.mubr.bf16.gmra.mxu0 %v4499
    %v5042 = vpop.f32.mrf.mxu0
    %v5043 = vadd.f32 %v4770, %v5042
    %v5044 = vpop.f32.mrf.mxu0
    %v5045 = vadd.f32 %v4772, %v5044
    %v5046 = vpop.f32.mrf.mxu0
    %v5047 = vadd.f32 %v4774, %v5046
    %v5048 = vpop.f32.mrf.mxu0
    %v5049 = vadd.f32 %v4776, %v5048
    %5050 = vmatprep.mubr.bf16.mxu0 0
    %5051 = vmatmul.mubr.bf16.gmra.mxu0 %v4500
    %v5052 = vpop.f32.mrf.mxu0
    %v5053 = vadd.f32 %v4780, %v5052
    %v5054 = vpop.f32.mrf.mxu0
    %v5055 = vadd.f32 %v4782, %v5054
    %v5056 = vpop.f32.mrf.mxu0
    %v5057 = vadd.f32 %v4784, %v5056
    %v5058 = vpop.f32.mrf.mxu0
    %v5059 = vadd.f32 %v4786, %v5058
    %5060 = vmatprep.mubr.bf16.mxu0 0
    %5061 = vmatmul.mubr.bf16.gmra.mxu0 %v4501
    %v5062 = vpop.f32.mrf.mxu0
    %v5063 = vadd.f32 %v4790, %v5062
    %v5064 = vpop.f32.mrf.mxu0
    %v5065 = vadd.f32 %v4792, %v5064
    %v5066 = vpop.f32.mrf.mxu0
    %v5067 = vadd.f32 %v4794, %v5066
    %v5068 = vpop.f32.mrf.mxu0
    %v5069 = vadd.f32 %v4796, %v5068
    %5070 = vmatprep.mubr.bf16.mxu0 0
    %5071 = vmatmul.mubr.bf16.gmra.mxu0 %v4502
    %v5072 = vpop.f32.mrf.mxu0
    %v5073 = vadd.f32 %v4800, %v5072
    %v5074 = vpop.f32.mrf.mxu0
    %v5075 = vadd.f32 %v4802, %v5074
    %v5076 = vpop.f32.mrf.mxu0
    %v5077 = vadd.f32 %v4804, %v5076
    %v5078 = vpop.f32.mrf.mxu0
    %v5079 = vadd.f32 %v4806, %v5078
    %5080 = vdwg.mxu0
    %v5081 = vld [vmem:[%s19] sm:$0x3]
    %v5083 = vlaneseq
    %v5084 = vshrl.u32 %v5083, 7
    %v5085 = vsub.s32 0, %v5084
    %v5086 = vrot.slane %v5081, %v5085
    %v5087 = vlaneseq
    %v5088 = vshrl.u32 %v5087, 7
    %v5089 = vsub.s32 1, %v5088
    %v5090 = vrot.slane %v5081, %v5089
    %v5093 = vadd.f32 %v4923, %v5086
    %v5094 = vadd.f32 %v4925, %v5090
    %v5095 = vadd.f32 %v4927, %v5086
    %v5096 = vadd.f32 %v4929, %v5090
    %v5097 = vadd.f32 %v4933, %v5086
    %v5098 = vadd.f32 %v4935, %v5090
    %v5099 = vadd.f32 %v4937, %v5086
    %v5100 = vadd.f32 %v4939, %v5090
    %v5101 = vadd.f32 %v4943, %v5086
    %v5102 = vadd.f32 %v4945, %v5090
    %v5103 = vadd.f32 %v4947, %v5086
    %v5104 = vadd.f32 %v4949, %v5090
    %v5105 = vadd.f32 %v4953, %v5086
    %v5106 = vadd.f32 %v4955, %v5090
    %v5107 = vadd.f32 %v4957, %v5086
    %v5108 = vadd.f32 %v4959, %v5090
    %v5109 = vadd.f32 %v4963, %v5086
    %v5110 = vadd.f32 %v4965, %v5090
    %v5111 = vadd.f32 %v4967, %v5086
    %v5112 = vadd.f32 %v4969, %v5090
    %v5113 = vadd.f32 %v4973, %v5086
    %v5114 = vadd.f32 %v4975, %v5090
    %v5115 = vadd.f32 %v4977, %v5086
    %v5116 = vadd.f32 %v4979, %v5090
    %v5117 = vadd.f32 %v4983, %v5086
    %v5118 = vadd.f32 %v4985, %v5090
    %v5119 = vadd.f32 %v4987, %v5086
    %v5120 = vadd.f32 %v4989, %v5090
    %v5121 = vadd.f32 %v4993, %v5086
    %v5122 = vadd.f32 %v4995, %v5090
    %v5123 = vadd.f32 %v4997, %v5086
    %v5124 = vadd.f32 %v4999, %v5090
    %v5125 = vadd.f32 %v5003, %v5086
    %v5126 = vadd.f32 %v5005, %v5090
    %v5127 = vadd.f32 %v5007, %v5086
    %v5128 = vadd.f32 %v5009, %v5090
    %v5129 = vadd.f32 %v5013, %v5086
    %v5130 = vadd.f32 %v5015, %v5090
    %v5131 = vadd.f32 %v5017, %v5086
    %v5132 = vadd.f32 %v5019, %v5090
    %v5133 = vadd.f32 %v5023, %v5086
    %v5134 = vadd.f32 %v5025, %v5090
    %v5135 = vadd.f32 %v5027, %v5086
    %v5136 = vadd.f32 %v5029, %v5090
    %v5137 = vadd.f32 %v5033, %v5086
    %v5138 = vadd.f32 %v5035, %v5090
    %v5139 = vadd.f32 %v5037, %v5086
    %v5140 = vadd.f32 %v5039, %v5090
    %v5141 = vadd.f32 %v5043, %v5086
    %v5142 = vadd.f32 %v5045, %v5090
    %v5143 = vadd.f32 %v5047, %v5086
    %v5144 = vadd.f32 %v5049, %v5090
    %v5145 = vadd.f32 %v5053, %v5086
    %v5146 = vadd.f32 %v5055, %v5090
    %v5147 = vadd.f32 %v5057, %v5086
    %v5148 = vadd.f32 %v5059, %v5090
    %v5149 = vadd.f32 %v5063, %v5086
    %v5150 = vadd.f32 %v5065, %v5090
    %v5151 = vadd.f32 %v5067, %v5086
    %v5152 = vadd.f32 %v5069, %v5090
    %v5153 = vadd.f32 %v5073, %v5086
    %v5154 = vadd.f32 %v5075, %v5090
    %v5155 = vadd.f32 %v5077, %v5086
    %v5156 = vadd.f32 %v5079, %v5090
    %v5157 = vmul.f32 %v1273, %v5093
    %v5158 = vmul.f32 %v1278, %v5095
    %v5159 = vmul.f32 %v1283, %v5097
    %v5160 = vmul.f32 %v1288, %v5099
    %v5161 = vmul.f32 %v1293, %v5101
    %v5162 = vmul.f32 %v1298, %v5103
    %v5163 = vmul.f32 %v1303, %v5105
    %v5164 = vmul.f32 %v1308, %v5107
    %v5165 = vmul.f32 %v1313, %v5109
    %v5166 = vmul.f32 %v1318, %v5111
    %v5167 = vmul.f32 %v1323, %v5113
    %v5168 = vmul.f32 %v1328, %v5115
    %v5169 = vmul.f32 %v1333, %v5117
    %v5170 = vmul.f32 %v1338, %v5119
    %v5171 = vmul.f32 %v1343, %v5121
    %v5172 = vmul.f32 %v1348, %v5123
    %v5173 = vmul.f32 %v1353, %v5125
    %v5174 = vmul.f32 %v1358, %v5127
    %v5175 = vmul.f32 %v1363, %v5129
    %v5176 = vmul.f32 %v1368, %v5131
    %v5177 = vmul.f32 %v1373, %v5133
    %v5178 = vmul.f32 %v1378, %v5135
    %v5179 = vmul.f32 %v1383, %v5137
    %v5180 = vmul.f32 %v1388, %v5139
    %v5181 = vmul.f32 %v1393, %v5141
    %v5182 = vmul.f32 %v1398, %v5143
    %v5183 = vmul.f32 %v1403, %v5145
    %v5184 = vmul.f32 %v1408, %v5147
    %v5185 = vmul.f32 %v1413, %v5149
    %v5186 = vmul.f32 %v1418, %v5151
    %v5187 = vmul.f32 %v1423, %v5153
    %v5188 = vmul.f32 %v1428, %v5155
    %v5189 = vmul.f32 %v1465, %v5094
    %v5190 = vmul.f32 %v1470, %v5096
    %v5191 = vmul.f32 %v1475, %v5098
    %v5192 = vmul.f32 %v1480, %v5100
    %v5193 = vmul.f32 %v1485, %v5102
    %v5194 = vmul.f32 %v1490, %v5104
    %v5195 = vmul.f32 %v1495, %v5106
    %v5196 = vmul.f32 %v1500, %v5108
    %v5197 = vmul.f32 %v1505, %v5110
    %v5198 = vmul.f32 %v1510, %v5112
    %v5199 = vmul.f32 %v1515, %v5114
    %v5200 = vmul.f32 %v1520, %v5116
    %v5201 = vmul.f32 %v1525, %v5118
    %v5202 = vmul.f32 %v1530, %v5120
    %v5203 = vmul.f32 %v1535, %v5122
    %v5204 = vmul.f32 %v1540, %v5124
    %v5205 = vmul.f32 %v1545, %v5126
    %v5206 = vmul.f32 %v1550, %v5128
    %v5207 = vmul.f32 %v1555, %v5130
    %v5208 = vmul.f32 %v1560, %v5132
    %v5209 = vmul.f32 %v1565, %v5134
    %v5210 = vmul.f32 %v1570, %v5136
    %v5211 = vmul.f32 %v1575, %v5138
    %v5212 = vmul.f32 %v1580, %v5140
    %v5213 = vmul.f32 %v1585, %v5142
    %v5214 = vmul.f32 %v1590, %v5144
    %v5215 = vmul.f32 %v1595, %v5146
    %v5216 = vmul.f32 %v1600, %v5148
    %v5217 = vmul.f32 %v1605, %v5150
    %v5218 = vmul.f32 %v1610, %v5152
    %v5219 = vmul.f32 %v1615, %v5154
    %v5220 = vmul.f32 %v1620, %v5156
    %v5221 = vadd.f32 %v5157, %v5189
    %v5222 = vadd.f32 %v5158, %v5190
    %v5223 = vadd.f32 %v5159, %v5191
    %v5224 = vadd.f32 %v5160, %v5192
    %v5225 = vadd.f32 %v5161, %v5193
    %v5226 = vadd.f32 %v5162, %v5194
    %v5227 = vadd.f32 %v5163, %v5195
    %v5228 = vadd.f32 %v5164, %v5196
    %v5229 = vadd.f32 %v5165, %v5197
    %v5230 = vadd.f32 %v5166, %v5198
    %v5231 = vadd.f32 %v5167, %v5199
    %v5232 = vadd.f32 %v5168, %v5200
    %v5233 = vadd.f32 %v5169, %v5201
    %v5234 = vadd.f32 %v5170, %v5202
    %v5235 = vadd.f32 %v5171, %v5203
    %v5236 = vadd.f32 %v5172, %v5204
    %v5237 = vadd.f32 %v5173, %v5205
    %v5238 = vadd.f32 %v5174, %v5206
    %v5239 = vadd.f32 %v5175, %v5207
    %v5240 = vadd.f32 %v5176, %v5208
    %v5241 = vadd.f32 %v5177, %v5209
    %v5242 = vadd.f32 %v5178, %v5210
    %v5243 = vadd.f32 %v5179, %v5211
    %v5244 = vadd.f32 %v5180, %v5212
    %v5245 = vadd.f32 %v5181, %v5213
    %v5246 = vadd.f32 %v5182, %v5214
    %v5247 = vadd.f32 %v5183, %v5215
    %v5248 = vadd.f32 %v5184, %v5216
    %v5249 = vadd.f32 %v5185, %v5217
    %v5250 = vadd.f32 %v5186, %v5218
    %v5251 = vadd.f32 %v5187, %v5219
    %v5252 = vadd.f32 %v5188, %v5220
    %v5253 = vld [vmem:[%s22] sm:$0x1]
    %v5254 = vld [vmem:[%s23] sm:$0x1]
    %v5255 = vmul.f32 %v5221, %v269
    %v5256 = vmul.f32 %v5222, %v270
    %v5257 = vmul.f32 %v5223, %v271
    %v5258 = vmul.f32 %v5224, %v272
    %v5259 = vmul.f32 %v5225, %v273
    %v5260 = vmul.f32 %v5226, %v274
    %v5261 = vmul.f32 %v5227, %v275
    %v5262 = vmul.f32 %v5228, %v276
    %v5263 = vmul.f32 %v5229, %v277
    %v5264 = vmul.f32 %v5230, %v278
    %v5265 = vmul.f32 %v5231, %v279
    %v5266 = vmul.f32 %v5232, %v280
    %v5267 = vmul.f32 %v5233, %v281
    %v5268 = vmul.f32 %v5234, %v282
    %v5269 = vmul.f32 %v5235, %v283
    %v5270 = vmul.f32 %v5236, %v284
    %v5271 = vmul.f32 %v5237, %v285
    %v5272 = vmul.f32 %v5238, %v286
    %v5273 = vmul.f32 %v5239, %v287
    %v5274 = vmul.f32 %v5240, %v288
    %v5275 = vmul.f32 %v5241, %v289
    %v5276 = vmul.f32 %v5242, %v290
    %v5277 = vmul.f32 %v5243, %v291
    %v5278 = vmul.f32 %v5244, %v292
    %v5279 = vmul.f32 %v5245, %v293
    %v5280 = vmul.f32 %v5246, %v294
    %v5281 = vmul.f32 %v5247, %v295
    %v5282 = vmul.f32 %v5248, %v296
    %v5283 = vmul.f32 %v5249, %v297
    %v5284 = vmul.f32 %v5250, %v298
    %v5285 = vmul.f32 %v5251, %v299
    %v5286 = vmul.f32 %v5252, %v300
    %v5287 = vadd.f32 %v5255, %v5256
    %v5288 = vadd.f32 %v5287, %v5257
    %v5289 = vadd.f32 %v5288, %v5258
    %v5290 = vadd.f32 %v5289, %v5259
    %v5291 = vadd.f32 %v5290, %v5260
    %v5292 = vadd.f32 %v5291, %v5261
    %v5293 = vadd.f32 %v5292, %v5262
    %v5294 = vadd.f32 %v5293, %v5263
    %v5295 = vadd.f32 %v5294, %v5264
    %v5296 = vadd.f32 %v5295, %v5265
    %v5297 = vadd.f32 %v5296, %v5266
    %v5298 = vadd.f32 %v5297, %v5267
    %v5299 = vadd.f32 %v5298, %v5268
    %v5300 = vadd.f32 %v5299, %v5269
    %v5301 = vadd.f32 %v5300, %v5270
    %v5302 = vadd.f32 %v5301, %v5271
    %v5303 = vadd.f32 %v5302, %v5272
    %v5304 = vadd.f32 %v5303, %v5273
    %v5305 = vadd.f32 %v5304, %v5274
    %v5306 = vadd.f32 %v5305, %v5275
    %v5307 = vadd.f32 %v5306, %v5276
    %v5308 = vadd.f32 %v5307, %v5277
    %v5309 = vadd.f32 %v5308, %v5278
    %v5310 = vadd.f32 %v5309, %v5279
    %v5311 = vadd.f32 %v5310, %v5280
    %v5312 = vadd.f32 %v5311, %v5281
    %v5313 = vadd.f32 %v5312, %v5282
    %v5314 = vadd.f32 %v5313, %v5283
    %v5315 = vadd.f32 %v5314, %v5284
    %v5316 = vadd.f32 %v5315, %v5285
    %v5317 = vadd.f32 %v5316, %v5286
    %v5318 = vrot.slane %v5317, 4
    %v5319 = vadd.f32 %v5317, %v5318
    %v5320 = vrot.slane %v5319, 2
    %v5321 = vadd.f32 %v5319, %v5320
    %v5322 = vrot.slane %v5321, 1
    %v5323 = vadd.f32 %v5321, %v5322
    %v5324 = vmul.f32 %v5323, 0.00390625
    %v5325 = vsub.f32 %v5221, %v5324
    %v5326 = vsub.f32 %v5222, %v5324
    %v5327 = vsub.f32 %v5223, %v5324
    %v5328 = vsub.f32 %v5224, %v5324
    %v5329 = vsub.f32 %v5225, %v5324
    %v5330 = vsub.f32 %v5226, %v5324
    %v5331 = vsub.f32 %v5227, %v5324
    %v5332 = vsub.f32 %v5228, %v5324
    %v5333 = vsub.f32 %v5229, %v5324
    %v5334 = vsub.f32 %v5230, %v5324
    %v5335 = vsub.f32 %v5231, %v5324
    %v5336 = vsub.f32 %v5232, %v5324
    %v5337 = vsub.f32 %v5233, %v5324
    %v5338 = vsub.f32 %v5234, %v5324
    %v5339 = vsub.f32 %v5235, %v5324
    %v5340 = vsub.f32 %v5236, %v5324
    %v5341 = vsub.f32 %v5237, %v5324
    %v5342 = vsub.f32 %v5238, %v5324
    %v5343 = vsub.f32 %v5239, %v5324
    %v5344 = vsub.f32 %v5240, %v5324
    %v5345 = vsub.f32 %v5241, %v5324
    %v5346 = vsub.f32 %v5242, %v5324
    %v5347 = vsub.f32 %v5243, %v5324
    %v5348 = vsub.f32 %v5244, %v5324
    %v5349 = vsub.f32 %v5245, %v5324
    %v5350 = vsub.f32 %v5246, %v5324
    %v5351 = vsub.f32 %v5247, %v5324
    %v5352 = vsub.f32 %v5248, %v5324
    %v5353 = vsub.f32 %v5249, %v5324
    %v5354 = vsub.f32 %v5250, %v5324
    %v5355 = vsub.f32 %v5251, %v5324
    %v5356 = vsub.f32 %v5252, %v5324
    %v5357 = vmul.f32 %v269, %v5325
    %v5358 = vmul.f32 %v270, %v5326
    %v5359 = vmul.f32 %v271, %v5327
    %v5360 = vmul.f32 %v272, %v5328
    %v5361 = vmul.f32 %v273, %v5329
    %v5362 = vmul.f32 %v274, %v5330
    %v5363 = vmul.f32 %v275, %v5331
    %v5364 = vmul.f32 %v276, %v5332
    %v5365 = vmul.f32 %v277, %v5333
    %v5366 = vmul.f32 %v278, %v5334
    %v5367 = vmul.f32 %v279, %v5335
    %v5368 = vmul.f32 %v280, %v5336
    %v5369 = vmul.f32 %v281, %v5337
    %v5370 = vmul.f32 %v282, %v5338
    %v5371 = vmul.f32 %v283, %v5339
    %v5372 = vmul.f32 %v284, %v5340
    %v5373 = vmul.f32 %v285, %v5341
    %v5374 = vmul.f32 %v286, %v5342
    %v5375 = vmul.f32 %v287, %v5343
    %v5376 = vmul.f32 %v288, %v5344
    %v5377 = vmul.f32 %v289, %v5345
    %v5378 = vmul.f32 %v290, %v5346
    %v5379 = vmul.f32 %v291, %v5347
    %v5380 = vmul.f32 %v292, %v5348
    %v5381 = vmul.f32 %v293, %v5349
    %v5382 = vmul.f32 %v294, %v5350
    %v5383 = vmul.f32 %v295, %v5351
    %v5384 = vmul.f32 %v296, %v5352
    %v5385 = vmul.f32 %v297, %v5353
    %v5386 = vmul.f32 %v298, %v5354
    %v5387 = vmul.f32 %v299, %v5355
    %v5388 = vmul.f32 %v300, %v5356
    %v5389 = vmul.f32 %v5357, %v5325
    %v5390 = vmul.f32 %v5358, %v5326
    %v5391 = vmul.f32 %v5359, %v5327
    %v5392 = vmul.f32 %v5360, %v5328
    %v5393 = vmul.f32 %v5361, %v5329
    %v5394 = vmul.f32 %v5362, %v5330
    %v5395 = vmul.f32 %v5363, %v5331
    %v5396 = vmul.f32 %v5364, %v5332
    %v5397 = vmul.f32 %v5365, %v5333
    %v5398 = vmul.f32 %v5366, %v5334
    %v5399 = vmul.f32 %v5367, %v5335
    %v5400 = vmul.f32 %v5368, %v5336
    %v5401 = vmul.f32 %v5369, %v5337
    %v5402 = vmul.f32 %v5370, %v5338
    %v5403 = vmul.f32 %v5371, %v5339
    %v5404 = vmul.f32 %v5372, %v5340
    %v5405 = vmul.f32 %v5373, %v5341
    %v5406 = vmul.f32 %v5374, %v5342
    %v5407 = vmul.f32 %v5375, %v5343
    %v5408 = vmul.f32 %v5376, %v5344
    %v5409 = vmul.f32 %v5377, %v5345
    %v5410 = vmul.f32 %v5378, %v5346
    %v5411 = vmul.f32 %v5379, %v5347
    %v5412 = vmul.f32 %v5380, %v5348
    %v5413 = vmul.f32 %v5381, %v5349
    %v5414 = vmul.f32 %v5382, %v5350
    %v5415 = vmul.f32 %v5383, %v5351
    %v5416 = vmul.f32 %v5384, %v5352
    %v5417 = vmul.f32 %v5385, %v5353
    %v5418 = vmul.f32 %v5386, %v5354
    %v5419 = vmul.f32 %v5387, %v5355
    %v5420 = vmul.f32 %v5388, %v5356
    %v5421 = vadd.f32 %v5389, %v5390
    %v5422 = vadd.f32 %v5421, %v5391
    %v5423 = vadd.f32 %v5422, %v5392
    %v5424 = vadd.f32 %v5423, %v5393
    %v5425 = vadd.f32 %v5424, %v5394
    %v5426 = vadd.f32 %v5425, %v5395
    %v5427 = vadd.f32 %v5426, %v5396
    %v5428 = vadd.f32 %v5427, %v5397
    %v5429 = vadd.f32 %v5428, %v5398
    %v5430 = vadd.f32 %v5429, %v5399
    %v5431 = vadd.f32 %v5430, %v5400
    %v5432 = vadd.f32 %v5431, %v5401
    %v5433 = vadd.f32 %v5432, %v5402
    %v5434 = vadd.f32 %v5433, %v5403
    %v5435 = vadd.f32 %v5434, %v5404
    %v5436 = vadd.f32 %v5435, %v5405
    %v5437 = vadd.f32 %v5436, %v5406
    %v5438 = vadd.f32 %v5437, %v5407
    %v5439 = vadd.f32 %v5438, %v5408
    %v5440 = vadd.f32 %v5439, %v5409
    %v5441 = vadd.f32 %v5440, %v5410
    %v5442 = vadd.f32 %v5441, %v5411
    %v5443 = vadd.f32 %v5442, %v5412
    %v5444 = vadd.f32 %v5443, %v5413
    %v5445 = vadd.f32 %v5444, %v5414
    %v5446 = vadd.f32 %v5445, %v5415
    %v5447 = vadd.f32 %v5446, %v5416
    %v5448 = vadd.f32 %v5447, %v5417
    %v5449 = vadd.f32 %v5448, %v5418
    %v5450 = vadd.f32 %v5449, %v5419
    %v5451 = vadd.f32 %v5450, %v5420
    %v5452 = vrot.slane %v5451, 4
    %v5453 = vadd.f32 %v5451, %v5452
    %v5454 = vrot.slane %v5453, 2
    %v5455 = vadd.f32 %v5453, %v5454
    %v5456 = vrot.slane %v5455, 1
    %v5457 = vadd.f32 %v5455, %v5456
    %v5458 = vmul.f32 %v5457, 0.00390625
    %v5460 = vlaneseq
    %v5461 = vshrl.u32 %v5460, 7
    %v5462 = vsub.s32 0, %v5461
    %v5463 = vrot.slane %v5253, %v5462
    %v5465 = vmul.f32 %v5463, %v5325
    %v5466 = vmul.f32 %v5463, %v5326
    %v5467 = vmul.f32 %v5463, %v5327
    %v5468 = vmul.f32 %v5463, %v5328
    %v5469 = vmul.f32 %v5463, %v5329
    %v5470 = vmul.f32 %v5463, %v5330
    %v5471 = vmul.f32 %v5463, %v5331
    %v5472 = vmul.f32 %v5463, %v5332
    %v5473 = vmul.f32 %v5463, %v5333
    %v5474 = vmul.f32 %v5463, %v5334
    %v5475 = vmul.f32 %v5463, %v5335
    %v5476 = vmul.f32 %v5463, %v5336
    %v5477 = vmul.f32 %v5463, %v5337
    %v5478 = vmul.f32 %v5463, %v5338
    %v5479 = vmul.f32 %v5463, %v5339
    %v5480 = vmul.f32 %v5463, %v5340
    %v5481 = vmul.f32 %v5463, %v5341
    %v5482 = vmul.f32 %v5463, %v5342
    %v5483 = vmul.f32 %v5463, %v5343
    %v5484 = vmul.f32 %v5463, %v5344
    %v5485 = vmul.f32 %v5463, %v5345
    %v5486 = vmul.f32 %v5463, %v5346
    %v5487 = vmul.f32 %v5463, %v5347
    %v5488 = vmul.f32 %v5463, %v5348
    %v5489 = vmul.f32 %v5463, %v5349
    %v5490 = vmul.f32 %v5463, %v5350
    %v5491 = vmul.f32 %v5463, %v5351
    %v5492 = vmul.f32 %v5463, %v5352
    %v5493 = vmul.f32 %v5463, %v5353
    %v5494 = vmul.f32 %v5463, %v5354
    %v5495 = vmul.f32 %v5463, %v5355
    %v5496 = vmul.f32 %v5463, %v5356
    %v5497 = vadd.f32 %v5458, 1e-05
    %v5498 = vrsqrt.pop %v5497
    %v5499 = vmul.f32 %v5465, %v5498
    %v5500 = vmul.f32 %v5466, %v5498
    %v5501 = vmul.f32 %v5467, %v5498
    %v5502 = vmul.f32 %v5468, %v5498
    %v5503 = vmul.f32 %v5469, %v5498
    %v5504 = vmul.f32 %v5470, %v5498
    %v5505 = vmul.f32 %v5471, %v5498
    %v5506 = vmul.f32 %v5472, %v5498
    %v5507 = vmul.f32 %v5473, %v5498
    %v5508 = vmul.f32 %v5474, %v5498
    %v5509 = vmul.f32 %v5475, %v5498
    %v5510 = vmul.f32 %v5476, %v5498
    %v5511 = vmul.f32 %v5477, %v5498
    %v5512 = vmul.f32 %v5478, %v5498
    %v5513 = vmul.f32 %v5479, %v5498
    %v5514 = vmul.f32 %v5480, %v5498
    %v5515 = vmul.f32 %v5481, %v5498
    %v5516 = vmul.f32 %v5482, %v5498
    %v5517 = vmul.f32 %v5483, %v5498
    %v5518 = vmul.f32 %v5484, %v5498
    %v5519 = vmul.f32 %v5485, %v5498
    %v5520 = vmul.f32 %v5486, %v5498
    %v5521 = vmul.f32 %v5487, %v5498
    %v5522 = vmul.f32 %v5488, %v5498
    %v5523 = vmul.f32 %v5489, %v5498
    %v5524 = vmul.f32 %v5490, %v5498
    %v5525 = vmul.f32 %v5491, %v5498
    %v5526 = vmul.f32 %v5492, %v5498
    %v5527 = vmul.f32 %v5493, %v5498
    %v5528 = vmul.f32 %v5494, %v5498
    %v5529 = vmul.f32 %v5495, %v5498
    %v5530 = vmul.f32 %v5496, %v5498
    %v5532 = vlaneseq
    %v5533 = vshrl.u32 %v5532, 7
    %v5534 = vsub.s32 0, %v5533
    %v5535 = vrot.slane %v5254, %v5534
    %v5537 = vadd.f32 %v5499, %v5535
    %v5538 = vadd.f32 %v5500, %v5535
    %v5539 = vadd.f32 %v5501, %v5535
    %v5540 = vadd.f32 %v5502, %v5535
    %v5541 = vadd.f32 %v5503, %v5535
    %v5542 = vadd.f32 %v5504, %v5535
    %v5543 = vadd.f32 %v5505, %v5535
    %v5544 = vadd.f32 %v5506, %v5535
    %v5545 = vadd.f32 %v5507, %v5535
    %v5546 = vadd.f32 %v5508, %v5535
    %v5547 = vadd.f32 %v5509, %v5535
    %v5548 = vadd.f32 %v5510, %v5535
    %v5549 = vadd.f32 %v5511, %v5535
    %v5550 = vadd.f32 %v5512, %v5535
    %v5551 = vadd.f32 %v5513, %v5535
    %v5552 = vadd.f32 %v5514, %v5535
    %v5553 = vadd.f32 %v5515, %v5535
    %v5554 = vadd.f32 %v5516, %v5535
    %v5555 = vadd.f32 %v5517, %v5535
    %v5556 = vadd.f32 %v5518, %v5535
    %v5557 = vadd.f32 %v5519, %v5535
    %v5558 = vadd.f32 %v5520, %v5535
    %v5559 = vadd.f32 %v5521, %v5535
    %v5560 = vadd.f32 %v5522, %v5535
    %v5561 = vadd.f32 %v5523, %v5535
    %v5562 = vadd.f32 %v5524, %v5535
    %v5563 = vadd.f32 %v5525, %v5535
    %v5564 = vadd.f32 %v5526, %v5535
    %v5565 = vadd.f32 %v5527, %v5535
    %v5566 = vadd.f32 %v5528, %v5535
    %v5567 = vadd.f32 %v5529, %v5535
    %v5568 = vadd.f32 %v5530, %v5535
    %5569 = vst [vmem:[#allocation14] sm:$0xff] %v5537
    %5570 = vst [vmem:[#allocation14 + $0x8] sm:$0xff] %v5538
    %5571 = vst [vmem:[#allocation14 + $0x10] sm:$0xff] %v5539
    %5572 = vst [vmem:[#allocation14 + $0x18] sm:$0xff] %v5540
    %5573 = vst [vmem:[#allocation14 + $0x20] sm:$0xff] %v5541
    %5574 = vst [vmem:[#allocation14 + $0x28] sm:$0xff] %v5542
    %5575 = vst [vmem:[#allocation14 + $0x30] sm:$0xff] %v5543
    %5576 = vst [vmem:[#allocation14 + $0x38] sm:$0xff] %v5544
    %5577 = vst [vmem:[#allocation14 + $0x40] sm:$0xff] %v5545
    %5578 = vst [vmem:[#allocation14 + $0x48] sm:$0xff] %v5546
    %5579 = vst [vmem:[#allocation14 + $0x50] sm:$0xff] %v5547
    %5580 = vst [vmem:[#allocation14 + $0x58] sm:$0xff] %v5548
    %5581 = vst [vmem:[#allocation14 + $0x60] sm:$0xff] %v5549
    %5582 = vst [vmem:[#allocation14 + $0x68] sm:$0xff] %v5550
    %5583 = vst [vmem:[#allocation14 + $0x70] sm:$0xff] %v5551
    %5584 = vst [vmem:[#allocation14 + $0x78] sm:$0xff] %v5552
    %5585 = vst [vmem:[#allocation14 + $0x80] sm:$0xff] %v5553
    %5586 = vst [vmem:[#allocation14 + $0x88] sm:$0xff] %v5554
    %5587 = vst [vmem:[#allocation14 + $0x90] sm:$0xff] %v5555
    %5588 = vst [vmem:[#allocation14 + $0x98] sm:$0xff] %v5556
    %5589 = vst [vmem:[#allocation14 + $0xa0] sm:$0xff] %v5557
    %5590 = vst [vmem:[#allocation14 + $0xa8] sm:$0xff] %v5558
    %5591 = vst [vmem:[#allocation14 + $0xb0] sm:$0xff] %v5559
    %5592 = vst [vmem:[#allocation14 + $0xb8] sm:$0xff] %v5560
    %5593 = vst [vmem:[#allocation14 + $0xc0] sm:$0xff] %v5561
    %5594 = vst [vmem:[#allocation14 + $0xc8] sm:$0xff] %v5562
    %5595 = vst [vmem:[#allocation14 + $0xd0] sm:$0xff] %v5563
    %5596 = vst [vmem:[#allocation14 + $0xd8] sm:$0xff] %v5564
    %5597 = vst [vmem:[#allocation14 + $0xe0] sm:$0xff] %v5565
    %5598 = vst [vmem:[#allocation14 + $0xe8] sm:$0xff] %v5566
    %5599 = vst [vmem:[#allocation14 + $0xf0] sm:$0xff] %v5567
    %5600 = vst [vmem:[#allocation14 + $0xf8] sm:$0xff] %v5568
    // Predicated region
    $region126: #{tpu_custom_call.1} parent=1 // pred_check
      _
    $region127: #{tpu_custom_call.1} parent=1 // pred_check_branch
      %5602 = sbr.rel (0) target = $region129
    $region128: #{tpu_custom_call.1} parent=1 // pred_region
      %s5604 = ssub.s32 4096, 4096
      %5605 = vsyncadd [#allocation4], %s5604
      %s5606 = sshll.u32 [#allocation14], 4
      %s5607 = int_to_ptr.vmem [resolvable:$true] %s5606
      %5612 = dma.vmem_to_hbm [thread:$0]  %s5607, 4096, %s24, [#allocation4], 128, 128, 8
    $region129: #{tpu_custom_call.1} parent=1 // pred_fallthru
      _
    // Predicated region
    $region130: #{tpu_custom_call.1} parent=1 // pred_check
      _
    $region131: #{tpu_custom_call.1} parent=1 // pred_check_branch
      %5614 = sbr.rel (0) target = $region133
    $region132: #{tpu_custom_call.1} parent=1 // pred_region
      %5615 = dma.done [#allocation4], 4096
    $region133: #{tpu_custom_call.1} parent=1 // pred_fallthru
      _
    %5616 = vsyncpa [#allocation3], 1
    %5617 = vsyncpa [#allocation6], 1
    %5618 = vsyncpa [#allocation9], 1
    %5619 = vsyncpa [#allocation12], 1
    %5620 = vsyncpa [#allocation4], 1

</llo_original>
